<compile_context>
chip_gen: v6e
topology: v6e:2x2x1
jax: 0.10.0
libtpu: 0.0.40
codegen_flags: <defaults>
</compile_context>

<pallas_src>
import functools

import jax
import jax.numpy as jnp
import numpy as np
from jax import lax
from jax.experimental import pallas as pl
from jax.experimental.pallas import tpu as pltpu


def _cdiv(a, b):
    return (a + b - 1) // b


def _round_up(a, b):
    return _cdiv(a, b) * b


def _default_pillar_chunk():
    """K=256 fills the v6e/v7x MXU; 128 for v5e and older (128x128 MXUs)."""
    try:
        kind = jax.devices()[0].device_kind.lower()
    except Exception:
        return 256
    for tag in ("v2", "v3", "v4", "v5"):
        if tag in kind:
            return 128
    return 256


def _scatter_kernel(slot_batch_ref, slot_tile_ref, slot_chunk_ref,   # SMEM (prefetch)
                    slot_valid_ref, slot_first_ref,                  # SMEM (prefetch)
                    ids_ref, rowb_ref, feats_ref,                    # VMEM inputs
                    out_ref,                                         # VMEM output (1, C, TILE)
                    iota_ref,                                        # VMEM scratch (CHUNK, TILE)
                    *, pillar_chunk, tile_cells, num_tiles):
    """One grid step = one slot = (canvas bucket, aligned pillar chunk)."""
    s = pl.program_id(0)

    # Hoisted cell iota: filled once, reused by every chunk.
    @pl.when(s == 0)
    def _fill_iota():
        iota_ref[...] = lax.broadcasted_iota(jnp.int32,
                                             (pillar_chunk, tile_cells), 1)

    # First slot of a bucket: the output block just became resident -> zero it.
    @pl.when(slot_first_ref[s] > 0)
    def _init():
        out_ref[...] = jnp.zeros_like(out_ref)

    # Real slots scatter one aligned pillar chunk into the resident out block.
    @pl.when(slot_valid_ref[s] > 0)
    def _accumulate():
        b = slot_batch_ref[s] * num_tiles + slot_tile_ref[s]
        # Rows of neighbouring buckets / padding share the aligned chunk: mask
        # them via the per-row bucket id (local id -1 never matches the iota).
        ids = jnp.where(rowb_ref[...] == b, ids_ref[...], -1)           # (CHUNK, 1)
        onehot = (ids == iota_ref[...]).astype(jnp.float32)             # (CHUNK, TILE)
        feats_t = feats_ref[...].astype(jnp.float32).T                  # (C, CHUNK)
        upd = jnp.dot(feats_t, onehot,
                      precision=lax.Precision.HIGHEST,                  # exact f32 scatter
                      preferred_element_type=jnp.float32)               # (C, TILE)
        out_ref[0] = (out_ref[0].astype(jnp.float32) + upd).astype(out_ref.dtype)


def point_pillars_scatter(voxel_features, coords, *, batch_size, ny, nx,
                          tile_cells=2048, pillar_chunk=None):
    """JAX/Pallas equivalent of PointPillarsScatter.forward.

    voxel_features: (P, C) float
    coords:         (P, 4) int, columns = [batch, z, y, x]; rows with an
                    out-of-range batch id / cell are ignored (padding pillars).
    returns:        (batch_size, C, ny, nx)  (NCHW, like PyTorch)
    """
    P, C = voxel_features.shape
    cells = ny * nx

    if pillar_chunk is None:
        pillar_chunk = _default_pillar_chunk()
    pillar_chunk = _round_up(max(int(pillar_chunk), 1), 128)
    tile_cells = _round_up(max(int(tile_cells), 1), 128)
    tile_cells = min(tile_cells, _round_up(cells, 128))

    num_tiles = _cdiv(cells, tile_cells)
    padded_cells = num_tiles * tile_cells
    num_buckets = batch_size * num_tiles

    # ---------------- wrapper bucketing: one argsort + gathers ----------------
    batch_ids = coords[:, 0].astype(jnp.int32)
    flat = coords[:, 2].astype(jnp.int32) * nx + coords[:, 3].astype(jnp.int32)
    valid = ((batch_ids >= 0) & (batch_ids < batch_size) &
             (flat >= 0) & (flat < cells))

    tile_id = flat // tile_cells
    local_id = jnp.where(valid, flat - tile_id * tile_cells, -1).astype(jnp.int32)
    bucket = jnp.where(valid, batch_ids * num_tiles + tile_id,
                       num_buckets).astype(jnp.int32)                 # sentinel bucket

    order = jnp.argsort(bucket)

    # Aligned, chunk-padded sorted tables (NO row scatter, NO transpose).
    P_pad = _round_up(max(P, 1), pillar_chunk)
    order_pad = jnp.concatenate(
        [order, jnp.zeros((P_pad - P,), order.dtype)])
    row_in_range = jnp.arange(P_pad, dtype=jnp.int32) < P
    feats_s = voxel_features[order_pad]                               # (P_pad, C)
    ids_s = jnp.where(row_in_range, local_id[order_pad], -1)
    ids_s = ids_s.reshape(P_pad, 1).astype(jnp.int32)
    rowb_s = jnp.where(row_in_range, bucket[order_pad], num_buckets)
    rowb_s = rowb_s.reshape(P_pad, 1).astype(jnp.int32)

    # Per-bucket row ranges inside the sorted table.
    counts = jnp.bincount(bucket, length=num_buckets + 1)[:num_buckets]
    counts = counts.astype(jnp.int32)
    sorted_start = (jnp.cumsum(counts) - counts).astype(jnp.int32)
    sorted_end = sorted_start + counts
    first_chunk = sorted_start // pillar_chunk
    last_chunk = jnp.maximum(sorted_end - 1, 0) // pillar_chunk
    nslots = jnp.where(counts > 0, last_chunk - first_chunk + 1, 1).astype(jnp.int32)
    slot_offset = (jnp.cumsum(nslots) - nslots).astype(jnp.int32)

    # Static 1-D slot schedule (upper bound on real slots; tail = no-op pads).
    num_slots = _cdiv(P, pillar_chunk) + num_buckets
    seg = jnp.zeros((num_slots,), jnp.int32).at[slot_offset[1:]].add(1)
    bucket_of_slot = jnp.cumsum(seg).astype(jnp.int32)
    k_of_slot = jnp.arange(num_slots, dtype=jnp.int32) - slot_offset[bucket_of_slot]
    real = (counts[bucket_of_slot] > 0) & (k_of_slot < nslots[bucket_of_slot])
    chunk_raw = first_chunk[bucket_of_slot] + k_of_slot
    # Forward-fill the chunk index for zero-fill / pad slots so the pipeline
    # sees an unchanged input block index and skips the DMA entirely.
    slot_chunk = lax.cummax(jnp.where(real, chunk_raw, 0), axis=0).astype(jnp.int32)
    slot_valid = real.astype(jnp.int32)
    slot_batch = (bucket_of_slot // num_tiles).astype(jnp.int32)
    slot_tile = (bucket_of_slot % num_tiles).astype(jnp.int32)
    slot_first = jnp.concatenate(
        [jnp.ones((1,), jnp.int32),
         (bucket_of_slot[1:] != bucket_of_slot[:-1]).astype(jnp.int32)])

    # ---------------------------- Pallas call ---------------------------------
    def _pillar_map(s, sb, st, sc, sv, sf):
        return (sc[s], 0)

    def _out_map(s, sb, st, sc, sv, sf):
        return (sb[s], 0, st[s])

    itemsize = jnp.dtype(voxel_features.dtype).itemsize
    need = (2 * C * tile_cells * itemsize            # double-buffered out block
            + 2 * pillar_chunk * C * itemsize        # feats chunk blocks
            + 2 * 2 * pillar_chunk * 4               # ids + row-bucket blocks
            + pillar_chunk * tile_cells * 4)         # hoisted iota scratch
    vmem_limit = int(min(max(need + (4 << 20), 8 << 20), 32 << 20))   # v7x-safe cap

    canvas = pl.pallas_call(
        functools.partial(_scatter_kernel, pillar_chunk=pillar_chunk,
                          tile_cells=tile_cells, num_tiles=num_tiles),
        out_shape=jax.ShapeDtypeStruct((batch_size, C, padded_cells),
                                       voxel_features.dtype),
        grid_spec=pltpu.PrefetchScalarGridSpec(
            num_scalar_prefetch=5,                   # slot routing tables -> SMEM
            grid=(num_slots,),                       # flattened 1-D slot grid
            in_specs=[
                pl.BlockSpec((pillar_chunk, 1), _pillar_map),   # local cell ids
                pl.BlockSpec((pillar_chunk, 1), _pillar_map),   # per-row bucket ids
                pl.BlockSpec((pillar_chunk, C), _pillar_map),   # pillar features
            ],
            out_specs=pl.BlockSpec((1, C, tile_cells), _out_map),
            scratch_shapes=[pltpu.VMEM((pillar_chunk, tile_cells), jnp.int32)],
        ),
        compiler_params=pltpu.CompilerParams(
            dimension_semantics=("arbitrary",),      # slots must run in order
            vmem_limit_bytes=vmem_limit),
    )(slot_batch, slot_tile, slot_chunk, slot_valid, slot_first,
      ids_s, rowb_s, feats_s)

    if padded_cells != cells:
        canvas = canvas[:, :, :cells]
    return canvas.reshape(batch_size, C, ny, nx)


def _reference_numpy(voxel_features, coords, batch_size, ny, nx):
    """Direct transcription of the PyTorch forward, in numpy."""
    vf = np.asarray(voxel_features)
    co = np.asarray(coords)
    C = vf.shape[1]
    out = np.zeros((batch_size, C, ny * nx), dtype=vf.dtype)
    for b in range(batch_size):
        mask = co[:, 0] == b
        idx = (co[mask, 2] * nx + co[mask, 3]).astype(np.int64)
        out[b][:, idx] = vf[mask].T
    return out.reshape(batch_size, C, ny, nx)


if __name__ == "__main__":
    # Small deterministic example consistent with the module:
    # output_shape = [batch, 1, ny, nx], ny = nx = 32, C = 64 channels.
    batch_size = 2
    ny, nx = 32, 32
    num_input_features = 64
    pillars_per_batch = 300          # unique cells per batch (PointPillars invariant)
    n_invalid = 8                    # padding pillars (batch id -1) must be ignored

    key = jax.random.PRNGKey(0)
    k_feat, *k_perm = jax.random.split(key, batch_size + 1)

    coords_list = []
    for b in range(batch_size):
        cells_b = jax.random.permutation(k_perm[b], ny * nx)[:pillars_per_batch]
        ys = (cells_b // nx).astype(jnp.int32)
        xs = (cells_b % nx).astype(jnp.int32)
        bcol = jnp.full((pillars_per_batch,), b, jnp.int32)
        zcol = jnp.zeros((pillars_per_batch,), jnp.int32)
        coords_list.append(jnp.stack([bcol, zcol, ys, xs], axis=1))
    coords_list.append(
        jnp.stack([jnp.full((n_invalid,), -1, jnp.int32),
                   jnp.zeros((n_invalid,), jnp.int32),
                   jnp.zeros((n_invalid,), jnp.int32),
                   jnp.zeros((n_invalid,), jnp.int32)], axis=1))
    coords = jnp.concatenate(coords_list, axis=0)                 # (P, 4) int32

    P = coords.shape[0]
    voxel_features = jax.random.normal(
        k_feat, (P, num_input_features), dtype=jnp.float32)       # (P, C)

    # Explicit small tiling so the multi-tile / multi-chunk paths are exercised
    # identically on every TPU generation.
    scatter = jax.jit(functools.partial(
        point_pillars_scatter, batch_size=batch_size, ny=ny, nx=nx,
        tile_cells=512, pillar_chunk=128))

    out = jax.block_until_ready(scatter(voxel_features, coords))

    ref = _reference_numpy(voxel_features, coords, batch_size, ny, nx)
    assert out.shape == (batch_size, num_input_features, ny, nx)
    np.testing.assert_allclose(np.asarray(out), ref, rtol=1e-5, atol=1e-5)

    print("KERNEL_OK")
</pallas_src>

<mosaic_0001>
module attributes {stable_mosaic.version = 11 : i64} {
  func.func private @main(%arg0: i32) attributes {dimension_semantics = [#tpu.dimension_semantics<core_parallel>], iteration_bounds = array<i64: 2>, tpu.core_type = #tpu.core_type<sc_scalar_subcore>, window_params = []} {
    return
  }
}

module attributes {stable_mosaic.version = 11 : i64} {
  func.func private @main(%arg0: i32) attributes {dimension_semantics = [#tpu.dimension_semantics<core_parallel>], iteration_bounds = array<i64: 2>, tpu.core_type = #tpu.core_type<sc_scalar_subcore>, window_params = []} {
    return
  }
}

module attributes {stable_mosaic.version = 11 : i64} {
  func.func @_scatter_kernel(%arg0: i32, %arg1: memref<9xi32, #tpu.memory_space<smem>>, %arg2: memref<9xi32, #tpu.memory_space<smem>>, %arg3: memref<9xi32, #tpu.memory_space<smem>>, %arg4: memref<9xi32, #tpu.memory_space<smem>>, %arg5: memref<9xi32, #tpu.memory_space<smem>>, %arg6: memref<128x1xi32, #tpu.memory_space<vmem>>, %arg7: memref<128x1xi32, #tpu.memory_space<vmem>>, %arg8: memref<128x64xf32, #tpu.memory_space<vmem>>, %arg9: memref<1x64x512xf32, #tpu.memory_space<vmem>>, %arg10: memref<128x512xi32, #tpu.memory_space<vmem>>) attributes {dimension_semantics = [#tpu.dimension_semantics<arbitrary>], iteration_bounds = array<i64: 9>, scalar_prefetch = 5 : i64, scratch_operands = 1 : i64, tpu.core_type = #tpu.core_type<tc>, window_params = [{transform_indices = @transform_0, window_bounds = array<i64: 128, 1>}, {transform_indices = @transform_1, window_bounds = array<i64: 128, 1>}, {transform_indices = @transform_2, window_bounds = array<i64: 128, 64>}, {transform_indices = @transform_3, window_bounds = array<i64: 1, 64, 512>}]} {
    %c0_i32 = arith.constant 0 : i32
    %0 = arith.cmpi eq, %arg0, %c0_i32 : i32
    %1 = arith.extui %0 : i1 to i32
    %c0_i32_0 = arith.constant 0 : i32
    %2 = arith.cmpi ne, %1, %c0_i32_0 : i32
    scf.if %2 {
      %13 = tpu.iota {dimensions = array<i32: 1>} : vector<128x512xi32>
      %c0 = arith.constant 0 : index
      %c0_5 = arith.constant 0 : index
      %14 = vector.load %arg10[%c0, %c0_5] : memref<128x512xi32, #tpu.memory_space<vmem>>, vector<128x512xi32>
      tpu.vector_store %arg10[%c0, %c0_5], %13 {strides = array<i32>} : memref<128x512xi32, #tpu.memory_space<vmem>>, vector<128x512xi32>,
    } else {
    }
    %3 = arith.index_cast %arg0 : i32 to index
    %4 = memref.load %arg5[%3] : memref<9xi32, #tpu.memory_space<smem>>
    %c0_i32_1 = arith.constant 0 : i32
    %5 = arith.cmpi sgt, %4, %c0_i32_1 : i32
    %6 = arith.extui %5 : i1 to i32
    %c0_i32_2 = arith.constant 0 : i32
    %7 = arith.cmpi ne, %6, %c0_i32_2 : i32
    scf.if %7 {
      %cst = arith.constant 0.000000e+00 : f32
      %13 = vector.broadcast %cst : f32 to vector<1x64x512xf32>
      %c0 = arith.constant 0 : index
      %c0_5 = arith.constant 0 : index
      %c0_6 = arith.constant 0 : index
      %14 = vector.load %arg9[%c0, %c0_5, %c0_6] : memref<1x64x512xf32, #tpu.memory_space<vmem>>, vector<1x64x512xf32>
      tpu.vector_store %arg9[%c0, %c0_5, %c0_6], %13 {strides = array<i32>} : memref<1x64x512xf32, #tpu.memory_space<vmem>>, vector<1x64x512xf32>,
    } else {
    }
    %8 = arith.index_cast %arg0 : i32 to index
    %9 = memref.load %arg4[%8] : memref<9xi32, #tpu.memory_space<smem>>
    %c0_i32_3 = arith.constant 0 : i32
    %10 = arith.cmpi sgt, %9, %c0_i32_3 : i32
    %11 = arith.extui %10 : i1 to i32
    %c0_i32_4 = arith.constant 0 : i32
    %12 = arith.cmpi ne, %11, %c0_i32_4 : i32
    scf.if %12 {
      %13 = arith.index_cast %arg0 : i32 to index
      %14 = memref.load %arg1[%13] : memref<9xi32, #tpu.memory_space<smem>>
      %c2_i32 = arith.constant 2 : i32
      %15 = arith.muli %14, %c2_i32 : i32
      %16 = arith.index_cast %arg0 : i32 to index
      %17 = memref.load %arg2[%16] : memref<9xi32, #tpu.memory_space<smem>>
      %18 = arith.addi %15, %17 : i32
      %c0 = arith.constant 0 : index
      %c0_5 = arith.constant 0 : index
      %19 = vector.load %arg7[%c0, %c0_5] : memref<128x1xi32, #tpu.memory_space<vmem>>, vector<128x1xi32>
      %20 = vector.broadcast %18 : i32 to vector<128x1xi32>
      %21 = arith.cmpi eq, %19, %20 : vector<128x1xi32>
      %c0_6 = arith.constant 0 : index
      %c0_7 = arith.constant 0 : index
      %22 = vector.load %arg6[%c0_6, %c0_7] : memref<128x1xi32, #tpu.memory_space<vmem>>, vector<128x1xi32>
      %c-1_i32 = arith.constant -1 : i32
      %23 = vector.broadcast %c-1_i32 : i32 to vector<128x1xi32>
      %24 = arith.select %21, %22, %23 : vector<128x1xi1>, vector<128x1xi32>
      %c0_8 = arith.constant 0 : index
      %c0_9 = arith.constant 0 : index
      %25 = vector.load %arg10[%c0_8, %c0_9] : memref<128x512xi32, #tpu.memory_space<vmem>>, vector<128x512xi32>
      %26 = vector.broadcast %24 : vector<128x1xi32> to vector<128x512xi32>
      %27 = arith.cmpi eq, %26, %25 : vector<128x512xi32>
      %28 = arith.extui %27 : vector<128x512xi1> to vector<128x512xi32>
      %29 = arith.sitofp %28 : vector<128x512xi32> to vector<128x512xf32>
      %c0_10 = arith.constant 0 : index
      %c0_11 = arith.constant 0 : index
      %30 = vector.load %arg8[%c0_10, %c0_11] : memref<128x64xf32, #tpu.memory_space<vmem>>, vector<128x64xf32>
      %31 = tpu.transpose %30, [1, 0] : vector<128x64xf32> -> vector<64x128xf32>
      %cst = arith.constant dense<0.000000e+00> : vector<64x512xf32>
      %32 = tpu.matmul %31, %29, %cst {dimension_numbers = #tpu.dot_dimension_numbers<[1], [0], [0], [1], [0, 0, 1, 1], [], []>, precision = #tpu.contract_precision<fp32>} : vector<64x128xf32>, vector<128x512xf32>, vector<64x512xf32> -> vector<64x512xf32>
      %c0_12 = arith.constant 0 : index
      %c0_13 = arith.constant 0 : index
      %c0_14 = arith.constant 0 : index
      %33 = vector.load %arg9[%c0_12, %c0_13, %c0_14] : memref<1x64x512xf32, #tpu.memory_space<vmem>>, vector<1x64x512xf32>
      %34 = vector.shape_cast %33 : vector<1x64x512xf32> to vector<64x512xf32>
      %35 = arith.addf %34, %32 : vector<64x512xf32>
      %c0_15 = arith.constant 0 : index
      %c0_16 = arith.constant 0 : index
      %c0_17 = arith.constant 0 : index
      %36 = vector.load %arg9[%c0_15, %c0_16, %c0_17] : memref<1x64x512xf32, #tpu.memory_space<vmem>>, vector<1x64x512xf32>
      %37 = vector.shape_cast %36 : vector<1x64x512xf32> to vector<64x512xf32>
      %38 = vector.shape_cast %35 : vector<64x512xf32> to vector<1x64x512xf32>
      tpu.vector_store %arg9[%c0_15, %c0_16, %c0_17], %38 {strides = array<i32>} : memref<1x64x512xf32, #tpu.memory_space<vmem>>, vector<1x64x512xf32>,
    } else {
    }
    return
  }
  func.func @transform_0(%arg0: i32, %arg1: memref<9xi32, #tpu.memory_space<smem>>, %arg2: memref<9xi32, #tpu.memory_space<smem>>, %arg3: memref<9xi32, #tpu.memory_space<smem>>, %arg4: memref<9xi32, #tpu.memory_space<smem>>, %arg5: memref<9xi32, #tpu.memory_space<smem>>) -> (i32, i32) {
    %0 = arith.index_cast %arg0 : i32 to index
    %1 = memref.load %arg3[%0] : memref<9xi32, #tpu.memory_space<smem>>
    %c0_i32 = arith.constant 0 : i32
    %c0_i32_0 = arith.constant 0 : i32
    return %1, %c0_i32 : i32, i32
  }
  func.func @transform_1(%arg0: i32, %arg1: memref<9xi32, #tpu.memory_space<smem>>, %arg2: memref<9xi32, #tpu.memory_space<smem>>, %arg3: memref<9xi32, #tpu.memory_space<smem>>, %arg4: memref<9xi32, #tpu.memory_space<smem>>, %arg5: memref<9xi32, #tpu.memory_space<smem>>) -> (i32, i32) {
    %0 = arith.index_cast %arg0 : i32 to index
    %1 = memref.load %arg3[%0] : memref<9xi32, #tpu.memory_space<smem>>
    %c0_i32 = arith.constant 0 : i32
    %c0_i32_0 = arith.constant 0 : i32
    return %1, %c0_i32 : i32, i32
  }
  func.func @transform_2(%arg0: i32, %arg1: memref<9xi32, #tpu.memory_space<smem>>, %arg2: memref<9xi32, #tpu.memory_space<smem>>, %arg3: memref<9xi32, #tpu.memory_space<smem>>, %arg4: memref<9xi32, #tpu.memory_space<smem>>, %arg5: memref<9xi32, #tpu.memory_space<smem>>) -> (i32, i32) {
    %0 = arith.index_cast %arg0 : i32 to index
    %1 = memref.load %arg3[%0] : memref<9xi32, #tpu.memory_space<smem>>
    %c0_i32 = arith.constant 0 : i32
    %c0_i32_0 = arith.constant 0 : i32
    return %1, %c0_i32 : i32, i32
  }
  func.func @transform_3(%arg0: i32, %arg1: memref<9xi32, #tpu.memory_space<smem>>, %arg2: memref<9xi32, #tpu.memory_space<smem>>, %arg3: memref<9xi32, #tpu.memory_space<smem>>, %arg4: memref<9xi32, #tpu.memory_space<smem>>, %arg5: memref<9xi32, #tpu.memory_space<smem>>) -> (i32, i32, i32) {
    %0 = arith.index_cast %arg0 : i32 to index
    %1 = memref.load %arg1[%0] : memref<9xi32, #tpu.memory_space<smem>>
    %2 = arith.index_cast %arg0 : i32 to index
    %3 = memref.load %arg2[%2] : memref<9xi32, #tpu.memory_space<smem>>
    %c0_i32 = arith.constant 0 : i32
    %c0_i32_0 = arith.constant 0 : i32
    return %1, %c0_i32, %3 : i32, i32, i32
  }
}

</mosaic_0001>

<llo_original>
// kernel: point_pillars_scatter.1
$region0: #{point_pillars_scatter.1}
  #allocation0 [shape = 'u32[]', space=smem, size = 0x4, offset = 0x4, fixed_abs, tag = 'smem constant byte address 0x4 - core index']
  #allocation1 [shape = 'u32[144,128]{1,0:T(1,128)}', space=vmem, size = 0x12000, scoped, tag = 'internal scratch']
  #allocation2 [shape = 's32[128,512]{1,0:T(8,128)}', space=vmem, size = 0x40000, scoped, tag = 'scratch operand']
  #allocation3 [shape = 's32[1]{0}', space=sflag, size = 0x4, scoped, tag = 'scoped memory for point_pillars_scatter.1']
  #allocation4 [shape = 'u8[512]{0}', space=smem, size = 0x200, scoped, tag = 'prefetched SMEM operand 0']
  #allocation5 [shape = 'u8[512]{0}', space=smem, size = 0x200, scoped, tag = 'prefetched SMEM operand 1']
  #allocation6 [shape = 'u8[512]{0}', space=smem, size = 0x200, scoped, tag = 'prefetched SMEM operand 2']
  #allocation7 [shape = 'u8[512]{0}', space=smem, size = 0x200, scoped, tag = 'prefetched SMEM operand 3']
  #allocation8 [shape = 'u8[512]{0}', space=smem, size = 0x200, scoped, tag = 'prefetched SMEM operand 4']
  %s0 = inlined_call_operand.vmem [shape: s32[9], index: 0, kind: input, shape index: {}]
  %s1 = inlined_call_operand.vmem [shape: s32[9], index: 1, kind: input, shape index: {}]
  %s2 = inlined_call_operand.vmem [shape: s32[9], index: 2, kind: input, shape index: {}]
  %s3 = inlined_call_operand.vmem [shape: s32[9], index: 3, kind: input, shape index: {}]
  %s4 = inlined_call_operand.vmem [shape: s32[9], index: 4, kind: input, shape index: {}]
  %s5 = inlined_call_operand.vmem [shape: s32[640,1], index: 5, kind: input, shape index: {}]
  %s6 = inlined_call_operand.vmem [shape: s32[640,1], index: 6, kind: input, shape index: {}]
  %s7 = inlined_call_operand.vmem [shape: f32[640,64], index: 7, kind: input, shape index: {}]
  %s8 = inlined_call_operand.vmem [shape: f32[2,64,1024], index: 8, kind: output, shape index: {}]
  %s9 = sld [smem:[#allocation0]]
  $region76: #{point_pillars_scatter.1} parent=0
    _
  %s11 = ssub.s32 1, %s9
  %s12 = scalar_select 0, %s11, %s9
  %s13 = sshll.u32 %s0, 4
  %s14 = int_to_ptr.vmem [resolvable:$true] %s13
  %16 = dma.vmem_to_smem %s14, 16, [#allocation4], [#allocation3]
  %s17 = sshll.u32 %s1, 4
  %s18 = int_to_ptr.vmem [resolvable:$true] %s17
  %20 = dma.vmem_to_smem %s18, 16, [#allocation5], [#allocation3]
  %s21 = sshll.u32 %s2, 4
  %s22 = int_to_ptr.vmem [resolvable:$true] %s21
  %24 = dma.vmem_to_smem %s22, 16, [#allocation6], [#allocation3]
  %s25 = sshll.u32 %s3, 4
  %s26 = int_to_ptr.vmem [resolvable:$true] %s25
  %28 = dma.vmem_to_smem %s26, 16, [#allocation7], [#allocation3]
  %s29 = sshll.u32 %s4, 4
  %s30 = int_to_ptr.vmem [resolvable:$true] %s29
  %32 = dma.vmem_to_smem %s30, 16, [#allocation8], [#allocation3]
  %33 = dma.done [#allocation3], 80
  %34 = sfence
  $region1: #{point_pillars_scatter.1} parent=0
    #allocation9 [shape = 'u8[262144]{0}', space=vmem, size = 0x40000, scoped, tag = 'output window, operand 0']
    loop: start=0, step=1, limit=11
    $region2: #{point_pillars_scatter.1} parent=1 // loop_pre_header
      _
    $region3: #{point_pillars_scatter.1} parent=1 // loop_header
      %s36 = sphi 0, %s40
      %p37 = scmp.ge.s32.totalorder %s36, 11
      %s48 = sphi 0, %s50
      %s51 = sphi 0, %s48
      %s52 = sphi 0, %s51
      %s68 = sphi 0, %s52
      %s76 = sphi 0, %s78
      %s79 = sphi 0, %s76
      %s80 = sphi 0, %s79
      %s96 = sphi 0, %s80
      %s104 = sphi 0, %s106
      %s107 = sphi 0, %s104
      %s108 = sphi 0, %s107
      %s124 = sphi 0, %s108
      %s136 = sphi 0, %s138
      %s139 = sphi 0, %s136
      %s140 = sphi 0, %s139
      %s156 = sphi 0, %s140
    $region4: #{point_pillars_scatter.1} parent=1 // loop_header_branch
      %39 = sbr.rel (%p37) target = $region8
    $region5: #{point_pillars_scatter.1} parent=1 // loop_body
      %s41 = ssub.s32 %s36, 1
      %s42 = ssub.s32 %s36, 2
      %s43 = sadd.s32 %s36, 1
      %s44 = sld [smem:[#allocation6 + %s36]]
      %s45 = sld [smem:[#allocation6 + %s43]]
      %s46 = ssub.s32 %s44, %s45
      %p47 = scmp.eq.s32.totalorder %s46, 0
      %s49 = sadd.s32 %s48, 1
      %s50 = scalar_select %p47, %s48, %s49
      %p53 = pneg %p47
      %p54 = scmp.eq.s32.totalorder %s36, 8
      %p55 = por %p53, %p54
      %p56 = scmp.ne.s32.totalorder %s48, %s51
      %p57 = scmp.eq.s32.totalorder %s36, 0
      %p58 = por %p56, %p57
      %p59 = scmp.ne.s32.totalorder %s48, %s51
      %p60 = scmp.eq.s32.totalorder %s41, 8
      %p61 = por %p59, %p60
      %p62 = scmp.ne.s32.totalorder %s51, %s52
      %p63 = scmp.eq.s32.totalorder %s41, 0
      %p64 = por %p62, %p63
      %p65 = scmp.ne.s32.totalorder %s51, %s52
      %p66 = scmp.eq.s32.totalorder %s42, 8
      %p67 = por %p65, %p66
      %p69 = scmp.ne.s32.totalorder %s52, %s68
      %p70 = scmp.eq.s32.totalorder %s42, 0
      %p71 = por %p69, %p70
      %s72 = sld [smem:[#allocation6 + %s36]]
      %s73 = sld [smem:[#allocation6 + %s43]]
      %s74 = ssub.s32 %s72, %s73
      %p75 = scmp.eq.s32.totalorder %s74, 0
      %s77 = sadd.s32 %s76, 1
      %s78 = scalar_select %p75, %s76, %s77
      %p81 = pneg %p75
      %p82 = scmp.eq.s32.totalorder %s36, 8
      %p83 = por %p81, %p82
      %p84 = scmp.ne.s32.totalorder %s76, %s79
      %p85 = scmp.eq.s32.totalorder %s36, 0
      %p86 = por %p84, %p85
      %p87 = scmp.ne.s32.totalorder %s76, %s79
      %p88 = scmp.eq.s32.totalorder %s41, 8
      %p89 = por %p87, %p88
      %p90 = scmp.ne.s32.totalorder %s79, %s80
      %p91 = scmp.eq.s32.totalorder %s41, 0
      %p92 = por %p90, %p91
      %p93 = scmp.ne.s32.totalorder %s79, %s80
      %p94 = scmp.eq.s32.totalorder %s42, 8
      %p95 = por %p93, %p94
      %p97 = scmp.ne.s32.totalorder %s80, %s96
      %p98 = scmp.eq.s32.totalorder %s42, 0
      %p99 = por %p97, %p98
      %s100 = sld [smem:[#allocation6 + %s36]]
      %s101 = sld [smem:[#allocation6 + %s43]]
      %s102 = ssub.s32 %s100, %s101
      %p103 = scmp.eq.s32.totalorder %s102, 0
      %s105 = sadd.s32 %s104, 1
      %s106 = scalar_select %p103, %s104, %s105
      %p109 = pneg %p103
      %p110 = scmp.eq.s32.totalorder %s36, 8
      %p111 = por %p109, %p110
      %p112 = scmp.ne.s32.totalorder %s104, %s107
      %p113 = scmp.eq.s32.totalorder %s36, 0
      %p114 = por %p112, %p113
      %p115 = scmp.ne.s32.totalorder %s104, %s107
      %p116 = scmp.eq.s32.totalorder %s41, 8
      %p117 = por %p115, %p116
      %p118 = scmp.ne.s32.totalorder %s107, %s108
      %p119 = scmp.eq.s32.totalorder %s41, 0
      %p120 = por %p118, %p119
      %p121 = scmp.ne.s32.totalorder %s107, %s108
      %p122 = scmp.eq.s32.totalorder %s42, 8
      %p123 = por %p121, %p122
      %p125 = scmp.ne.s32.totalorder %s108, %s124
      %p126 = scmp.eq.s32.totalorder %s42, 0
      %p127 = por %p125, %p126
      %s128 = sld [smem:[#allocation4 + %s36]]
      %s129 = sld [smem:[#allocation5 + %s36]]
      %s130 = sld [smem:[#allocation4 + %s43]]
      %s131 = sld [smem:[#allocation5 + %s43]]
      %s132 = ssub.s32 %s128, %s130
      %s133 = ssub.s32 %s129, %s131
      %s134 = sor.u32 %s132, %s133
      %p135 = scmp.eq.s32.totalorder %s134, 0
      %s137 = sadd.s32 %s136, 1
      %s138 = scalar_select %p135, %s136, %s137
      %p141 = pneg %p135
      %p142 = scmp.eq.s32.totalorder %s36, 8
      %p143 = por %p141, %p142
      %p144 = scmp.ne.s32.totalorder %s136, %s139
      %p145 = scmp.eq.s32.totalorder %s36, 0
      %p146 = por %p144, %p145
      %p147 = scmp.ne.s32.totalorder %s136, %s139
      %p148 = scmp.eq.s32.totalorder %s41, 8
      %p149 = por %p147, %p148
      %p150 = scmp.ne.s32.totalorder %s139, %s140
      %p151 = scmp.eq.s32.totalorder %s41, 0
      %p152 = por %p150, %p151
      %p153 = scmp.ne.s32.totalorder %s139, %s140
      %p154 = scmp.eq.s32.totalorder %s42, 8
      %p155 = por %p153, %p154
      %p157 = scmp.ne.s32.totalorder %s140, %s156
      %p158 = scmp.eq.s32.totalorder %s42, 0
      %p159 = por %p157, %p158
      %p160 = scmp.le.s32.totalorder 1, %s36
      %p161 = scmp.lt.s32.totalorder %s36, 10
      %p162 = pnand %p160, %p161
      %p163 = pneg %p162
      // Predicated region
      $region9: #{point_pillars_scatter.1} parent=5 // pred_check
        _
      $region10: #{point_pillars_scatter.1} parent=5 // pred_check_branch
        %165 = sbr.rel (%p162) target = $region12
      $region11: #{point_pillars_scatter.1} parent=5 // pred_region
        %s166 = ssub.s32 %s36, 1
      $region12: #{point_pillars_scatter.1} parent=5 // pred_fallthru
        _
      %p167 = scmp.lt.s32.totalorder %s36, 9
      // Predicated region
      $region13: #{point_pillars_scatter.1} parent=5 // pred_check
        %p168 = pneg %p167
      $region14: #{point_pillars_scatter.1} parent=5 // pred_check_branch
        %170 = sbr.rel (%p168) target = $region16
      $region15: #{point_pillars_scatter.1} parent=5 // pred_region
        // Predicated region
        $region17: #{point_pillars_scatter.1} parent=15 // pred_check
          %p171 = pneg %p58
        $region18: #{point_pillars_scatter.1} parent=15 // pred_check_branch
          %173 = sbr.rel (%p171) target = $region20
        $region19: #{point_pillars_scatter.1} parent=15 // pred_region
          %s174 = sld [smem:[#allocation6 + %s36]]
          %s175 = smul.u32 16, %s174
          %p176 = scmp.lt.s32.totalorder %s175, 79
          %s177 = scalar_select %p176, %s175, 79
          %s178 = smul.addr %s177, 8
          %s179 = scalar_lea.vmem %s5, %s178
          %s180 = sld [smem:[#allocation6 + %s36]]
          %s181 = smul.u32 16, %s180
        $region20: #{point_pillars_scatter.1} parent=15 // pred_fallthru
          _
        // Predicated region
        $region21: #{point_pillars_scatter.1} parent=15 // pred_check
          %p182 = pneg %p86
        $region22: #{point_pillars_scatter.1} parent=15 // pred_check_branch
          %184 = sbr.rel (%p182) target = $region24
        $region23: #{point_pillars_scatter.1} parent=15 // pred_region
          %s185 = sld [smem:[#allocation6 + %s36]]
          %s186 = smul.u32 16, %s185
          %p187 = scmp.lt.s32.totalorder %s186, 79
          %s188 = scalar_select %p187, %s186, 79
          %s189 = smul.addr %s188, 8
          %s190 = scalar_lea.vmem %s6, %s189
          %s191 = sld [smem:[#allocation6 + %s36]]
          %s192 = smul.u32 16, %s191
        $region24: #{point_pillars_scatter.1} parent=15 // pred_fallthru
          _
        // Predicated region
        $region25: #{point_pillars_scatter.1} parent=15 // pred_check
          %p193 = pneg %p114
        $region26: #{point_pillars_scatter.1} parent=15 // pred_check_branch
          %195 = sbr.rel (%p193) target = $region28
        $region27: #{point_pillars_scatter.1} parent=15 // pred_region
          %s196 = sld [smem:[#allocation6 + %s36]]
          %s197 = smul.u32 16, %s196
          %p198 = scmp.lt.s32.totalorder %s197, 79
          %s199 = scalar_select %p198, %s197, 79
          %s200 = smul.addr %s199, 8
          %s201 = scalar_lea.vmem %s7, %s200
          %s202 = sld [smem:[#allocation6 + %s36]]
          %s203 = smul.u32 16, %s202
        $region28: #{point_pillars_scatter.1} parent=15 // pred_fallthru
          _
      $region16: #{point_pillars_scatter.1} parent=5 // pred_fallthru
        _
      %p204 = scmp.le.s32.totalorder 1, %s36
      %p205 = scmp.lt.s32.totalorder %s36, 10
      %p206 = pnand %p204, %p205
      %p207 = pneg %p206
      // Predicated region
      $region29: #{point_pillars_scatter.1} parent=5 // pred_check
        _
      $region30: #{point_pillars_scatter.1} parent=5 // pred_check_branch
        %209 = sbr.rel (%p206) target = $region32
      $region31: #{point_pillars_scatter.1} parent=5 // pred_region
        %s210 = ssub.s32 %s36, 1
        %s211 = sld [smem:[#allocation6 + %s41]]
        %s212 = smul.u32 16, %s211
        %p213 = scmp.lt.s32.totalorder %s212, 79
        %s214 = scalar_select %p213, %s212, 79
        %s215 = smul.addr %s214, 8
        %s216 = scalar_lea.vmem %s5, %s215
        %p217 = pneg %p64
        %p218 = pneg %p61
        %s219 = sld [smem:[#allocation6 + %s41]]
        %s220 = smul.u32 16, %s219
        %p221 = scmp.lt.s32.totalorder %s220, 79
        %s222 = scalar_select %p221, %s220, 79
        %s223 = smul.addr %s222, 8
        %s224 = scalar_lea.vmem %s6, %s223
        %p225 = pneg %p92
        %p226 = pneg %p89
        %s227 = sld [smem:[#allocation6 + %s41]]
        %s228 = smul.u32 16, %s227
        %p229 = scmp.lt.s32.totalorder %s228, 79
        %s230 = scalar_select %p229, %s228, 79
        %s231 = smul.addr %s230, 8
        %s232 = scalar_lea.vmem %s7, %s231
        %p233 = pneg %p120
        %p234 = pneg %p117
        %p235 = pneg %p152
        %p236 = pneg %p149
        %s237 = sand.u32 %s139, 1
        %s238 = sand.u32 %s139, 1
        %s239 = smul.addr %s238, 256
        %s240 = scalar_lea.vmem [#allocation9], %s239
        %s241 = sld [smem:[#allocation6 + %s41]]
        %s242 = smul.u32 16, %s241
        %p243 = scmp.lt.s32.totalorder %s242, 79
        %s244 = scalar_select %p243, %s242, 79
        %s245 = smul.addr %s244, 8
        %s246 = scalar_lea.vmem %s5, %s245
        %s247 = sld [smem:[#allocation6 + %s41]]
        %s248 = smul.u32 16, %s247
        %s249 = sld [smem:[#allocation6 + %s41]]
        %s250 = smul.u32 16, %s249
        %p251 = scmp.lt.s32.totalorder %s250, 79
        %s252 = scalar_select %p251, %s250, 79
        %s253 = smul.addr %s252, 8
        %s254 = scalar_lea.vmem %s6, %s253
        %s255 = sld [smem:[#allocation6 + %s41]]
        %s256 = smul.u32 16, %s255
        %s257 = sld [smem:[#allocation6 + %s41]]
        %s258 = smul.u32 16, %s257
        %p259 = scmp.lt.s32.totalorder %s258, 79
        %s260 = scalar_select %p259, %s258, 79
        %s261 = smul.addr %s260, 8
        %s262 = scalar_lea.vmem %s7, %s261
        %s263 = sld [smem:[#allocation6 + %s41]]
        %s264 = smul.u32 16, %s263
        %s265 = sld [smem:[#allocation4 + %s41]]
        %s266 = sld [smem:[#allocation5 + %s41]]
        %s267 = smul.u32 4, %s266
        %p268 = scmp.eq.s32.totalorder %s41, 0
        // Predicated region
        $region33: #{point_pillars_scatter.1} parent=31 // pred_check
          %p269 = pneg %p268
        $region34: #{point_pillars_scatter.1} parent=31 // pred_check_branch
          %271 = sbr.rel (%p269) target = $region36
        $region35: #{point_pillars_scatter.1} parent=31 // pred_region
          %v272 = vlaneseq
          %v273 = vand.u32 %v272, 127
          %v274 = vadd.s32 %v273, 128
          %v275 = vadd.s32 %v273, 256
          %v276 = vadd.s32 %v273, 384
          %277 = vst [vmem:[#allocation2] sm:$0xff] %v273
          %278 = vst [vmem:[#allocation2 + $0x8] sm:$0xff] %v274
          %279 = vst [vmem:[#allocation2 + $0x10] sm:$0xff] %v275
          %280 = vst [vmem:[#allocation2 + $0x18] sm:$0xff] %v276
          %281 = vst [vmem:[#allocation2 + $0x20] sm:$0xff] %v273
          %282 = vst [vmem:[#allocation2 + $0x28] sm:$0xff] %v274
          %283 = vst [vmem:[#allocation2 + $0x30] sm:$0xff] %v275
          %284 = vst [vmem:[#allocation2 + $0x38] sm:$0xff] %v276
          %285 = vst [vmem:[#allocation2 + $0x40] sm:$0xff] %v273
          %286 = vst [vmem:[#allocation2 + $0x48] sm:$0xff] %v274
          %287 = vst [vmem:[#allocation2 + $0x50] sm:$0xff] %v275
          %288 = vst [vmem:[#allocation2 + $0x58] sm:$0xff] %v276
          %289 = vst [vmem:[#allocation2 + $0x60] sm:$0xff] %v273
          %290 = vst [vmem:[#allocation2 + $0x68] sm:$0xff] %v274
          %291 = vst [vmem:[#allocation2 + $0x70] sm:$0xff] %v275
          %292 = vst [vmem:[#allocation2 + $0x78] sm:$0xff] %v276
          %293 = vst [vmem:[#allocation2 + $0x80] sm:$0xff] %v273
          %294 = vst [vmem:[#allocation2 + $0x88] sm:$0xff] %v274
          %295 = vst [vmem:[#allocation2 + $0x90] sm:$0xff] %v275
          %296 = vst [vmem:[#allocation2 + $0x98] sm:$0xff] %v276
          %297 = vst [vmem:[#allocation2 + $0xa0] sm:$0xff] %v273
          %298 = vst [vmem:[#allocation2 + $0xa8] sm:$0xff] %v274
          %299 = vst [vmem:[#allocation2 + $0xb0] sm:$0xff] %v275
          %300 = vst [vmem:[#allocation2 + $0xb8] sm:$0xff] %v276
          %301 = vst [vmem:[#allocation2 + $0xc0] sm:$0xff] %v273
          %302 = vst [vmem:[#allocation2 + $0xc8] sm:$0xff] %v274
          %303 = vst [vmem:[#allocation2 + $0xd0] sm:$0xff] %v275
          %304 = vst [vmem:[#allocation2 + $0xd8] sm:$0xff] %v276
          %305 = vst [vmem:[#allocation2 + $0xe0] sm:$0xff] %v273
          %306 = vst [vmem:[#allocation2 + $0xe8] sm:$0xff] %v274
          %307 = vst [vmem:[#allocation2 + $0xf0] sm:$0xff] %v275
          %308 = vst [vmem:[#allocation2 + $0xf8] sm:$0xff] %v276
          %309 = vst [vmem:[#allocation2 + $0x100] sm:$0xff] %v273
          %310 = vst [vmem:[#allocation2 + $0x108] sm:$0xff] %v274
          %311 = vst [vmem:[#allocation2 + $0x110] sm:$0xff] %v275
          %312 = vst [vmem:[#allocation2 + $0x118] sm:$0xff] %v276
          %313 = vst [vmem:[#allocation2 + $0x120] sm:$0xff] %v273
          %314 = vst [vmem:[#allocation2 + $0x128] sm:$0xff] %v274
          %315 = vst [vmem:[#allocation2 + $0x130] sm:$0xff] %v275
          %316 = vst [vmem:[#allocation2 + $0x138] sm:$0xff] %v276
          %317 = vst [vmem:[#allocation2 + $0x140] sm:$0xff] %v273
          %318 = vst [vmem:[#allocation2 + $0x148] sm:$0xff] %v274
          %319 = vst [vmem:[#allocation2 + $0x150] sm:$0xff] %v275
          %320 = vst [vmem:[#allocation2 + $0x158] sm:$0xff] %v276
          %321 = vst [vmem:[#allocation2 + $0x160] sm:$0xff] %v273
          %322 = vst [vmem:[#allocation2 + $0x168] sm:$0xff] %v274
          %323 = vst [vmem:[#allocation2 + $0x170] sm:$0xff] %v275
          %324 = vst [vmem:[#allocation2 + $0x178] sm:$0xff] %v276
          %325 = vst [vmem:[#allocation2 + $0x180] sm:$0xff] %v273
          %326 = vst [vmem:[#allocation2 + $0x188] sm:$0xff] %v274
          %327 = vst [vmem:[#allocation2 + $0x190] sm:$0xff] %v275
          %328 = vst [vmem:[#allocation2 + $0x198] sm:$0xff] %v276
          %329 = vst [vmem:[#allocation2 + $0x1a0] sm:$0xff] %v273
          %330 = vst [vmem:[#allocation2 + $0x1a8] sm:$0xff] %v274
          %331 = vst [vmem:[#allocation2 + $0x1b0] sm:$0xff] %v275
          %332 = vst [vmem:[#allocation2 + $0x1b8] sm:$0xff] %v276
          %333 = vst [vmem:[#allocation2 + $0x1c0] sm:$0xff] %v273
          %334 = vst [vmem:[#allocation2 + $0x1c8] sm:$0xff] %v274
          %335 = vst [vmem:[#allocation2 + $0x1d0] sm:$0xff] %v275
          %336 = vst [vmem:[#allocation2 + $0x1d8] sm:$0xff] %v276
          %337 = vst [vmem:[#allocation2 + $0x1e0] sm:$0xff] %v273
          %338 = vst [vmem:[#allocation2 + $0x1e8] sm:$0xff] %v274
          %339 = vst [vmem:[#allocation2 + $0x1f0] sm:$0xff] %v275
          %340 = vst [vmem:[#allocation2 + $0x1f8] sm:$0xff] %v276
        $region36: #{point_pillars_scatter.1} parent=31 // pred_fallthru
          _
        %s341 = sld [smem:[#allocation8 + %s41]]
        %p342 = scmp.gt.s32.totalorder %s341, 0
        // Predicated region
        $region37: #{point_pillars_scatter.1} parent=31 // pred_check
          %p343 = pneg %p342
        $region38: #{point_pillars_scatter.1} parent=31 // pred_check_branch
          %345 = sbr.rel (%p343) target = $region40
        $region39: #{point_pillars_scatter.1} parent=31 // pred_region
          %346 = vst [vmem:[%s240] sm:$0xff] 0.0
          %347 = vst [vmem:[%s240 + $0x8] sm:$0xff] 0.0
          %348 = vst [vmem:[%s240 + $0x10] sm:$0xff] 0.0
          %349 = vst [vmem:[%s240 + $0x18] sm:$0xff] 0.0
          %350 = vst [vmem:[%s240 + $0x20] sm:$0xff] 0.0
          %351 = vst [vmem:[%s240 + $0x28] sm:$0xff] 0.0
          %352 = vst [vmem:[%s240 + $0x30] sm:$0xff] 0.0
          %353 = vst [vmem:[%s240 + $0x38] sm:$0xff] 0.0
          %354 = vst [vmem:[%s240 + $0x40] sm:$0xff] 0.0
          %355 = vst [vmem:[%s240 + $0x48] sm:$0xff] 0.0
          %356 = vst [vmem:[%s240 + $0x50] sm:$0xff] 0.0
          %357 = vst [vmem:[%s240 + $0x58] sm:$0xff] 0.0
          %358 = vst [vmem:[%s240 + $0x60] sm:$0xff] 0.0
          %359 = vst [vmem:[%s240 + $0x68] sm:$0xff] 0.0
          %360 = vst [vmem:[%s240 + $0x70] sm:$0xff] 0.0
          %361 = vst [vmem:[%s240 + $0x78] sm:$0xff] 0.0
          %362 = vst [vmem:[%s240 + $0x80] sm:$0xff] 0.0
          %363 = vst [vmem:[%s240 + $0x88] sm:$0xff] 0.0
          %364 = vst [vmem:[%s240 + $0x90] sm:$0xff] 0.0
          %365 = vst [vmem:[%s240 + $0x98] sm:$0xff] 0.0
          %366 = vst [vmem:[%s240 + $0xa0] sm:$0xff] 0.0
          %367 = vst [vmem:[%s240 + $0xa8] sm:$0xff] 0.0
          %368 = vst [vmem:[%s240 + $0xb0] sm:$0xff] 0.0
          %369 = vst [vmem:[%s240 + $0xb8] sm:$0xff] 0.0
          %370 = vst [vmem:[%s240 + $0xc0] sm:$0xff] 0.0
          %371 = vst [vmem:[%s240 + $0xc8] sm:$0xff] 0.0
          %372 = vst [vmem:[%s240 + $0xd0] sm:$0xff] 0.0
          %373 = vst [vmem:[%s240 + $0xd8] sm:$0xff] 0.0
          %374 = vst [vmem:[%s240 + $0xe0] sm:$0xff] 0.0
          %375 = vst [vmem:[%s240 + $0xe8] sm:$0xff] 0.0
          %376 = vst [vmem:[%s240 + $0xf0] sm:$0xff] 0.0
          %377 = vst [vmem:[%s240 + $0xf8] sm:$0xff] 0.0
        $region40: #{point_pillars_scatter.1} parent=31 // pred_fallthru
          _
        %s378 = sld [smem:[#allocation7 + %s41]]
        %p379 = scmp.gt.s32.totalorder %s378, 0
        // Predicated region
        $region41: #{point_pillars_scatter.1} parent=31 // pred_check
          %p380 = pneg %p379
        $region42: #{point_pillars_scatter.1} parent=31 // pred_check_branch
          %382 = sbr.rel (%p380) target = $region44
        $region43: #{point_pillars_scatter.1} parent=31 // pred_region
          %s383 = sld [smem:[#allocation4 + %s41]]
          %s384 = smul.u32 %s383, 2
          %s385 = sld [smem:[#allocation5 + %s41]]
          %s386 = sadd.s32 %s384, %s385
          %v387 = vld [vmem:[%s254] sm:$0xff]
          %v388 = vld [vmem:[%s254 + $0x8] sm:$0xff]
          %v389 = vld [vmem:[%s254 + $0x10] sm:$0xff]
          %v390 = vld [vmem:[%s254 + $0x18] sm:$0xff]
          %v391 = vld [vmem:[%s254 + $0x20] sm:$0xff]
          %v392 = vld [vmem:[%s254 + $0x28] sm:$0xff]
          %v393 = vld [vmem:[%s254 + $0x30] sm:$0xff]
          %v394 = vld [vmem:[%s254 + $0x38] sm:$0xff]
          %v395 = vld [vmem:[%s254 + $0x40] sm:$0xff]
          %v396 = vld [vmem:[%s254 + $0x48] sm:$0xff]
          %v397 = vld [vmem:[%s254 + $0x50] sm:$0xff]
          %v398 = vld [vmem:[%s254 + $0x58] sm:$0xff]
          %v399 = vld [vmem:[%s254 + $0x60] sm:$0xff]
          %v400 = vld [vmem:[%s254 + $0x68] sm:$0xff]
          %v401 = vld [vmem:[%s254 + $0x70] sm:$0xff]
          %v402 = vld [vmem:[%s254 + $0x78] sm:$0xff]
          %v403 = vstv %s386
          %vm404 = vcmp.eq.s32.totalorder %v387, %v403
          %vm405 = vcmp.eq.s32.totalorder %v388, %v403
          %vm406 = vcmp.eq.s32.totalorder %v389, %v403
          %vm407 = vcmp.eq.s32.totalorder %v390, %v403
          %vm408 = vcmp.eq.s32.totalorder %v391, %v403
          %vm409 = vcmp.eq.s32.totalorder %v392, %v403
          %vm410 = vcmp.eq.s32.totalorder %v393, %v403
          %vm411 = vcmp.eq.s32.totalorder %v394, %v403
          %vm412 = vcmp.eq.s32.totalorder %v395, %v403
          %vm413 = vcmp.eq.s32.totalorder %v396, %v403
          %vm414 = vcmp.eq.s32.totalorder %v397, %v403
          %vm415 = vcmp.eq.s32.totalorder %v398, %v403
          %vm416 = vcmp.eq.s32.totalorder %v399, %v403
          %vm417 = vcmp.eq.s32.totalorder %v400, %v403
          %vm418 = vcmp.eq.s32.totalorder %v401, %v403
          %vm419 = vcmp.eq.s32.totalorder %v402, %v403
          %v420 = vld [vmem:[%s246] sm:$0xff]
          %v421 = vld [vmem:[%s246 + $0x8] sm:$0xff]
          %v422 = vld [vmem:[%s246 + $0x10] sm:$0xff]
          %v423 = vld [vmem:[%s246 + $0x18] sm:$0xff]
          %v424 = vld [vmem:[%s246 + $0x20] sm:$0xff]
          %v425 = vld [vmem:[%s246 + $0x28] sm:$0xff]
          %v426 = vld [vmem:[%s246 + $0x30] sm:$0xff]
          %v427 = vld [vmem:[%s246 + $0x38] sm:$0xff]
          %v428 = vld [vmem:[%s246 + $0x40] sm:$0xff]
          %v429 = vld [vmem:[%s246 + $0x48] sm:$0xff]
          %v430 = vld [vmem:[%s246 + $0x50] sm:$0xff]
          %v431 = vld [vmem:[%s246 + $0x58] sm:$0xff]
          %v432 = vld [vmem:[%s246 + $0x60] sm:$0xff]
          %v433 = vld [vmem:[%s246 + $0x68] sm:$0xff]
          %v434 = vld [vmem:[%s246 + $0x70] sm:$0xff]
          %v435 = vld [vmem:[%s246 + $0x78] sm:$0xff]
          %v436 = vsel %vm404, %v420, 4294967295
          %v437 = vsel %vm405, %v421, 4294967295
          %v438 = vsel %vm406, %v422, 4294967295
          %v439 = vsel %vm407, %v423, 4294967295
          %v440 = vsel %vm408, %v424, 4294967295
          %v441 = vsel %vm409, %v425, 4294967295
          %v442 = vsel %vm410, %v426, 4294967295
          %v443 = vsel %vm411, %v427, 4294967295
          %v444 = vsel %vm412, %v428, 4294967295
          %v445 = vsel %vm413, %v429, 4294967295
          %v446 = vsel %vm414, %v430, 4294967295
          %v447 = vsel %vm415, %v431, 4294967295
          %v448 = vsel %vm416, %v432, 4294967295
          %v449 = vsel %vm417, %v433, 4294967295
          %v450 = vsel %vm418, %v434, 4294967295
          %v451 = vsel %vm419, %v435, 4294967295
          %v452 = vld [vmem:[#allocation2] sm:$0xff]
          %v453 = vld [vmem:[#allocation2 + $0x8] sm:$0xff]
          %v454 = vld [vmem:[#allocation2 + $0x10] sm:$0xff]
          %v455 = vld [vmem:[#allocation2 + $0x18] sm:$0xff]
          %v456 = vld [vmem:[#allocation2 + $0x20] sm:$0xff]
          %v457 = vld [vmem:[#allocation2 + $0x28] sm:$0xff]
          %v458 = vld [vmem:[#allocation2 + $0x30] sm:$0xff]
          %v459 = vld [vmem:[#allocation2 + $0x38] sm:$0xff]
          %v460 = vld [vmem:[#allocation2 + $0x40] sm:$0xff]
          %v461 = vld [vmem:[#allocation2 + $0x48] sm:$0xff]
          %v462 = vld [vmem:[#allocation2 + $0x50] sm:$0xff]
          %v463 = vld [vmem:[#allocation2 + $0x58] sm:$0xff]
          %v464 = vld [vmem:[#allocation2 + $0x60] sm:$0xff]
          %v465 = vld [vmem:[#allocation2 + $0x68] sm:$0xff]
          %v466 = vld [vmem:[#allocation2 + $0x70] sm:$0xff]
          %v467 = vld [vmem:[#allocation2 + $0x78] sm:$0xff]
          %v468 = vld [vmem:[#allocation2 + $0x80] sm:$0xff]
          %v469 = vld [vmem:[#allocation2 + $0x88] sm:$0xff]
          %v470 = vld [vmem:[#allocation2 + $0x90] sm:$0xff]
          %v471 = vld [vmem:[#allocation2 + $0x98] sm:$0xff]
          %v472 = vld [vmem:[#allocation2 + $0xa0] sm:$0xff]
          %v473 = vld [vmem:[#allocation2 + $0xa8] sm:$0xff]
          %v474 = vld [vmem:[#allocation2 + $0xb0] sm:$0xff]
          %v475 = vld [vmem:[#allocation2 + $0xb8] sm:$0xff]
          %v476 = vld [vmem:[#allocation2 + $0xc0] sm:$0xff]
          %v477 = vld [vmem:[#allocation2 + $0xc8] sm:$0xff]
          %v478 = vld [vmem:[#allocation2 + $0xd0] sm:$0xff]
          %v479 = vld [vmem:[#allocation2 + $0xd8] sm:$0xff]
          %v480 = vld [vmem:[#allocation2 + $0xe0] sm:$0xff]
          %v481 = vld [vmem:[#allocation2 + $0xe8] sm:$0xff]
          %v482 = vld [vmem:[#allocation2 + $0xf0] sm:$0xff]
          %v483 = vld [vmem:[#allocation2 + $0xf8] sm:$0xff]
          %v484 = vld [vmem:[#allocation2 + $0x100] sm:$0xff]
          %v485 = vld [vmem:[#allocation2 + $0x108] sm:$0xff]
          %v486 = vld [vmem:[#allocation2 + $0x110] sm:$0xff]
          %v487 = vld [vmem:[#allocation2 + $0x118] sm:$0xff]
          %v488 = vld [vmem:[#allocation2 + $0x120] sm:$0xff]
          %v489 = vld [vmem:[#allocation2 + $0x128] sm:$0xff]
          %v490 = vld [vmem:[#allocation2 + $0x130] sm:$0xff]
          %v491 = vld [vmem:[#allocation2 + $0x138] sm:$0xff]
          %v492 = vld [vmem:[#allocation2 + $0x140] sm:$0xff]
          %v493 = vld [vmem:[#allocation2 + $0x148] sm:$0xff]
          %v494 = vld [vmem:[#allocation2 + $0x150] sm:$0xff]
          %v495 = vld [vmem:[#allocation2 + $0x158] sm:$0xff]
          %v496 = vld [vmem:[#allocation2 + $0x160] sm:$0xff]
          %v497 = vld [vmem:[#allocation2 + $0x168] sm:$0xff]
          %v498 = vld [vmem:[#allocation2 + $0x170] sm:$0xff]
          %v499 = vld [vmem:[#allocation2 + $0x178] sm:$0xff]
          %v500 = vld [vmem:[#allocation2 + $0x180] sm:$0xff]
          %v501 = vld [vmem:[#allocation2 + $0x188] sm:$0xff]
          %v502 = vld [vmem:[#allocation2 + $0x190] sm:$0xff]
          %v503 = vld [vmem:[#allocation2 + $0x198] sm:$0xff]
          %v504 = vld [vmem:[#allocation2 + $0x1a0] sm:$0xff]
          %v505 = vld [vmem:[#allocation2 + $0x1a8] sm:$0xff]
          %v506 = vld [vmem:[#allocation2 + $0x1b0] sm:$0xff]
          %v507 = vld [vmem:[#allocation2 + $0x1b8] sm:$0xff]
          %v508 = vld [vmem:[#allocation2 + $0x1c0] sm:$0xff]
          %v509 = vld [vmem:[#allocation2 + $0x1c8] sm:$0xff]
          %v510 = vld [vmem:[#allocation2 + $0x1d0] sm:$0xff]
          %v511 = vld [vmem:[#allocation2 + $0x1d8] sm:$0xff]
          %v512 = vld [vmem:[#allocation2 + $0x1e0] sm:$0xff]
          %v513 = vld [vmem:[#allocation2 + $0x1e8] sm:$0xff]
          %v514 = vld [vmem:[#allocation2 + $0x1f0] sm:$0xff]
          %v515 = vld [vmem:[#allocation2 + $0x1f8] sm:$0xff]
          %516 = vset.pattern.permute.xlu0 0
          %517 = vperm.xlu0 %516, %v436
          %v518 = vpop.permute.xlu0 %517
          %519 = vset.pattern.permute.xlu0 0
          %520 = vperm.xlu0 %519, %v437
          %v521 = vpop.permute.xlu0 %520
          %522 = vset.pattern.permute.xlu0 0
          %523 = vperm.xlu0 %522, %v438
          %v524 = vpop.permute.xlu0 %523
          %525 = vset.pattern.permute.xlu0 0
          %526 = vperm.xlu0 %525, %v439
          %v527 = vpop.permute.xlu0 %526
          %528 = vset.pattern.permute.xlu0 0
          %529 = vperm.xlu0 %528, %v440
          %v530 = vpop.permute.xlu0 %529
          %531 = vset.pattern.permute.xlu0 0
          %532 = vperm.xlu0 %531, %v441
          %v533 = vpop.permute.xlu0 %532
          %534 = vset.pattern.permute.xlu0 0
          %535 = vperm.xlu0 %534, %v442
          %v536 = vpop.permute.xlu0 %535
          %537 = vset.pattern.permute.xlu0 0
          %538 = vperm.xlu0 %537, %v443
          %v539 = vpop.permute.xlu0 %538
          %540 = vset.pattern.permute.xlu0 0
          %541 = vperm.xlu0 %540, %v444
          %v542 = vpop.permute.xlu0 %541
          %543 = vset.pattern.permute.xlu0 0
          %544 = vperm.xlu0 %543, %v445
          %v545 = vpop.permute.xlu0 %544
          %546 = vset.pattern.permute.xlu0 0
          %547 = vperm.xlu0 %546, %v446
          %v548 = vpop.permute.xlu0 %547
          %549 = vset.pattern.permute.xlu0 0
          %550 = vperm.xlu0 %549, %v447
          %v551 = vpop.permute.xlu0 %550
          %552 = vset.pattern.permute.xlu0 0
          %553 = vperm.xlu0 %552, %v448
          %v554 = vpop.permute.xlu0 %553
          %555 = vset.pattern.permute.xlu0 0
          %556 = vperm.xlu0 %555, %v449
          %v557 = vpop.permute.xlu0 %556
          %558 = vset.pattern.permute.xlu0 0
          %559 = vperm.xlu0 %558, %v450
          %v560 = vpop.permute.xlu0 %559
          %561 = vset.pattern.permute.xlu0 0
          %562 = vperm.xlu0 %561, %v451
          %v563 = vpop.permute.xlu0 %562
          %vm564 = vcmp.eq.s32.totalorder %v518, %v452
          %vm565 = vcmp.eq.s32.totalorder %v518, %v453
          %vm566 = vcmp.eq.s32.totalorder %v518, %v454
          %vm567 = vcmp.eq.s32.totalorder %v518, %v455
          %vm568 = vcmp.eq.s32.totalorder %v521, %v456
          %vm569 = vcmp.eq.s32.totalorder %v521, %v457
          %vm570 = vcmp.eq.s32.totalorder %v521, %v458
          %vm571 = vcmp.eq.s32.totalorder %v521, %v459
          %vm572 = vcmp.eq.s32.totalorder %v524, %v460
          %vm573 = vcmp.eq.s32.totalorder %v524, %v461
          %vm574 = vcmp.eq.s32.totalorder %v524, %v462
          %vm575 = vcmp.eq.s32.totalorder %v524, %v463
          %vm576 = vcmp.eq.s32.totalorder %v527, %v464
          %vm577 = vcmp.eq.s32.totalorder %v527, %v465
          %vm578 = vcmp.eq.s32.totalorder %v527, %v466
          %vm579 = vcmp.eq.s32.totalorder %v527, %v467
          %vm580 = vcmp.eq.s32.totalorder %v530, %v468
          %vm581 = vcmp.eq.s32.totalorder %v530, %v469
          %vm582 = vcmp.eq.s32.totalorder %v530, %v470
          %vm583 = vcmp.eq.s32.totalorder %v530, %v471
          %vm584 = vcmp.eq.s32.totalorder %v533, %v472
          %vm585 = vcmp.eq.s32.totalorder %v533, %v473
          %vm586 = vcmp.eq.s32.totalorder %v533, %v474
          %vm587 = vcmp.eq.s32.totalorder %v533, %v475
          %vm588 = vcmp.eq.s32.totalorder %v536, %v476
          %vm589 = vcmp.eq.s32.totalorder %v536, %v477
          %vm590 = vcmp.eq.s32.totalorder %v536, %v478
          %vm591 = vcmp.eq.s32.totalorder %v536, %v479
          %vm592 = vcmp.eq.s32.totalorder %v539, %v480
          %vm593 = vcmp.eq.s32.totalorder %v539, %v481
          %vm594 = vcmp.eq.s32.totalorder %v539, %v482
          %vm595 = vcmp.eq.s32.totalorder %v539, %v483
          %vm596 = vcmp.eq.s32.totalorder %v542, %v484
          %vm597 = vcmp.eq.s32.totalorder %v542, %v485
          %vm598 = vcmp.eq.s32.totalorder %v542, %v486
          %vm599 = vcmp.eq.s32.totalorder %v542, %v487
          %vm600 = vcmp.eq.s32.totalorder %v545, %v488
          %vm601 = vcmp.eq.s32.totalorder %v545, %v489
          %vm602 = vcmp.eq.s32.totalorder %v545, %v490
          %vm603 = vcmp.eq.s32.totalorder %v545, %v491
          %vm604 = vcmp.eq.s32.totalorder %v548, %v492
          %vm605 = vcmp.eq.s32.totalorder %v548, %v493
          %vm606 = vcmp.eq.s32.totalorder %v548, %v494
          %vm607 = vcmp.eq.s32.totalorder %v548, %v495
          %vm608 = vcmp.eq.s32.totalorder %v551, %v496
          %vm609 = vcmp.eq.s32.totalorder %v551, %v497
          %vm610 = vcmp.eq.s32.totalorder %v551, %v498
          %vm611 = vcmp.eq.s32.totalorder %v551, %v499
          %vm612 = vcmp.eq.s32.totalorder %v554, %v500
          %vm613 = vcmp.eq.s32.totalorder %v554, %v501
          %vm614 = vcmp.eq.s32.totalorder %v554, %v502
          %vm615 = vcmp.eq.s32.totalorder %v554, %v503
          %vm616 = vcmp.eq.s32.totalorder %v557, %v504
          %vm617 = vcmp.eq.s32.totalorder %v557, %v505
          %vm618 = vcmp.eq.s32.totalorder %v557, %v506
          %vm619 = vcmp.eq.s32.totalorder %v557, %v507
          %vm620 = vcmp.eq.s32.totalorder %v560, %v508
          %vm621 = vcmp.eq.s32.totalorder %v560, %v509
          %vm622 = vcmp.eq.s32.totalorder %v560, %v510
          %vm623 = vcmp.eq.s32.totalorder %v560, %v511
          %vm624 = vcmp.eq.s32.totalorder %v563, %v512
          %vm625 = vcmp.eq.s32.totalorder %v563, %v513
          %vm626 = vcmp.eq.s32.totalorder %v563, %v514
          %vm627 = vcmp.eq.s32.totalorder %v563, %v515
          %v628 = vsel %vm564, 1, 0
          %v629 = vsel %vm565, 1, 0
          %v630 = vsel %vm566, 1, 0
          %v631 = vsel %vm567, 1, 0
          %v632 = vsel %vm568, 1, 0
          %v633 = vsel %vm569, 1, 0
          %v634 = vsel %vm570, 1, 0
          %v635 = vsel %vm571, 1, 0
          %v636 = vsel %vm572, 1, 0
          %v637 = vsel %vm573, 1, 0
          %v638 = vsel %vm574, 1, 0
          %v639 = vsel %vm575, 1, 0
          %v640 = vsel %vm576, 1, 0
          %v641 = vsel %vm577, 1, 0
          %v642 = vsel %vm578, 1, 0
          %v643 = vsel %vm579, 1, 0
          %v644 = vsel %vm580, 1, 0
          %v645 = vsel %vm581, 1, 0
          %v646 = vsel %vm582, 1, 0
          %v647 = vsel %vm583, 1, 0
          %v648 = vsel %vm584, 1, 0
          %v649 = vsel %vm585, 1, 0
          %v650 = vsel %vm586, 1, 0
          %v651 = vsel %vm587, 1, 0
          %v652 = vsel %vm588, 1, 0
          %v653 = vsel %vm589, 1, 0
          %v654 = vsel %vm590, 1, 0
          %v655 = vsel %vm591, 1, 0
          %v656 = vsel %vm592, 1, 0
          %v657 = vsel %vm593, 1, 0
          %v658 = vsel %vm594, 1, 0
          %v659 = vsel %vm595, 1, 0
          %v660 = vsel %vm596, 1, 0
          %v661 = vsel %vm597, 1, 0
          %v662 = vsel %vm598, 1, 0
          %v663 = vsel %vm599, 1, 0
          %v664 = vsel %vm600, 1, 0
          %v665 = vsel %vm601, 1, 0
          %v666 = vsel %vm602, 1, 0
          %v667 = vsel %vm603, 1, 0
          %v668 = vsel %vm604, 1, 0
          %v669 = vsel %vm605, 1, 0
          %v670 = vsel %vm606, 1, 0
          %v671 = vsel %vm607, 1, 0
          %v672 = vsel %vm608, 1, 0
          %v673 = vsel %vm609, 1, 0
          %v674 = vsel %vm610, 1, 0
          %v675 = vsel %vm611, 1, 0
          %v676 = vsel %vm612, 1, 0
          %v677 = vsel %vm613, 1, 0
          %v678 = vsel %vm614, 1, 0
          %v679 = vsel %vm615, 1, 0
          %v680 = vsel %vm616, 1, 0
          %v681 = vsel %vm617, 1, 0
          %v682 = vsel %vm618, 1, 0
          %v683 = vsel %vm619, 1, 0
          %v684 = vsel %vm620, 1, 0
          %v685 = vsel %vm621, 1, 0
          %v686 = vsel %vm622, 1, 0
          %v687 = vsel %vm623, 1, 0
          %v688 = vsel %vm624, 1, 0
          %v689 = vsel %vm625, 1, 0
          %v690 = vsel %vm626, 1, 0
          %v691 = vsel %vm627, 1, 0
          %v692 = vcvt.s32.f32 %v628
          %v693 = vcvt.s32.f32 %v629
          %v694 = vcvt.s32.f32 %v630
          %v695 = vcvt.s32.f32 %v631
          %v696 = vcvt.s32.f32 %v632
          %v697 = vcvt.s32.f32 %v633
          %v698 = vcvt.s32.f32 %v634
          %v699 = vcvt.s32.f32 %v635
          %v700 = vcvt.s32.f32 %v636
          %v701 = vcvt.s32.f32 %v637
          %v702 = vcvt.s32.f32 %v638
          %v703 = vcvt.s32.f32 %v639
          %v704 = vcvt.s32.f32 %v640
          %v705 = vcvt.s32.f32 %v641
          %v706 = vcvt.s32.f32 %v642
          %v707 = vcvt.s32.f32 %v643
          %v708 = vcvt.s32.f32 %v644
          %v709 = vcvt.s32.f32 %v645
          %v710 = vcvt.s32.f32 %v646
          %v711 = vcvt.s32.f32 %v647
          %v712 = vcvt.s32.f32 %v648
          %v713 = vcvt.s32.f32 %v649
          %v714 = vcvt.s32.f32 %v650
          %v715 = vcvt.s32.f32 %v651
          %v716 = vcvt.s32.f32 %v652
          %v717 = vcvt.s32.f32 %v653
          %v718 = vcvt.s32.f32 %v654
          %v719 = vcvt.s32.f32 %v655
          %v720 = vcvt.s32.f32 %v656
          %v721 = vcvt.s32.f32 %v657
          %v722 = vcvt.s32.f32 %v658
          %v723 = vcvt.s32.f32 %v659
          %v724 = vcvt.s32.f32 %v660
          %v725 = vcvt.s32.f32 %v661
          %v726 = vcvt.s32.f32 %v662
          %v727 = vcvt.s32.f32 %v663
          %v728 = vcvt.s32.f32 %v664
          %v729 = vcvt.s32.f32 %v665
          %v730 = vcvt.s32.f32 %v666
          %v731 = vcvt.s32.f32 %v667
          %v732 = vcvt.s32.f32 %v668
          %v733 = vcvt.s32.f32 %v669
          %v734 = vcvt.s32.f32 %v670
          %v735 = vcvt.s32.f32 %v671
          %v736 = vcvt.s32.f32 %v672
          %v737 = vcvt.s32.f32 %v673
          %v738 = vcvt.s32.f32 %v674
          %v739 = vcvt.s32.f32 %v675
          %v740 = vcvt.s32.f32 %v676
          %v741 = vcvt.s32.f32 %v677
          %v742 = vcvt.s32.f32 %v678
          %v743 = vcvt.s32.f32 %v679
          %v744 = vcvt.s32.f32 %v680
          %v745 = vcvt.s32.f32 %v681
          %v746 = vcvt.s32.f32 %v682
          %v747 = vcvt.s32.f32 %v683
          %v748 = vcvt.s32.f32 %v684
          %v749 = vcvt.s32.f32 %v685
          %v750 = vcvt.s32.f32 %v686
          %v751 = vcvt.s32.f32 %v687
          %v752 = vcvt.s32.f32 %v688
          %v753 = vcvt.s32.f32 %v689
          %v754 = vcvt.s32.f32 %v690
          %v755 = vcvt.s32.f32 %v691
          %v756 = vld [vmem:[%s262] sm:$0xff]
          %v757 = vld [vmem:[%s262 + $0x8] sm:$0xff]
          %v758 = vld [vmem:[%s262 + $0x10] sm:$0xff]
          %v759 = vld [vmem:[%s262 + $0x18] sm:$0xff]
          %v760 = vld [vmem:[%s262 + $0x20] sm:$0xff]
          %v761 = vld [vmem:[%s262 + $0x28] sm:$0xff]
          %v762 = vld [vmem:[%s262 + $0x30] sm:$0xff]
          %v763 = vld [vmem:[%s262 + $0x38] sm:$0xff]
          %v764 = vld [vmem:[%s262 + $0x40] sm:$0xff]
          %v765 = vld [vmem:[%s262 + $0x48] sm:$0xff]
          %v766 = vld [vmem:[%s262 + $0x50] sm:$0xff]
          %v767 = vld [vmem:[%s262 + $0x58] sm:$0xff]
          %v768 = vld [vmem:[%s262 + $0x60] sm:$0xff]
          %v769 = vld [vmem:[%s262 + $0x68] sm:$0xff]
          %v770 = vld [vmem:[%s262 + $0x70] sm:$0xff]
          %v771 = vld [vmem:[%s262 + $0x78] sm:$0xff]
          %772 = vxpose.xlu0.b32.start [1/16] %v756, 128
          %773 = vxpose.xlu0.b32.cont [2/16] %v757, 128
          %774 = vxpose.xlu0.b32.cont [3/16] %v758, 128
          %775 = vxpose.xlu0.b32.cont [4/16] %v759, 128
          %776 = vxpose.xlu0.b32.cont [5/16] %v760, 128
          %777 = vxpose.xlu0.b32.cont [6/16] %v761, 128
          %778 = vxpose.xlu0.b32.cont [7/16] %v762, 128
          %779 = vxpose.xlu0.b32.cont [8/16] %v763, 128
          %780 = vxpose.xlu0.b32.cont [9/16] %v764, 128
          %781 = vxpose.xlu0.b32.cont [10/16] %v765, 128
          %782 = vxpose.xlu0.b32.cont [11/16] %v766, 128
          %783 = vxpose.xlu0.b32.cont [12/16] %v767, 128
          %784 = vxpose.xlu0.b32.cont [13/16] %v768, 128
          %785 = vxpose.xlu0.b32.cont [14/16] %v769, 128
          %786 = vxpose.xlu0.b32.cont [15/16] %v770, 128
          %787 = vxpose.xlu0.b32.end [16/16] %v771, 128
          %v788 = vpop.trf.xlu0
          %v789 = vpop.trf.xlu0
          %v790 = vpop.trf.xlu0
          %v791 = vpop.trf.xlu0
          %v792 = vpop.trf.xlu0
          %v793 = vpop.trf.xlu0
          %v794 = vpop.trf.xlu0
          %v795 = vpop.trf.xlu0
          %v796 = vpop.trf.xlu0
          %v797 = vpop.trf.xlu0
          %v798 = vpop.trf.xlu0
          %v799 = vpop.trf.xlu0
          %v800 = vpop.trf.xlu0
          %v801 = vpop.trf.xlu0
          %v802 = vpop.trf.xlu0
          %v803 = vpop.trf.xlu0
          %v804 = vand.u32 %v753, 4294901760
          %805 = vmatprep.subr.mxu0 %v804
          %v806 = vand.u32 %v752, 4294901760
          %807 = vmatpush1.msra.mxu0 %v806
          %v808 = vand.u32 %v749, 4294901760
          %809 = vmatprep.subr.mxu0 %v808
          %v810 = vand.u32 %v748, 4294901760
          %811 = vmatpush1.msra.mxu0 %v810
          %v812 = vand.u32 %v745, 4294901760
          %813 = vmatprep.subr.mxu0 %v812
          %v814 = vand.u32 %v744, 4294901760
          %815 = vmatpush1.msra.mxu0 %v814
          %v816 = vand.u32 %v741, 4294901760
          %817 = vmatprep.subr.mxu0 %v816
          %v818 = vand.u32 %v740, 4294901760
          %819 = vmatpush1.msra.mxu0 %v818
          %v820 = vand.u32 %v737, 4294901760
          %821 = vmatprep.subr.mxu0 %v820
          %v822 = vand.u32 %v736, 4294901760
          %823 = vmatpush1.msra.mxu0 %v822
          %v824 = vand.u32 %v733, 4294901760
          %825 = vmatprep.subr.mxu0 %v824
          %v826 = vand.u32 %v732, 4294901760
          %827 = vmatpush1.msra.mxu0 %v826
          %v828 = vand.u32 %v729, 4294901760
          %829 = vmatprep.subr.mxu0 %v828
          %v830 = vand.u32 %v728, 4294901760
          %831 = vmatpush1.msra.mxu0 %v830
          %v832 = vand.u32 %v725, 4294901760
          %833 = vmatprep.subr.mxu0 %v832
          %v834 = vand.u32 %v724, 4294901760
          %835 = vmatpush1.msra.mxu0 %v834
          %v836 = vand.u32 %v721, 4294901760
          %837 = vmatprep.subr.mxu0 %v836
          %v838 = vand.u32 %v720, 4294901760
          %839 = vmatpush1.msra.mxu0 %v838
          %v840 = vand.u32 %v717, 4294901760
          %841 = vmatprep.subr.mxu0 %v840
          %v842 = vand.u32 %v716, 4294901760
          %843 = vmatpush1.msra.mxu0 %v842
          %v844 = vand.u32 %v713, 4294901760
          %845 = vmatprep.subr.mxu0 %v844
          %v846 = vand.u32 %v712, 4294901760
          %847 = vmatpush1.msra.mxu0 %v846
          %v848 = vand.u32 %v709, 4294901760
          %849 = vmatprep.subr.mxu0 %v848
          %v850 = vand.u32 %v708, 4294901760
          %851 = vmatpush1.msra.mxu0 %v850
          %v852 = vand.u32 %v705, 4294901760
          %853 = vmatprep.subr.mxu0 %v852
          %v854 = vand.u32 %v704, 4294901760
          %855 = vmatpush1.msra.mxu0 %v854
          %v856 = vand.u32 %v701, 4294901760
          %857 = vmatprep.subr.mxu0 %v856
          %v858 = vand.u32 %v700, 4294901760
          %859 = vmatpush1.msra.mxu0 %v858
          %v860 = vand.u32 %v697, 4294901760
          %861 = vmatprep.subr.mxu0 %v860
          %v862 = vand.u32 %v696, 4294901760
          %863 = vmatpush1.msra.mxu0 %v862
          %v864 = vand.u32 %v693, 4294901760
          %865 = vmatprep.subr.mxu0 %v864
          %v866 = vand.u32 %v692, 4294901760
          %867 = vmatpush1.msra.mxu0 %v866
          %868 = vmatprep.subr.mxu0 0.0
          %869 = vmatpush2.msra.mxu0 0.0
          %870 = vmatprep.subr.mxu0 0.0
          %871 = vmatpush2.msra.mxu0 0.0
          %872 = vmatprep.subr.mxu0 0.0
          %873 = vmatpush2.msra.mxu0 0.0
          %874 = vmatprep.subr.mxu0 0.0
          %875 = vmatpush2.msra.mxu0 0.0
          %876 = vmatprep.subr.mxu0 0.0
          %877 = vmatpush2.msra.mxu0 0.0
          %878 = vmatprep.subr.mxu0 0.0
          %879 = vmatpush2.msra.mxu0 0.0
          %880 = vmatprep.subr.mxu0 0.0
          %881 = vmatpush2.msra.mxu0 0.0
          %882 = vmatprep.subr.mxu0 0.0
          %883 = vmatpush2.msra.mxu0 0.0
          %884 = vmatprep.subr.mxu0 0.0
          %885 = vmatpush2.msra.mxu0 0.0
          %886 = vmatprep.subr.mxu0 0.0
          %887 = vmatpush2.msra.mxu0 0.0
          %888 = vmatprep.subr.mxu0 0.0
          %889 = vmatpush2.msra.mxu0 0.0
          %890 = vmatprep.subr.mxu0 0.0
          %891 = vmatpush2.msra.mxu0 0.0
          %892 = vmatprep.subr.mxu0 0.0
          %893 = vmatpush2.msra.mxu0 0.0
          %894 = vmatprep.subr.mxu0 0.0
          %895 = vmatpush2.msra.mxu0 0.0
          %896 = vmatprep.subr.mxu0 0.0
          %897 = vmatpush2.msra.mxu0 0.0
          %898 = vmatprep.subr.mxu0 0.0
          %899 = vmatpush2.msra.mxu0 0.0
          %900 = vmatprep.mubr.f32.mxu0 0.0
          %v901 = vand.u32 %v788, 4294901760
          %v902 = vsub.f32 %v788, %v901
          %v903 = vand.u32 %v902, 4294901760
          %v904 = vsub.f32 %v902, %v903
          %v905 = vand.u32 %v904, 4294901760
          %906 = vmatmul.mubr.f32.gmra.mxu0 %v905
          %v907 = vpop.f32.mrf.mxu0
          %v908 = vadd.f32 0.0, %v907
          %v909 = vpop.f32.mrf.mxu0
          %v910 = vadd.f32 0.0, %v909
          %911 = vmatprep.mubr.f32.mxu0 0.0
          %v912 = vand.u32 %v789, 4294901760
          %v913 = vsub.f32 %v789, %v912
          %v914 = vand.u32 %v913, 4294901760
          %v915 = vsub.f32 %v913, %v914
          %v916 = vand.u32 %v915, 4294901760
          %917 = vmatmul.mubr.f32.gmra.mxu0 %v916
          %v918 = vpop.f32.mrf.mxu0
          %v919 = vadd.f32 0.0, %v918
          %v920 = vpop.f32.mrf.mxu0
          %v921 = vadd.f32 0.0, %v920
          %922 = vmatprep.mubr.f32.mxu0 0.0
          %v923 = vand.u32 %v790, 4294901760
          %v924 = vsub.f32 %v790, %v923
          %v925 = vand.u32 %v924, 4294901760
          %v926 = vsub.f32 %v924, %v925
          %v927 = vand.u32 %v926, 4294901760
          %928 = vmatmul.mubr.f32.gmra.mxu0 %v927
          %v929 = vpop.f32.mrf.mxu0
          %v930 = vadd.f32 0.0, %v929
          %v931 = vpop.f32.mrf.mxu0
          %v932 = vadd.f32 0.0, %v931
          %933 = vmatprep.mubr.f32.mxu0 0.0
          %v934 = vand.u32 %v791, 4294901760
          %v935 = vsub.f32 %v791, %v934
          %v936 = vand.u32 %v935, 4294901760
          %v937 = vsub.f32 %v935, %v936
          %v938 = vand.u32 %v937, 4294901760
          %939 = vmatmul.mubr.f32.gmra.mxu0 %v938
          %v940 = vpop.f32.mrf.mxu0
          %v941 = vadd.f32 0.0, %v940
          %v942 = vpop.f32.mrf.mxu0
          %v943 = vadd.f32 0.0, %v942
          %944 = vmatprep.mubr.f32.mxu0 0.0
          %v945 = vand.u32 %v792, 4294901760
          %v946 = vsub.f32 %v792, %v945
          %v947 = vand.u32 %v946, 4294901760
          %v948 = vsub.f32 %v946, %v947
          %v949 = vand.u32 %v948, 4294901760
          %950 = vmatmul.mubr.f32.gmra.mxu0 %v949
          %v951 = vpop.f32.mrf.mxu0
          %v952 = vadd.f32 0.0, %v951
          %v953 = vpop.f32.mrf.mxu0
          %v954 = vadd.f32 0.0, %v953
          %955 = vmatprep.mubr.f32.mxu0 0.0
          %v956 = vand.u32 %v793, 4294901760
          %v957 = vsub.f32 %v793, %v956
          %v958 = vand.u32 %v957, 4294901760
          %v959 = vsub.f32 %v957, %v958
          %v960 = vand.u32 %v959, 4294901760
          %961 = vmatmul.mubr.f32.gmra.mxu0 %v960
          %v962 = vpop.f32.mrf.mxu0
          %v963 = vadd.f32 0.0, %v962
          %v964 = vpop.f32.mrf.mxu0
          %v965 = vadd.f32 0.0, %v964
          %966 = vmatprep.mubr.f32.mxu0 0.0
          %v967 = vand.u32 %v794, 4294901760
          %v968 = vsub.f32 %v794, %v967
          %v969 = vand.u32 %v968, 4294901760
          %v970 = vsub.f32 %v968, %v969
          %v971 = vand.u32 %v970, 4294901760
          %972 = vmatmul.mubr.f32.gmra.mxu0 %v971
          %v973 = vpop.f32.mrf.mxu0
          %v974 = vadd.f32 0.0, %v973
          %v975 = vpop.f32.mrf.mxu0
          %v976 = vadd.f32 0.0, %v975
          %977 = vmatprep.mubr.f32.mxu0 0.0
          %v978 = vand.u32 %v795, 4294901760
          %v979 = vsub.f32 %v795, %v978
          %v980 = vand.u32 %v979, 4294901760
          %v981 = vsub.f32 %v979, %v980
          %v982 = vand.u32 %v981, 4294901760
          %983 = vmatmul.mubr.f32.gmra.mxu0 %v982
          %v984 = vpop.f32.mrf.mxu0
          %v985 = vadd.f32 0.0, %v984
          %v986 = vpop.f32.mrf.mxu0
          %v987 = vadd.f32 0.0, %v986
          %988 = vdwg.mxu0
          %v989 = vand.u32 %v753, 4294901760
          %v990 = vsub.f32 %v753, %v989
          %v991 = vand.u32 %v990, 4294901760
          %v992 = vsub.f32 %v990, %v991
          %v993 = vand.u32 %v992, 4294901760
          %994 = vmatprep.subr.mxu0 %v993
          %v995 = vand.u32 %v752, 4294901760
          %v996 = vsub.f32 %v752, %v995
          %v997 = vand.u32 %v996, 4294901760
          %v998 = vsub.f32 %v996, %v997
          %v999 = vand.u32 %v998, 4294901760
          %1000 = vmatpush1.msra.mxu0 %v999
          %v1001 = vand.u32 %v749, 4294901760
          %v1002 = vsub.f32 %v749, %v1001
          %v1003 = vand.u32 %v1002, 4294901760
          %v1004 = vsub.f32 %v1002, %v1003
          %v1005 = vand.u32 %v1004, 4294901760
          %1006 = vmatprep.subr.mxu0 %v1005
          %v1007 = vand.u32 %v748, 4294901760
          %v1008 = vsub.f32 %v748, %v1007
          %v1009 = vand.u32 %v1008, 4294901760
          %v1010 = vsub.f32 %v1008, %v1009
          %v1011 = vand.u32 %v1010, 4294901760
          %1012 = vmatpush1.msra.mxu0 %v1011
          %v1013 = vand.u32 %v745, 4294901760
          %v1014 = vsub.f32 %v745, %v1013
          %v1015 = vand.u32 %v1014, 4294901760
          %v1016 = vsub.f32 %v1014, %v1015
          %v1017 = vand.u32 %v1016, 4294901760
          %1018 = vmatprep.subr.mxu0 %v1017
          %v1019 = vand.u32 %v744, 4294901760
          %v1020 = vsub.f32 %v744, %v1019
          %v1021 = vand.u32 %v1020, 4294901760
          %v1022 = vsub.f32 %v1020, %v1021
          %v1023 = vand.u32 %v1022, 4294901760
          %1024 = vmatpush1.msra.mxu0 %v1023
          %v1025 = vand.u32 %v741, 4294901760
          %v1026 = vsub.f32 %v741, %v1025
          %v1027 = vand.u32 %v1026, 4294901760
          %v1028 = vsub.f32 %v1026, %v1027
          %v1029 = vand.u32 %v1028, 4294901760
          %1030 = vmatprep.subr.mxu0 %v1029
          %v1031 = vand.u32 %v740, 4294901760
          %v1032 = vsub.f32 %v740, %v1031
          %v1033 = vand.u32 %v1032, 4294901760
          %v1034 = vsub.f32 %v1032, %v1033
          %v1035 = vand.u32 %v1034, 4294901760
          %1036 = vmatpush1.msra.mxu0 %v1035
          %v1037 = vand.u32 %v737, 4294901760
          %v1038 = vsub.f32 %v737, %v1037
          %v1039 = vand.u32 %v1038, 4294901760
          %v1040 = vsub.f32 %v1038, %v1039
          %v1041 = vand.u32 %v1040, 4294901760
          %1042 = vmatprep.subr.mxu0 %v1041
          %v1043 = vand.u32 %v736, 4294901760
          %v1044 = vsub.f32 %v736, %v1043
          %v1045 = vand.u32 %v1044, 4294901760
          %v1046 = vsub.f32 %v1044, %v1045
          %v1047 = vand.u32 %v1046, 4294901760
          %1048 = vmatpush1.msra.mxu0 %v1047
          %v1049 = vand.u32 %v733, 4294901760
          %v1050 = vsub.f32 %v733, %v1049
          %v1051 = vand.u32 %v1050, 4294901760
          %v1052 = vsub.f32 %v1050, %v1051
          %v1053 = vand.u32 %v1052, 4294901760
          %1054 = vmatprep.subr.mxu0 %v1053
          %v1055 = vand.u32 %v732, 4294901760
          %v1056 = vsub.f32 %v732, %v1055
          %v1057 = vand.u32 %v1056, 4294901760
          %v1058 = vsub.f32 %v1056, %v1057
          %v1059 = vand.u32 %v1058, 4294901760
          %1060 = vmatpush1.msra.mxu0 %v1059
          %v1061 = vand.u32 %v729, 4294901760
          %v1062 = vsub.f32 %v729, %v1061
          %v1063 = vand.u32 %v1062, 4294901760
          %v1064 = vsub.f32 %v1062, %v1063
          %v1065 = vand.u32 %v1064, 4294901760
          %1066 = vmatprep.subr.mxu0 %v1065
          %v1067 = vand.u32 %v728, 4294901760
          %v1068 = vsub.f32 %v728, %v1067
          %v1069 = vand.u32 %v1068, 4294901760
          %v1070 = vsub.f32 %v1068, %v1069
          %v1071 = vand.u32 %v1070, 4294901760
          %1072 = vmatpush1.msra.mxu0 %v1071
          %v1073 = vand.u32 %v725, 4294901760
          %v1074 = vsub.f32 %v725, %v1073
          %v1075 = vand.u32 %v1074, 4294901760
          %v1076 = vsub.f32 %v1074, %v1075
          %v1077 = vand.u32 %v1076, 4294901760
          %1078 = vmatprep.subr.mxu0 %v1077
          %v1079 = vand.u32 %v724, 4294901760
          %v1080 = vsub.f32 %v724, %v1079
          %v1081 = vand.u32 %v1080, 4294901760
          %v1082 = vsub.f32 %v1080, %v1081
          %v1083 = vand.u32 %v1082, 4294901760
          %1084 = vmatpush1.msra.mxu0 %v1083
          %v1085 = vand.u32 %v721, 4294901760
          %v1086 = vsub.f32 %v721, %v1085
          %v1087 = vand.u32 %v1086, 4294901760
          %v1088 = vsub.f32 %v1086, %v1087
          %v1089 = vand.u32 %v1088, 4294901760
          %1090 = vmatprep.subr.mxu0 %v1089
          %v1091 = vand.u32 %v720, 4294901760
          %v1092 = vsub.f32 %v720, %v1091
          %v1093 = vand.u32 %v1092, 4294901760
          %v1094 = vsub.f32 %v1092, %v1093
          %v1095 = vand.u32 %v1094, 4294901760
          %1096 = vmatpush1.msra.mxu0 %v1095
          %v1097 = vand.u32 %v717, 4294901760
          %v1098 = vsub.f32 %v717, %v1097
          %v1099 = vand.u32 %v1098, 4294901760
          %v1100 = vsub.f32 %v1098, %v1099
          %v1101 = vand.u32 %v1100, 4294901760
          %1102 = vmatprep.subr.mxu0 %v1101
          %v1103 = vand.u32 %v716, 4294901760
          %v1104 = vsub.f32 %v716, %v1103
          %v1105 = vand.u32 %v1104, 4294901760
          %v1106 = vsub.f32 %v1104, %v1105
          %v1107 = vand.u32 %v1106, 4294901760
          %1108 = vmatpush1.msra.mxu0 %v1107
          %v1109 = vand.u32 %v713, 4294901760
          %v1110 = vsub.f32 %v713, %v1109
          %v1111 = vand.u32 %v1110, 4294901760
          %v1112 = vsub.f32 %v1110, %v1111
          %v1113 = vand.u32 %v1112, 4294901760
          %1114 = vmatprep.subr.mxu0 %v1113
          %v1115 = vand.u32 %v712, 4294901760
          %v1116 = vsub.f32 %v712, %v1115
          %v1117 = vand.u32 %v1116, 4294901760
          %v1118 = vsub.f32 %v1116, %v1117
          %v1119 = vand.u32 %v1118, 4294901760
          %1120 = vmatpush1.msra.mxu0 %v1119
          %v1121 = vand.u32 %v709, 4294901760
          %v1122 = vsub.f32 %v709, %v1121
          %v1123 = vand.u32 %v1122, 4294901760
          %v1124 = vsub.f32 %v1122, %v1123
          %v1125 = vand.u32 %v1124, 4294901760
          %1126 = vmatprep.subr.mxu0 %v1125
          %v1127 = vand.u32 %v708, 4294901760
          %v1128 = vsub.f32 %v708, %v1127
          %v1129 = vand.u32 %v1128, 4294901760
          %v1130 = vsub.f32 %v1128, %v1129
          %v1131 = vand.u32 %v1130, 4294901760
          %1132 = vmatpush1.msra.mxu0 %v1131
          %v1133 = vand.u32 %v705, 4294901760
          %v1134 = vsub.f32 %v705, %v1133
          %v1135 = vand.u32 %v1134, 4294901760
          %v1136 = vsub.f32 %v1134, %v1135
          %v1137 = vand.u32 %v1136, 4294901760
          %1138 = vmatprep.subr.mxu0 %v1137
          %v1139 = vand.u32 %v704, 4294901760
          %v1140 = vsub.f32 %v704, %v1139
          %v1141 = vand.u32 %v1140, 4294901760
          %v1142 = vsub.f32 %v1140, %v1141
          %v1143 = vand.u32 %v1142, 4294901760
          %1144 = vmatpush1.msra.mxu0 %v1143
          %v1145 = vand.u32 %v701, 4294901760
          %v1146 = vsub.f32 %v701, %v1145
          %v1147 = vand.u32 %v1146, 4294901760
          %v1148 = vsub.f32 %v1146, %v1147
          %v1149 = vand.u32 %v1148, 4294901760
          %1150 = vmatprep.subr.mxu0 %v1149
          %v1151 = vand.u32 %v700, 4294901760
          %v1152 = vsub.f32 %v700, %v1151
          %v1153 = vand.u32 %v1152, 4294901760
          %v1154 = vsub.f32 %v1152, %v1153
          %v1155 = vand.u32 %v1154, 4294901760
          %1156 = vmatpush1.msra.mxu0 %v1155
          %v1157 = vand.u32 %v697, 4294901760
          %v1158 = vsub.f32 %v697, %v1157
          %v1159 = vand.u32 %v1158, 4294901760
          %v1160 = vsub.f32 %v1158, %v1159
          %v1161 = vand.u32 %v1160, 4294901760
          %1162 = vmatprep.subr.mxu0 %v1161
          %v1163 = vand.u32 %v696, 4294901760
          %v1164 = vsub.f32 %v696, %v1163
          %v1165 = vand.u32 %v1164, 4294901760
          %v1166 = vsub.f32 %v1164, %v1165
          %v1167 = vand.u32 %v1166, 4294901760
          %1168 = vmatpush1.msra.mxu0 %v1167
          %v1169 = vand.u32 %v693, 4294901760
          %v1170 = vsub.f32 %v693, %v1169
          %v1171 = vand.u32 %v1170, 4294901760
          %v1172 = vsub.f32 %v1170, %v1171
          %v1173 = vand.u32 %v1172, 4294901760
          %1174 = vmatprep.subr.mxu0 %v1173
          %v1175 = vand.u32 %v692, 4294901760
          %v1176 = vsub.f32 %v692, %v1175
          %v1177 = vand.u32 %v1176, 4294901760
          %v1178 = vsub.f32 %v1176, %v1177
          %v1179 = vand.u32 %v1178, 4294901760
          %1180 = vmatpush1.msra.mxu0 %v1179
          %1181 = vmatprep.subr.mxu0 0.0
          %1182 = vmatpush2.msra.mxu0 0.0
          %1183 = vmatprep.subr.mxu0 0.0
          %1184 = vmatpush2.msra.mxu0 0.0
          %1185 = vmatprep.subr.mxu0 0.0
          %1186 = vmatpush2.msra.mxu0 0.0
          %1187 = vmatprep.subr.mxu0 0.0
          %1188 = vmatpush2.msra.mxu0 0.0
          %1189 = vmatprep.subr.mxu0 0.0
          %1190 = vmatpush2.msra.mxu0 0.0
          %1191 = vmatprep.subr.mxu0 0.0
          %1192 = vmatpush2.msra.mxu0 0.0
          %1193 = vmatprep.subr.mxu0 0.0
          %1194 = vmatpush2.msra.mxu0 0.0
          %1195 = vmatprep.subr.mxu0 0.0
          %1196 = vmatpush2.msra.mxu0 0.0
          %1197 = vmatprep.subr.mxu0 0.0
          %1198 = vmatpush2.msra.mxu0 0.0
          %1199 = vmatprep.subr.mxu0 0.0
          %1200 = vmatpush2.msra.mxu0 0.0
          %1201 = vmatprep.subr.mxu0 0.0
          %1202 = vmatpush2.msra.mxu0 0.0
          %1203 = vmatprep.subr.mxu0 0.0
          %1204 = vmatpush2.msra.mxu0 0.0
          %1205 = vmatprep.subr.mxu0 0.0
          %1206 = vmatpush2.msra.mxu0 0.0
          %1207 = vmatprep.subr.mxu0 0.0
          %1208 = vmatpush2.msra.mxu0 0.0
          %1209 = vmatprep.subr.mxu0 0.0
          %1210 = vmatpush2.msra.mxu0 0.0
          %1211 = vmatprep.subr.mxu0 0.0
          %1212 = vmatpush2.msra.mxu0 0.0
          %1213 = vmatprep.mubr.f32.mxu0 0.0
          %v1214 = vand.u32 %v788, 4294901760
          %1215 = vmatmul.mubr.f32.gmra.mxu0 %v1214
          %v1216 = vpop.f32.mrf.mxu0
          %v1217 = vadd.f32 %v908, %v1216
          %v1218 = vpop.f32.mrf.mxu0
          %v1219 = vadd.f32 %v910, %v1218
          %1220 = vmatprep.mubr.f32.mxu0 0.0
          %v1221 = vand.u32 %v789, 4294901760
          %1222 = vmatmul.mubr.f32.gmra.mxu0 %v1221
          %v1223 = vpop.f32.mrf.mxu0
          %v1224 = vadd.f32 %v919, %v1223
          %v1225 = vpop.f32.mrf.mxu0
          %v1226 = vadd.f32 %v921, %v1225
          %1227 = vmatprep.mubr.f32.mxu0 0.0
          %v1228 = vand.u32 %v790, 4294901760
          %1229 = vmatmul.mubr.f32.gmra.mxu0 %v1228
          %v1230 = vpop.f32.mrf.mxu0
          %v1231 = vadd.f32 %v930, %v1230
          %v1232 = vpop.f32.mrf.mxu0
          %v1233 = vadd.f32 %v932, %v1232
          %1234 = vmatprep.mubr.f32.mxu0 0.0
          %v1235 = vand.u32 %v791, 4294901760
          %1236 = vmatmul.mubr.f32.gmra.mxu0 %v1235
          %v1237 = vpop.f32.mrf.mxu0
          %v1238 = vadd.f32 %v941, %v1237
          %v1239 = vpop.f32.mrf.mxu0
          %v1240 = vadd.f32 %v943, %v1239
          %1241 = vmatprep.mubr.f32.mxu0 0.0
          %v1242 = vand.u32 %v792, 4294901760
          %1243 = vmatmul.mubr.f32.gmra.mxu0 %v1242
          %v1244 = vpop.f32.mrf.mxu0
          %v1245 = vadd.f32 %v952, %v1244
          %v1246 = vpop.f32.mrf.mxu0
          %v1247 = vadd.f32 %v954, %v1246
          %1248 = vmatprep.mubr.f32.mxu0 0.0
          %v1249 = vand.u32 %v793, 4294901760
          %1250 = vmatmul.mubr.f32.gmra.mxu0 %v1249
          %v1251 = vpop.f32.mrf.mxu0
          %v1252 = vadd.f32 %v963, %v1251
          %v1253 = vpop.f32.mrf.mxu0
          %v1254 = vadd.f32 %v965, %v1253
          %1255 = vmatprep.mubr.f32.mxu0 0.0
          %v1256 = vand.u32 %v794, 4294901760
          %1257 = vmatmul.mubr.f32.gmra.mxu0 %v1256
          %v1258 = vpop.f32.mrf.mxu0
          %v1259 = vadd.f32 %v974, %v1258
          %v1260 = vpop.f32.mrf.mxu0
          %v1261 = vadd.f32 %v976, %v1260
          %1262 = vmatprep.mubr.f32.mxu0 0.0
          %v1263 = vand.u32 %v795, 4294901760
          %1264 = vmatmul.mubr.f32.gmra.mxu0 %v1263
          %v1265 = vpop.f32.mrf.mxu0
          %v1266 = vadd.f32 %v985, %v1265
          %v1267 = vpop.f32.mrf.mxu0
          %v1268 = vadd.f32 %v987, %v1267
          %1269 = vdwg.mxu0
          %v1270 = vand.u32 %v753, 4294901760
          %v1271 = vsub.f32 %v753, %v1270
          %1272 = vmatprep.subr.mxu0 %v1271
          %v1273 = vand.u32 %v752, 4294901760
          %v1274 = vsub.f32 %v752, %v1273
          %1275 = vmatpush1.msra.mxu0 %v1274
          %v1276 = vand.u32 %v749, 4294901760
          %v1277 = vsub.f32 %v749, %v1276
          %1278 = vmatprep.subr.mxu0 %v1277
          %v1279 = vand.u32 %v748, 4294901760
          %v1280 = vsub.f32 %v748, %v1279
          %1281 = vmatpush1.msra.mxu0 %v1280
          %v1282 = vand.u32 %v745, 4294901760
          %v1283 = vsub.f32 %v745, %v1282
          %1284 = vmatprep.subr.mxu0 %v1283
          %v1285 = vand.u32 %v744, 4294901760
          %v1286 = vsub.f32 %v744, %v1285
          %1287 = vmatpush1.msra.mxu0 %v1286
          %v1288 = vand.u32 %v741, 4294901760
          %v1289 = vsub.f32 %v741, %v1288
          %1290 = vmatprep.subr.mxu0 %v1289
          %v1291 = vand.u32 %v740, 4294901760
          %v1292 = vsub.f32 %v740, %v1291
          %1293 = vmatpush1.msra.mxu0 %v1292
          %v1294 = vand.u32 %v737, 4294901760
          %v1295 = vsub.f32 %v737, %v1294
          %1296 = vmatprep.subr.mxu0 %v1295
          %v1297 = vand.u32 %v736, 4294901760
          %v1298 = vsub.f32 %v736, %v1297
          %1299 = vmatpush1.msra.mxu0 %v1298
          %v1300 = vand.u32 %v733, 4294901760
          %v1301 = vsub.f32 %v733, %v1300
          %1302 = vmatprep.subr.mxu0 %v1301
          %v1303 = vand.u32 %v732, 4294901760
          %v1304 = vsub.f32 %v732, %v1303
          %1305 = vmatpush1.msra.mxu0 %v1304
          %v1306 = vand.u32 %v729, 4294901760
          %v1307 = vsub.f32 %v729, %v1306
          %1308 = vmatprep.subr.mxu0 %v1307
          %v1309 = vand.u32 %v728, 4294901760
          %v1310 = vsub.f32 %v728, %v1309
          %1311 = vmatpush1.msra.mxu0 %v1310
          %v1312 = vand.u32 %v725, 4294901760
          %v1313 = vsub.f32 %v725, %v1312
          %1314 = vmatprep.subr.mxu0 %v1313
          %v1315 = vand.u32 %v724, 4294901760
          %v1316 = vsub.f32 %v724, %v1315
          %1317 = vmatpush1.msra.mxu0 %v1316
          %v1318 = vand.u32 %v721, 4294901760
          %v1319 = vsub.f32 %v721, %v1318
          %1320 = vmatprep.subr.mxu0 %v1319
          %v1321 = vand.u32 %v720, 4294901760
          %v1322 = vsub.f32 %v720, %v1321
          %1323 = vmatpush1.msra.mxu0 %v1322
          %v1324 = vand.u32 %v717, 4294901760
          %v1325 = vsub.f32 %v717, %v1324
          %1326 = vmatprep.subr.mxu0 %v1325
          %v1327 = vand.u32 %v716, 4294901760
          %v1328 = vsub.f32 %v716, %v1327
          %1329 = vmatpush1.msra.mxu0 %v1328
          %v1330 = vand.u32 %v713, 4294901760
          %v1331 = vsub.f32 %v713, %v1330
          %1332 = vmatprep.subr.mxu0 %v1331
          %v1333 = vand.u32 %v712, 4294901760
          %v1334 = vsub.f32 %v712, %v1333
          %1335 = vmatpush1.msra.mxu0 %v1334
          %v1336 = vand.u32 %v709, 4294901760
          %v1337 = vsub.f32 %v709, %v1336
          %1338 = vmatprep.subr.mxu0 %v1337
          %v1339 = vand.u32 %v708, 4294901760
          %v1340 = vsub.f32 %v708, %v1339
          %1341 = vmatpush1.msra.mxu0 %v1340
          %v1342 = vand.u32 %v705, 4294901760
          %v1343 = vsub.f32 %v705, %v1342
          %1344 = vmatprep.subr.mxu0 %v1343
          %v1345 = vand.u32 %v704, 4294901760
          %v1346 = vsub.f32 %v704, %v1345
          %1347 = vmatpush1.msra.mxu0 %v1346
          %v1348 = vand.u32 %v701, 4294901760
          %v1349 = vsub.f32 %v701, %v1348
          %1350 = vmatprep.subr.mxu0 %v1349
          %v1351 = vand.u32 %v700, 4294901760
          %v1352 = vsub.f32 %v700, %v1351
          %1353 = vmatpush1.msra.mxu0 %v1352
          %v1354 = vand.u32 %v697, 4294901760
          %v1355 = vsub.f32 %v697, %v1354
          %1356 = vmatprep.subr.mxu0 %v1355
          %v1357 = vand.u32 %v696, 4294901760
          %v1358 = vsub.f32 %v696, %v1357
          %1359 = vmatpush1.msra.mxu0 %v1358
          %v1360 = vand.u32 %v693, 4294901760
          %v1361 = vsub.f32 %v693, %v1360
          %1362 = vmatprep.subr.mxu0 %v1361
          %v1363 = vand.u32 %v692, 4294901760
          %v1364 = vsub.f32 %v692, %v1363
          %1365 = vmatpush1.msra.mxu0 %v1364
          %1366 = vmatprep.subr.mxu0 0.0
          %1367 = vmatpush2.msra.mxu0 0.0
          %1368 = vmatprep.subr.mxu0 0.0
          %1369 = vmatpush2.msra.mxu0 0.0
          %1370 = vmatprep.subr.mxu0 0.0
          %1371 = vmatpush2.msra.mxu0 0.0
          %1372 = vmatprep.subr.mxu0 0.0
          %1373 = vmatpush2.msra.mxu0 0.0
          %1374 = vmatprep.subr.mxu0 0.0
          %1375 = vmatpush2.msra.mxu0 0.0
          %1376 = vmatprep.subr.mxu0 0.0
          %1377 = vmatpush2.msra.mxu0 0.0
          %1378 = vmatprep.subr.mxu0 0.0
          %1379 = vmatpush2.msra.mxu0 0.0
          %1380 = vmatprep.subr.mxu0 0.0
          %1381 = vmatpush2.msra.mxu0 0.0
          %1382 = vmatprep.subr.mxu0 0.0
          %1383 = vmatpush2.msra.mxu0 0.0
          %1384 = vmatprep.subr.mxu0 0.0
          %1385 = vmatpush2.msra.mxu0 0.0
          %1386 = vmatprep.subr.mxu0 0.0
          %1387 = vmatpush2.msra.mxu0 0.0
          %1388 = vmatprep.subr.mxu0 0.0
          %1389 = vmatpush2.msra.mxu0 0.0
          %1390 = vmatprep.subr.mxu0 0.0
          %1391 = vmatpush2.msra.mxu0 0.0
          %1392 = vmatprep.subr.mxu0 0.0
          %1393 = vmatpush2.msra.mxu0 0.0
          %1394 = vmatprep.subr.mxu0 0.0
          %1395 = vmatpush2.msra.mxu0 0.0
          %1396 = vmatprep.subr.mxu0 0.0
          %1397 = vmatpush2.msra.mxu0 0.0
          %1398 = vmatprep.mubr.f32.mxu0 0.0
          %v1399 = vand.u32 %v788, 4294901760
          %v1400 = vsub.f32 %v788, %v1399
          %1401 = vmatmul.mubr.f32.gmra.mxu0 %v1400
          %v1402 = vpop.f32.mrf.mxu0
          %v1403 = vadd.f32 %v1217, %v1402
          %v1404 = vpop.f32.mrf.mxu0
          %v1405 = vadd.f32 %v1219, %v1404
          %1406 = vmatprep.mubr.f32.mxu0 0.0
          %v1407 = vand.u32 %v789, 4294901760
          %v1408 = vsub.f32 %v789, %v1407
          %1409 = vmatmul.mubr.f32.gmra.mxu0 %v1408
          %v1410 = vpop.f32.mrf.mxu0
          %v1411 = vadd.f32 %v1224, %v1410
          %v1412 = vpop.f32.mrf.mxu0
          %v1413 = vadd.f32 %v1226, %v1412
          %1414 = vmatprep.mubr.f32.mxu0 0.0
          %v1415 = vand.u32 %v790, 4294901760
          %v1416 = vsub.f32 %v790, %v1415
          %1417 = vmatmul.mubr.f32.gmra.mxu0 %v1416
          %v1418 = vpop.f32.mrf.mxu0
          %v1419 = vadd.f32 %v1231, %v1418
          %v1420 = vpop.f32.mrf.mxu0
          %v1421 = vadd.f32 %v1233, %v1420
          %1422 = vmatprep.mubr.f32.mxu0 0.0
          %v1423 = vand.u32 %v791, 4294901760
          %v1424 = vsub.f32 %v791, %v1423
          %1425 = vmatmul.mubr.f32.gmra.mxu0 %v1424
          %v1426 = vpop.f32.mrf.mxu0
          %v1427 = vadd.f32 %v1238, %v1426
          %v1428 = vpop.f32.mrf.mxu0
          %v1429 = vadd.f32 %v1240, %v1428
          %1430 = vmatprep.mubr.f32.mxu0 0.0
          %v1431 = vand.u32 %v792, 4294901760
          %v1432 = vsub.f32 %v792, %v1431
          %1433 = vmatmul.mubr.f32.gmra.mxu0 %v1432
          %v1434 = vpop.f32.mrf.mxu0
          %v1435 = vadd.f32 %v1245, %v1434
          %v1436 = vpop.f32.mrf.mxu0
          %v1437 = vadd.f32 %v1247, %v1436
          %1438 = vmatprep.mubr.f32.mxu0 0.0
          %v1439 = vand.u32 %v793, 4294901760
          %v1440 = vsub.f32 %v793, %v1439
          %1441 = vmatmul.mubr.f32.gmra.mxu0 %v1440
          %v1442 = vpop.f32.mrf.mxu0
          %v1443 = vadd.f32 %v1252, %v1442
          %v1444 = vpop.f32.mrf.mxu0
          %v1445 = vadd.f32 %v1254, %v1444
          %1446 = vmatprep.mubr.f32.mxu0 0.0
          %v1447 = vand.u32 %v794, 4294901760
          %v1448 = vsub.f32 %v794, %v1447
          %1449 = vmatmul.mubr.f32.gmra.mxu0 %v1448
          %v1450 = vpop.f32.mrf.mxu0
          %v1451 = vadd.f32 %v1259, %v1450
          %v1452 = vpop.f32.mrf.mxu0
          %v1453 = vadd.f32 %v1261, %v1452
          %1454 = vmatprep.mubr.f32.mxu0 0.0
          %v1455 = vand.u32 %v795, 4294901760
          %v1456 = vsub.f32 %v795, %v1455
          %1457 = vmatmul.mubr.f32.gmra.mxu0 %v1456
          %v1458 = vpop.f32.mrf.mxu0
          %v1459 = vadd.f32 %v1266, %v1458
          %v1460 = vpop.f32.mrf.mxu0
          %v1461 = vadd.f32 %v1268, %v1460
          %1462 = vdwg.mxu0
          %v1463 = vand.u32 %v753, 4294901760
          %1464 = vmatprep.subr.mxu0 %v1463
          %v1465 = vand.u32 %v752, 4294901760
          %1466 = vmatpush1.msra.mxu0 %v1465
          %v1467 = vand.u32 %v749, 4294901760
          %1468 = vmatprep.subr.mxu0 %v1467
          %v1469 = vand.u32 %v748, 4294901760
          %1470 = vmatpush1.msra.mxu0 %v1469
          %v1471 = vand.u32 %v745, 4294901760
          %1472 = vmatprep.subr.mxu0 %v1471
          %v1473 = vand.u32 %v744, 4294901760
          %1474 = vmatpush1.msra.mxu0 %v1473
          %v1475 = vand.u32 %v741, 4294901760
          %1476 = vmatprep.subr.mxu0 %v1475
          %v1477 = vand.u32 %v740, 4294901760
          %1478 = vmatpush1.msra.mxu0 %v1477
          %v1479 = vand.u32 %v737, 4294901760
          %1480 = vmatprep.subr.mxu0 %v1479
          %v1481 = vand.u32 %v736, 4294901760
          %1482 = vmatpush1.msra.mxu0 %v1481
          %v1483 = vand.u32 %v733, 4294901760
          %1484 = vmatprep.subr.mxu0 %v1483
          %v1485 = vand.u32 %v732, 4294901760
          %1486 = vmatpush1.msra.mxu0 %v1485
          %v1487 = vand.u32 %v729, 4294901760
          %1488 = vmatprep.subr.mxu0 %v1487
          %v1489 = vand.u32 %v728, 4294901760
          %1490 = vmatpush1.msra.mxu0 %v1489
          %v1491 = vand.u32 %v725, 4294901760
          %1492 = vmatprep.subr.mxu0 %v1491
          %v1493 = vand.u32 %v724, 4294901760
          %1494 = vmatpush1.msra.mxu0 %v1493
          %v1495 = vand.u32 %v721, 4294901760
          %1496 = vmatprep.subr.mxu0 %v1495
          %v1497 = vand.u32 %v720, 4294901760
          %1498 = vmatpush1.msra.mxu0 %v1497
          %v1499 = vand.u32 %v717, 4294901760
          %1500 = vmatprep.subr.mxu0 %v1499
          %v1501 = vand.u32 %v716, 4294901760
          %1502 = vmatpush1.msra.mxu0 %v1501
          %v1503 = vand.u32 %v713, 4294901760
          %1504 = vmatprep.subr.mxu0 %v1503
          %v1505 = vand.u32 %v712, 4294901760
          %1506 = vmatpush1.msra.mxu0 %v1505
          %v1507 = vand.u32 %v709, 4294901760
          %1508 = vmatprep.subr.mxu0 %v1507
          %v1509 = vand.u32 %v708, 4294901760
          %1510 = vmatpush1.msra.mxu0 %v1509
          %v1511 = vand.u32 %v705, 4294901760
          %1512 = vmatprep.subr.mxu0 %v1511
          %v1513 = vand.u32 %v704, 4294901760
          %1514 = vmatpush1.msra.mxu0 %v1513
          %v1515 = vand.u32 %v701, 4294901760
          %1516 = vmatprep.subr.mxu0 %v1515
          %v1517 = vand.u32 %v700, 4294901760
          %1518 = vmatpush1.msra.mxu0 %v1517
          %v1519 = vand.u32 %v697, 4294901760
          %1520 = vmatprep.subr.mxu0 %v1519
          %v1521 = vand.u32 %v696, 4294901760
          %1522 = vmatpush1.msra.mxu0 %v1521
          %v1523 = vand.u32 %v693, 4294901760
          %1524 = vmatprep.subr.mxu0 %v1523
          %v1525 = vand.u32 %v692, 4294901760
          %1526 = vmatpush1.msra.mxu0 %v1525
          %1527 = vmatprep.subr.mxu0 0.0
          %1528 = vmatpush2.msra.mxu0 0.0
          %1529 = vmatprep.subr.mxu0 0.0
          %1530 = vmatpush2.msra.mxu0 0.0
          %1531 = vmatprep.subr.mxu0 0.0
          %1532 = vmatpush2.msra.mxu0 0.0
          %1533 = vmatprep.subr.mxu0 0.0
          %1534 = vmatpush2.msra.mxu0 0.0
          %1535 = vmatprep.subr.mxu0 0.0
          %1536 = vmatpush2.msra.mxu0 0.0
          %1537 = vmatprep.subr.mxu0 0.0
          %1538 = vmatpush2.msra.mxu0 0.0
          %1539 = vmatprep.subr.mxu0 0.0
          %1540 = vmatpush2.msra.mxu0 0.0
          %1541 = vmatprep.subr.mxu0 0.0
          %1542 = vmatpush2.msra.mxu0 0.0
          %1543 = vmatprep.subr.mxu0 0.0
          %1544 = vmatpush2.msra.mxu0 0.0
          %1545 = vmatprep.subr.mxu0 0.0
          %1546 = vmatpush2.msra.mxu0 0.0
          %1547 = vmatprep.subr.mxu0 0.0
          %1548 = vmatpush2.msra.mxu0 0.0
          %1549 = vmatprep.subr.mxu0 0.0
          %1550 = vmatpush2.msra.mxu0 0.0
          %1551 = vmatprep.subr.mxu0 0.0
          %1552 = vmatpush2.msra.mxu0 0.0
          %1553 = vmatprep.subr.mxu0 0.0
          %1554 = vmatpush2.msra.mxu0 0.0
          %1555 = vmatprep.subr.mxu0 0.0
          %1556 = vmatpush2.msra.mxu0 0.0
          %1557 = vmatprep.subr.mxu0 0.0
          %1558 = vmatpush2.msra.mxu0 0.0
          %1559 = vmatprep.mubr.f32.mxu0 0.0
          %v1560 = vand.u32 %v788, 4294901760
          %v1561 = vsub.f32 %v788, %v1560
          %v1562 = vand.u32 %v1561, 4294901760
          %1563 = vmatmul.mubr.f32.gmra.mxu0 %v1562
          %v1564 = vpop.f32.mrf.mxu0
          %v1565 = vadd.f32 %v1403, %v1564
          %v1566 = vpop.f32.mrf.mxu0
          %v1567 = vadd.f32 %v1405, %v1566
          %1568 = vmatprep.mubr.f32.mxu0 0.0
          %v1569 = vand.u32 %v789, 4294901760
          %v1570 = vsub.f32 %v789, %v1569
          %v1571 = vand.u32 %v1570, 4294901760
          %1572 = vmatmul.mubr.f32.gmra.mxu0 %v1571
          %v1573 = vpop.f32.mrf.mxu0
          %v1574 = vadd.f32 %v1411, %v1573
          %v1575 = vpop.f32.mrf.mxu0
          %v1576 = vadd.f32 %v1413, %v1575
          %1577 = vmatprep.mubr.f32.mxu0 0.0
          %v1578 = vand.u32 %v790, 4294901760
          %v1579 = vsub.f32 %v790, %v1578
          %v1580 = vand.u32 %v1579, 4294901760
          %1581 = vmatmul.mubr.f32.gmra.mxu0 %v1580
          %v1582 = vpop.f32.mrf.mxu0
          %v1583 = vadd.f32 %v1419, %v1582
          %v1584 = vpop.f32.mrf.mxu0
          %v1585 = vadd.f32 %v1421, %v1584
          %1586 = vmatprep.mubr.f32.mxu0 0.0
          %v1587 = vand.u32 %v791, 4294901760
          %v1588 = vsub.f32 %v791, %v1587
          %v1589 = vand.u32 %v1588, 4294901760
          %1590 = vmatmul.mubr.f32.gmra.mxu0 %v1589
          %v1591 = vpop.f32.mrf.mxu0
          %v1592 = vadd.f32 %v1427, %v1591
          %v1593 = vpop.f32.mrf.mxu0
          %v1594 = vadd.f32 %v1429, %v1593
          %1595 = vmatprep.mubr.f32.mxu0 0.0
          %v1596 = vand.u32 %v792, 4294901760
          %v1597 = vsub.f32 %v792, %v1596
          %v1598 = vand.u32 %v1597, 4294901760
          %1599 = vmatmul.mubr.f32.gmra.mxu0 %v1598
          %v1600 = vpop.f32.mrf.mxu0
          %v1601 = vadd.f32 %v1435, %v1600
          %v1602 = vpop.f32.mrf.mxu0
          %v1603 = vadd.f32 %v1437, %v1602
          %1604 = vmatprep.mubr.f32.mxu0 0.0
          %v1605 = vand.u32 %v793, 4294901760
          %v1606 = vsub.f32 %v793, %v1605
          %v1607 = vand.u32 %v1606, 4294901760
          %1608 = vmatmul.mubr.f32.gmra.mxu0 %v1607
          %v1609 = vpop.f32.mrf.mxu0
          %v1610 = vadd.f32 %v1443, %v1609
          %v1611 = vpop.f32.mrf.mxu0
          %v1612 = vadd.f32 %v1445, %v1611
          %1613 = vmatprep.mubr.f32.mxu0 0.0
          %v1614 = vand.u32 %v794, 4294901760
          %v1615 = vsub.f32 %v794, %v1614
          %v1616 = vand.u32 %v1615, 4294901760
          %1617 = vmatmul.mubr.f32.gmra.mxu0 %v1616
          %v1618 = vpop.f32.mrf.mxu0
          %v1619 = vadd.f32 %v1451, %v1618
          %v1620 = vpop.f32.mrf.mxu0
          %v1621 = vadd.f32 %v1453, %v1620
          %1622 = vmatprep.mubr.f32.mxu0 0.0
          %v1623 = vand.u32 %v795, 4294901760
          %v1624 = vsub.f32 %v795, %v1623
          %v1625 = vand.u32 %v1624, 4294901760
          %1626 = vmatmul.mubr.f32.gmra.mxu0 %v1625
          %v1627 = vpop.f32.mrf.mxu0
          %v1628 = vadd.f32 %v1459, %v1627
          %v1629 = vpop.f32.mrf.mxu0
          %v1630 = vadd.f32 %v1461, %v1629
          %1631 = vdwg.mxu0
          %v1632 = vand.u32 %v753, 4294901760
          %v1633 = vsub.f32 %v753, %v1632
          %v1634 = vand.u32 %v1633, 4294901760
          %1635 = vmatprep.subr.mxu0 %v1634
          %v1636 = vand.u32 %v752, 4294901760
          %v1637 = vsub.f32 %v752, %v1636
          %v1638 = vand.u32 %v1637, 4294901760
          %1639 = vmatpush1.msra.mxu0 %v1638
          %v1640 = vand.u32 %v749, 4294901760
          %v1641 = vsub.f32 %v749, %v1640
          %v1642 = vand.u32 %v1641, 4294901760
          %1643 = vmatprep.subr.mxu0 %v1642
          %v1644 = vand.u32 %v748, 4294901760
          %v1645 = vsub.f32 %v748, %v1644
          %v1646 = vand.u32 %v1645, 4294901760
          %1647 = vmatpush1.msra.mxu0 %v1646
          %v1648 = vand.u32 %v745, 4294901760
          %v1649 = vsub.f32 %v745, %v1648
          %v1650 = vand.u32 %v1649, 4294901760
          %1651 = vmatprep.subr.mxu0 %v1650
          %v1652 = vand.u32 %v744, 4294901760
          %v1653 = vsub.f32 %v744, %v1652
          %v1654 = vand.u32 %v1653, 4294901760
          %1655 = vmatpush1.msra.mxu0 %v1654
          %v1656 = vand.u32 %v741, 4294901760
          %v1657 = vsub.f32 %v741, %v1656
          %v1658 = vand.u32 %v1657, 4294901760
          %1659 = vmatprep.subr.mxu0 %v1658
          %v1660 = vand.u32 %v740, 4294901760
          %v1661 = vsub.f32 %v740, %v1660
          %v1662 = vand.u32 %v1661, 4294901760
          %1663 = vmatpush1.msra.mxu0 %v1662
          %v1664 = vand.u32 %v737, 4294901760
          %v1665 = vsub.f32 %v737, %v1664
          %v1666 = vand.u32 %v1665, 4294901760
          %1667 = vmatprep.subr.mxu0 %v1666
          %v1668 = vand.u32 %v736, 4294901760
          %v1669 = vsub.f32 %v736, %v1668
          %v1670 = vand.u32 %v1669, 4294901760
          %1671 = vmatpush1.msra.mxu0 %v1670
          %v1672 = vand.u32 %v733, 4294901760
          %v1673 = vsub.f32 %v733, %v1672
          %v1674 = vand.u32 %v1673, 4294901760
          %1675 = vmatprep.subr.mxu0 %v1674
          %v1676 = vand.u32 %v732, 4294901760
          %v1677 = vsub.f32 %v732, %v1676
          %v1678 = vand.u32 %v1677, 4294901760
          %1679 = vmatpush1.msra.mxu0 %v1678
          %v1680 = vand.u32 %v729, 4294901760
          %v1681 = vsub.f32 %v729, %v1680
          %v1682 = vand.u32 %v1681, 4294901760
          %1683 = vmatprep.subr.mxu0 %v1682
          %v1684 = vand.u32 %v728, 4294901760
          %v1685 = vsub.f32 %v728, %v1684
          %v1686 = vand.u32 %v1685, 4294901760
          %1687 = vmatpush1.msra.mxu0 %v1686
          %v1688 = vand.u32 %v725, 4294901760
          %v1689 = vsub.f32 %v725, %v1688
          %v1690 = vand.u32 %v1689, 4294901760
          %1691 = vmatprep.subr.mxu0 %v1690
          %v1692 = vand.u32 %v724, 4294901760
          %v1693 = vsub.f32 %v724, %v1692
          %v1694 = vand.u32 %v1693, 4294901760
          %1695 = vmatpush1.msra.mxu0 %v1694
          %v1696 = vand.u32 %v721, 4294901760
          %v1697 = vsub.f32 %v721, %v1696
          %v1698 = vand.u32 %v1697, 4294901760
          %1699 = vmatprep.subr.mxu0 %v1698
          %v1700 = vand.u32 %v720, 4294901760
          %v1701 = vsub.f32 %v720, %v1700
          %v1702 = vand.u32 %v1701, 4294901760
          %1703 = vmatpush1.msra.mxu0 %v1702
          %v1704 = vand.u32 %v717, 4294901760
          %v1705 = vsub.f32 %v717, %v1704
          %v1706 = vand.u32 %v1705, 4294901760
          %1707 = vmatprep.subr.mxu0 %v1706
          %v1708 = vand.u32 %v716, 4294901760
          %v1709 = vsub.f32 %v716, %v1708
          %v1710 = vand.u32 %v1709, 4294901760
          %1711 = vmatpush1.msra.mxu0 %v1710
          %v1712 = vand.u32 %v713, 4294901760
          %v1713 = vsub.f32 %v713, %v1712
          %v1714 = vand.u32 %v1713, 4294901760
          %1715 = vmatprep.subr.mxu0 %v1714
          %v1716 = vand.u32 %v712, 4294901760
          %v1717 = vsub.f32 %v712, %v1716
          %v1718 = vand.u32 %v1717, 4294901760
          %1719 = vmatpush1.msra.mxu0 %v1718
          %v1720 = vand.u32 %v709, 4294901760
          %v1721 = vsub.f32 %v709, %v1720
          %v1722 = vand.u32 %v1721, 4294901760
          %1723 = vmatprep.subr.mxu0 %v1722
          %v1724 = vand.u32 %v708, 4294901760
          %v1725 = vsub.f32 %v708, %v1724
          %v1726 = vand.u32 %v1725, 4294901760
          %1727 = vmatpush1.msra.mxu0 %v1726
          %v1728 = vand.u32 %v705, 4294901760
          %v1729 = vsub.f32 %v705, %v1728
          %v1730 = vand.u32 %v1729, 4294901760
          %1731 = vmatprep.subr.mxu0 %v1730
          %v1732 = vand.u32 %v704, 4294901760
          %v1733 = vsub.f32 %v704, %v1732
          %v1734 = vand.u32 %v1733, 4294901760
          %1735 = vmatpush1.msra.mxu0 %v1734
          %v1736 = vand.u32 %v701, 4294901760
          %v1737 = vsub.f32 %v701, %v1736
          %v1738 = vand.u32 %v1737, 4294901760
          %1739 = vmatprep.subr.mxu0 %v1738
          %v1740 = vand.u32 %v700, 4294901760
          %v1741 = vsub.f32 %v700, %v1740
          %v1742 = vand.u32 %v1741, 4294901760
          %1743 = vmatpush1.msra.mxu0 %v1742
          %v1744 = vand.u32 %v697, 4294901760
          %v1745 = vsub.f32 %v697, %v1744
          %v1746 = vand.u32 %v1745, 4294901760
          %1747 = vmatprep.subr.mxu0 %v1746
          %v1748 = vand.u32 %v696, 4294901760
          %v1749 = vsub.f32 %v696, %v1748
          %v1750 = vand.u32 %v1749, 4294901760
          %1751 = vmatpush1.msra.mxu0 %v1750
          %v1752 = vand.u32 %v693, 4294901760
          %v1753 = vsub.f32 %v693, %v1752
          %v1754 = vand.u32 %v1753, 4294901760
          %1755 = vmatprep.subr.mxu0 %v1754
          %v1756 = vand.u32 %v692, 4294901760
          %v1757 = vsub.f32 %v692, %v1756
          %v1758 = vand.u32 %v1757, 4294901760
          %1759 = vmatpush1.msra.mxu0 %v1758
          %1760 = vmatprep.subr.mxu0 0.0
          %1761 = vmatpush2.msra.mxu0 0.0
          %1762 = vmatprep.subr.mxu0 0.0
          %1763 = vmatpush2.msra.mxu0 0.0
          %1764 = vmatprep.subr.mxu0 0.0
          %1765 = vmatpush2.msra.mxu0 0.0
          %1766 = vmatprep.subr.mxu0 0.0
          %1767 = vmatpush2.msra.mxu0 0.0
          %1768 = vmatprep.subr.mxu0 0.0
          %1769 = vmatpush2.msra.mxu0 0.0
          %1770 = vmatprep.subr.mxu0 0.0
          %1771 = vmatpush2.msra.mxu0 0.0
          %1772 = vmatprep.subr.mxu0 0.0
          %1773 = vmatpush2.msra.mxu0 0.0
          %1774 = vmatprep.subr.mxu0 0.0
          %1775 = vmatpush2.msra.mxu0 0.0
          %1776 = vmatprep.subr.mxu0 0.0
          %1777 = vmatpush2.msra.mxu0 0.0
          %1778 = vmatprep.subr.mxu0 0.0
          %1779 = vmatpush2.msra.mxu0 0.0
          %1780 = vmatprep.subr.mxu0 0.0
          %1781 = vmatpush2.msra.mxu0 0.0
          %1782 = vmatprep.subr.mxu0 0.0
          %1783 = vmatpush2.msra.mxu0 0.0
          %1784 = vmatprep.subr.mxu0 0.0
          %1785 = vmatpush2.msra.mxu0 0.0
          %1786 = vmatprep.subr.mxu0 0.0
          %1787 = vmatpush2.msra.mxu0 0.0
          %1788 = vmatprep.subr.mxu0 0.0
          %1789 = vmatpush2.msra.mxu0 0.0
          %1790 = vmatprep.subr.mxu0 0.0
          %1791 = vmatpush2.msra.mxu0 0.0
          %1792 = vmatprep.mubr.f32.mxu0 0.0
          %v1793 = vand.u32 %v788, 4294901760
          %1794 = vmatmul.mubr.f32.gmra.mxu0 %v1793
          %v1795 = vpop.f32.mrf.mxu0
          %v1796 = vadd.f32 %v1565, %v1795
          %v1797 = vpop.f32.mrf.mxu0
          %v1798 = vadd.f32 %v1567, %v1797
          %1799 = vmatprep.mubr.f32.mxu0 0.0
          %v1800 = vand.u32 %v789, 4294901760
          %1801 = vmatmul.mubr.f32.gmra.mxu0 %v1800
          %v1802 = vpop.f32.mrf.mxu0
          %v1803 = vadd.f32 %v1574, %v1802
          %v1804 = vpop.f32.mrf.mxu0
          %v1805 = vadd.f32 %v1576, %v1804
          %1806 = vmatprep.mubr.f32.mxu0 0.0
          %v1807 = vand.u32 %v790, 4294901760
          %1808 = vmatmul.mubr.f32.gmra.mxu0 %v1807
          %v1809 = vpop.f32.mrf.mxu0
          %v1810 = vadd.f32 %v1583, %v1809
          %v1811 = vpop.f32.mrf.mxu0
          %v1812 = vadd.f32 %v1585, %v1811
          %1813 = vmatprep.mubr.f32.mxu0 0.0
          %v1814 = vand.u32 %v791, 4294901760
          %1815 = vmatmul.mubr.f32.gmra.mxu0 %v1814
          %v1816 = vpop.f32.mrf.mxu0
          %v1817 = vadd.f32 %v1592, %v1816
          %v1818 = vpop.f32.mrf.mxu0
          %v1819 = vadd.f32 %v1594, %v1818
          %1820 = vmatprep.mubr.f32.mxu0 0.0
          %v1821 = vand.u32 %v792, 4294901760
          %1822 = vmatmul.mubr.f32.gmra.mxu0 %v1821
          %v1823 = vpop.f32.mrf.mxu0
          %v1824 = vadd.f32 %v1601, %v1823
          %v1825 = vpop.f32.mrf.mxu0
          %v1826 = vadd.f32 %v1603, %v1825
          %1827 = vmatprep.mubr.f32.mxu0 0.0
          %v1828 = vand.u32 %v793, 4294901760
          %1829 = vmatmul.mubr.f32.gmra.mxu0 %v1828
          %v1830 = vpop.f32.mrf.mxu0
          %v1831 = vadd.f32 %v1610, %v1830
          %v1832 = vpop.f32.mrf.mxu0
          %v1833 = vadd.f32 %v1612, %v1832
          %1834 = vmatprep.mubr.f32.mxu0 0.0
          %v1835 = vand.u32 %v794, 4294901760
          %1836 = vmatmul.mubr.f32.gmra.mxu0 %v1835
          %v1837 = vpop.f32.mrf.mxu0
          %v1838 = vadd.f32 %v1619, %v1837
          %v1839 = vpop.f32.mrf.mxu0
          %v1840 = vadd.f32 %v1621, %v1839
          %1841 = vmatprep.mubr.f32.mxu0 0.0
          %v1842 = vand.u32 %v795, 4294901760
          %1843 = vmatmul.mubr.f32.gmra.mxu0 %v1842
          %v1844 = vpop.f32.mrf.mxu0
          %v1845 = vadd.f32 %v1628, %v1844
          %v1846 = vpop.f32.mrf.mxu0
          %v1847 = vadd.f32 %v1630, %v1846
          %1848 = vdwg.mxu0
          %v1849 = vand.u32 %v753, 4294901760
          %1850 = vmatprep.subr.mxu0 %v1849
          %v1851 = vand.u32 %v752, 4294901760
          %1852 = vmatpush1.msra.mxu0 %v1851
          %v1853 = vand.u32 %v749, 4294901760
          %1854 = vmatprep.subr.mxu0 %v1853
          %v1855 = vand.u32 %v748, 4294901760
          %1856 = vmatpush1.msra.mxu0 %v1855
          %v1857 = vand.u32 %v745, 4294901760
          %1858 = vmatprep.subr.mxu0 %v1857
          %v1859 = vand.u32 %v744, 4294901760
          %1860 = vmatpush1.msra.mxu0 %v1859
          %v1861 = vand.u32 %v741, 4294901760
          %1862 = vmatprep.subr.mxu0 %v1861
          %v1863 = vand.u32 %v740, 4294901760
          %1864 = vmatpush1.msra.mxu0 %v1863
          %v1865 = vand.u32 %v737, 4294901760
          %1866 = vmatprep.subr.mxu0 %v1865
          %v1867 = vand.u32 %v736, 4294901760
          %1868 = vmatpush1.msra.mxu0 %v1867
          %v1869 = vand.u32 %v733, 4294901760
          %1870 = vmatprep.subr.mxu0 %v1869
          %v1871 = vand.u32 %v732, 4294901760
          %1872 = vmatpush1.msra.mxu0 %v1871
          %v1873 = vand.u32 %v729, 4294901760
          %1874 = vmatprep.subr.mxu0 %v1873
          %v1875 = vand.u32 %v728, 4294901760
          %1876 = vmatpush1.msra.mxu0 %v1875
          %v1877 = vand.u32 %v725, 4294901760
          %1878 = vmatprep.subr.mxu0 %v1877
          %v1879 = vand.u32 %v724, 4294901760
          %1880 = vmatpush1.msra.mxu0 %v1879
          %v1881 = vand.u32 %v721, 4294901760
          %1882 = vmatprep.subr.mxu0 %v1881
          %v1883 = vand.u32 %v720, 4294901760
          %1884 = vmatpush1.msra.mxu0 %v1883
          %v1885 = vand.u32 %v717, 4294901760
          %1886 = vmatprep.subr.mxu0 %v1885
          %v1887 = vand.u32 %v716, 4294901760
          %1888 = vmatpush1.msra.mxu0 %v1887
          %v1889 = vand.u32 %v713, 4294901760
          %1890 = vmatprep.subr.mxu0 %v1889
          %v1891 = vand.u32 %v712, 4294901760
          %1892 = vmatpush1.msra.mxu0 %v1891
          %v1893 = vand.u32 %v709, 4294901760
          %1894 = vmatprep.subr.mxu0 %v1893
          %v1895 = vand.u32 %v708, 4294901760
          %1896 = vmatpush1.msra.mxu0 %v1895
          %v1897 = vand.u32 %v705, 4294901760
          %1898 = vmatprep.subr.mxu0 %v1897
          %v1899 = vand.u32 %v704, 4294901760
          %1900 = vmatpush1.msra.mxu0 %v1899
          %v1901 = vand.u32 %v701, 4294901760
          %1902 = vmatprep.subr.mxu0 %v1901
          %v1903 = vand.u32 %v700, 4294901760
          %1904 = vmatpush1.msra.mxu0 %v1903
          %v1905 = vand.u32 %v697, 4294901760
          %1906 = vmatprep.subr.mxu0 %v1905
          %v1907 = vand.u32 %v696, 4294901760
          %1908 = vmatpush1.msra.mxu0 %v1907
          %v1909 = vand.u32 %v693, 4294901760
          %1910 = vmatprep.subr.mxu0 %v1909
          %v1911 = vand.u32 %v692, 4294901760
          %1912 = vmatpush1.msra.mxu0 %v1911
          %1913 = vmatprep.subr.mxu0 0.0
          %1914 = vmatpush2.msra.mxu0 0.0
          %1915 = vmatprep.subr.mxu0 0.0
          %1916 = vmatpush2.msra.mxu0 0.0
          %1917 = vmatprep.subr.mxu0 0.0
          %1918 = vmatpush2.msra.mxu0 0.0
          %1919 = vmatprep.subr.mxu0 0.0
          %1920 = vmatpush2.msra.mxu0 0.0
          %1921 = vmatprep.subr.mxu0 0.0
          %1922 = vmatpush2.msra.mxu0 0.0
          %1923 = vmatprep.subr.mxu0 0.0
          %1924 = vmatpush2.msra.mxu0 0.0
          %1925 = vmatprep.subr.mxu0 0.0
          %1926 = vmatpush2.msra.mxu0 0.0
          %1927 = vmatprep.subr.mxu0 0.0
          %1928 = vmatpush2.msra.mxu0 0.0
          %1929 = vmatprep.subr.mxu0 0.0
          %1930 = vmatpush2.msra.mxu0 0.0
          %1931 = vmatprep.subr.mxu0 0.0
          %1932 = vmatpush2.msra.mxu0 0.0
          %1933 = vmatprep.subr.mxu0 0.0
          %1934 = vmatpush2.msra.mxu0 0.0
          %1935 = vmatprep.subr.mxu0 0.0
          %1936 = vmatpush2.msra.mxu0 0.0
          %1937 = vmatprep.subr.mxu0 0.0
          %1938 = vmatpush2.msra.mxu0 0.0
          %1939 = vmatprep.subr.mxu0 0.0
          %1940 = vmatpush2.msra.mxu0 0.0
          %1941 = vmatprep.subr.mxu0 0.0
          %1942 = vmatpush2.msra.mxu0 0.0
          %1943 = vmatprep.subr.mxu0 0.0
          %1944 = vmatpush2.msra.mxu0 0.0
          %1945 = vmatprep.mubr.f32.mxu0 0.0
          %v1946 = vand.u32 %v788, 4294901760
          %1947 = vmatmul.mubr.f32.gmra.mxu0 %v1946
          %v1948 = vpop.f32.mrf.mxu0
          %v1949 = vadd.f32 %v1796, %v1948
          %v1950 = vpop.f32.mrf.mxu0
          %v1951 = vadd.f32 %v1798, %v1950
          %1952 = vmatprep.mubr.f32.mxu0 0.0
          %v1953 = vand.u32 %v789, 4294901760
          %1954 = vmatmul.mubr.f32.gmra.mxu0 %v1953
          %v1955 = vpop.f32.mrf.mxu0
          %v1956 = vadd.f32 %v1803, %v1955
          %v1957 = vpop.f32.mrf.mxu0
          %v1958 = vadd.f32 %v1805, %v1957
          %1959 = vmatprep.mubr.f32.mxu0 0.0
          %v1960 = vand.u32 %v790, 4294901760
          %1961 = vmatmul.mubr.f32.gmra.mxu0 %v1960
          %v1962 = vpop.f32.mrf.mxu0
          %v1963 = vadd.f32 %v1810, %v1962
          %v1964 = vpop.f32.mrf.mxu0
          %v1965 = vadd.f32 %v1812, %v1964
          %1966 = vmatprep.mubr.f32.mxu0 0.0
          %v1967 = vand.u32 %v791, 4294901760
          %1968 = vmatmul.mubr.f32.gmra.mxu0 %v1967
          %v1969 = vpop.f32.mrf.mxu0
          %v1970 = vadd.f32 %v1817, %v1969
          %v1971 = vpop.f32.mrf.mxu0
          %v1972 = vadd.f32 %v1819, %v1971
          %1973 = vmatprep.mubr.f32.mxu0 0.0
          %v1974 = vand.u32 %v792, 4294901760
          %1975 = vmatmul.mubr.f32.gmra.mxu0 %v1974
          %v1976 = vpop.f32.mrf.mxu0
          %v1977 = vadd.f32 %v1824, %v1976
          %v1978 = vpop.f32.mrf.mxu0
          %v1979 = vadd.f32 %v1826, %v1978
          %1980 = vmatprep.mubr.f32.mxu0 0.0
          %v1981 = vand.u32 %v793, 4294901760
          %1982 = vmatmul.mubr.f32.gmra.mxu0 %v1981
          %v1983 = vpop.f32.mrf.mxu0
          %v1984 = vadd.f32 %v1831, %v1983
          %v1985 = vpop.f32.mrf.mxu0
          %v1986 = vadd.f32 %v1833, %v1985
          %1987 = vmatprep.mubr.f32.mxu0 0.0
          %v1988 = vand.u32 %v794, 4294901760
          %1989 = vmatmul.mubr.f32.gmra.mxu0 %v1988
          %v1990 = vpop.f32.mrf.mxu0
          %v1991 = vadd.f32 %v1838, %v1990
          %v1992 = vpop.f32.mrf.mxu0
          %v1993 = vadd.f32 %v1840, %v1992
          %1994 = vmatprep.mubr.f32.mxu0 0.0
          %v1995 = vand.u32 %v795, 4294901760
          %1996 = vmatmul.mubr.f32.gmra.mxu0 %v1995
          %v1997 = vpop.f32.mrf.mxu0
          %v1998 = vadd.f32 %v1845, %v1997
          %v1999 = vpop.f32.mrf.mxu0
          %v2000 = vadd.f32 %v1847, %v1999
          %2001 = vdwg.mxu0
          %v2002 = vand.u32 %v755, 4294901760
          %2003 = vmatprep.subr.mxu0 %v2002
          %v2004 = vand.u32 %v754, 4294901760
          %2005 = vmatpush1.msra.mxu0 %v2004
          %v2006 = vand.u32 %v751, 4294901760
          %2007 = vmatprep.subr.mxu0 %v2006
          %v2008 = vand.u32 %v750, 4294901760
          %2009 = vmatpush1.msra.mxu0 %v2008
          %v2010 = vand.u32 %v747, 4294901760
          %2011 = vmatprep.subr.mxu0 %v2010
          %v2012 = vand.u32 %v746, 4294901760
          %2013 = vmatpush1.msra.mxu0 %v2012
          %v2014 = vand.u32 %v743, 4294901760
          %2015 = vmatprep.subr.mxu0 %v2014
          %v2016 = vand.u32 %v742, 4294901760
          %2017 = vmatpush1.msra.mxu0 %v2016
          %v2018 = vand.u32 %v739, 4294901760
          %2019 = vmatprep.subr.mxu0 %v2018
          %v2020 = vand.u32 %v738, 4294901760
          %2021 = vmatpush1.msra.mxu0 %v2020
          %v2022 = vand.u32 %v735, 4294901760
          %2023 = vmatprep.subr.mxu0 %v2022
          %v2024 = vand.u32 %v734, 4294901760
          %2025 = vmatpush1.msra.mxu0 %v2024
          %v2026 = vand.u32 %v731, 4294901760
          %2027 = vmatprep.subr.mxu0 %v2026
          %v2028 = vand.u32 %v730, 4294901760
          %2029 = vmatpush1.msra.mxu0 %v2028
          %v2030 = vand.u32 %v727, 4294901760
          %2031 = vmatprep.subr.mxu0 %v2030
          %v2032 = vand.u32 %v726, 4294901760
          %2033 = vmatpush1.msra.mxu0 %v2032
          %v2034 = vand.u32 %v723, 4294901760
          %2035 = vmatprep.subr.mxu0 %v2034
          %v2036 = vand.u32 %v722, 4294901760
          %2037 = vmatpush1.msra.mxu0 %v2036
          %v2038 = vand.u32 %v719, 4294901760
          %2039 = vmatprep.subr.mxu0 %v2038
          %v2040 = vand.u32 %v718, 4294901760
          %2041 = vmatpush1.msra.mxu0 %v2040
          %v2042 = vand.u32 %v715, 4294901760
          %2043 = vmatprep.subr.mxu0 %v2042
          %v2044 = vand.u32 %v714, 4294901760
          %2045 = vmatpush1.msra.mxu0 %v2044
          %v2046 = vand.u32 %v711, 4294901760
          %2047 = vmatprep.subr.mxu0 %v2046
          %v2048 = vand.u32 %v710, 4294901760
          %2049 = vmatpush1.msra.mxu0 %v2048
          %v2050 = vand.u32 %v707, 4294901760
          %2051 = vmatprep.subr.mxu0 %v2050
          %v2052 = vand.u32 %v706, 4294901760
          %2053 = vmatpush1.msra.mxu0 %v2052
          %v2054 = vand.u32 %v703, 4294901760
          %2055 = vmatprep.subr.mxu0 %v2054
          %v2056 = vand.u32 %v702, 4294901760
          %2057 = vmatpush1.msra.mxu0 %v2056
          %v2058 = vand.u32 %v699, 4294901760
          %2059 = vmatprep.subr.mxu0 %v2058
          %v2060 = vand.u32 %v698, 4294901760
          %2061 = vmatpush1.msra.mxu0 %v2060
          %v2062 = vand.u32 %v695, 4294901760
          %2063 = vmatprep.subr.mxu0 %v2062
          %v2064 = vand.u32 %v694, 4294901760
          %2065 = vmatpush1.msra.mxu0 %v2064
          %2066 = vmatprep.subr.mxu0 0.0
          %2067 = vmatpush2.msra.mxu0 0.0
          %2068 = vmatprep.subr.mxu0 0.0
          %2069 = vmatpush2.msra.mxu0 0.0
          %2070 = vmatprep.subr.mxu0 0.0
          %2071 = vmatpush2.msra.mxu0 0.0
          %2072 = vmatprep.subr.mxu0 0.0
          %2073 = vmatpush2.msra.mxu0 0.0
          %2074 = vmatprep.subr.mxu0 0.0
          %2075 = vmatpush2.msra.mxu0 0.0
          %2076 = vmatprep.subr.mxu0 0.0
          %2077 = vmatpush2.msra.mxu0 0.0
          %2078 = vmatprep.subr.mxu0 0.0
          %2079 = vmatpush2.msra.mxu0 0.0
          %2080 = vmatprep.subr.mxu0 0.0
          %2081 = vmatpush2.msra.mxu0 0.0
          %2082 = vmatprep.subr.mxu0 0.0
          %2083 = vmatpush2.msra.mxu0 0.0
          %2084 = vmatprep.subr.mxu0 0.0
          %2085 = vmatpush2.msra.mxu0 0.0
          %2086 = vmatprep.subr.mxu0 0.0
          %2087 = vmatpush2.msra.mxu0 0.0
          %2088 = vmatprep.subr.mxu0 0.0
          %2089 = vmatpush2.msra.mxu0 0.0
          %2090 = vmatprep.subr.mxu0 0.0
          %2091 = vmatpush2.msra.mxu0 0.0
          %2092 = vmatprep.subr.mxu0 0.0
          %2093 = vmatpush2.msra.mxu0 0.0
          %2094 = vmatprep.subr.mxu0 0.0
          %2095 = vmatpush2.msra.mxu0 0.0
          %2096 = vmatprep.subr.mxu0 0.0
          %2097 = vmatpush2.msra.mxu0 0.0
          %2098 = vmatprep.mubr.f32.mxu0 0.0
          %v2099 = vand.u32 %v788, 4294901760
          %v2100 = vsub.f32 %v788, %v2099
          %v2101 = vand.u32 %v2100, 4294901760
          %v2102 = vsub.f32 %v2100, %v2101
          %v2103 = vand.u32 %v2102, 4294901760
          %2104 = vmatmul.mubr.f32.gmra.mxu0 %v2103
          %v2105 = vpop.f32.mrf.mxu0
          %v2106 = vadd.f32 0.0, %v2105
          %v2107 = vpop.f32.mrf.mxu0
          %v2108 = vadd.f32 0.0, %v2107
          %2109 = vmatprep.mubr.f32.mxu0 0.0
          %v2110 = vand.u32 %v789, 4294901760
          %v2111 = vsub.f32 %v789, %v2110
          %v2112 = vand.u32 %v2111, 4294901760
          %v2113 = vsub.f32 %v2111, %v2112
          %v2114 = vand.u32 %v2113, 4294901760
          %2115 = vmatmul.mubr.f32.gmra.mxu0 %v2114
          %v2116 = vpop.f32.mrf.mxu0
          %v2117 = vadd.f32 0.0, %v2116
          %v2118 = vpop.f32.mrf.mxu0
          %v2119 = vadd.f32 0.0, %v2118
          %2120 = vmatprep.mubr.f32.mxu0 0.0
          %v2121 = vand.u32 %v790, 4294901760
          %v2122 = vsub.f32 %v790, %v2121
          %v2123 = vand.u32 %v2122, 4294901760
          %v2124 = vsub.f32 %v2122, %v2123
          %v2125 = vand.u32 %v2124, 4294901760
          %2126 = vmatmul.mubr.f32.gmra.mxu0 %v2125
          %v2127 = vpop.f32.mrf.mxu0
          %v2128 = vadd.f32 0.0, %v2127
          %v2129 = vpop.f32.mrf.mxu0
          %v2130 = vadd.f32 0.0, %v2129
          %2131 = vmatprep.mubr.f32.mxu0 0.0
          %v2132 = vand.u32 %v791, 4294901760
          %v2133 = vsub.f32 %v791, %v2132
          %v2134 = vand.u32 %v2133, 4294901760
          %v2135 = vsub.f32 %v2133, %v2134
          %v2136 = vand.u32 %v2135, 4294901760
          %2137 = vmatmul.mubr.f32.gmra.mxu0 %v2136
          %v2138 = vpop.f32.mrf.mxu0
          %v2139 = vadd.f32 0.0, %v2138
          %v2140 = vpop.f32.mrf.mxu0
          %v2141 = vadd.f32 0.0, %v2140
          %2142 = vmatprep.mubr.f32.mxu0 0.0
          %v2143 = vand.u32 %v792, 4294901760
          %v2144 = vsub.f32 %v792, %v2143
          %v2145 = vand.u32 %v2144, 4294901760
          %v2146 = vsub.f32 %v2144, %v2145
          %v2147 = vand.u32 %v2146, 4294901760
          %2148 = vmatmul.mubr.f32.gmra.mxu0 %v2147
          %v2149 = vpop.f32.mrf.mxu0
          %v2150 = vadd.f32 0.0, %v2149
          %v2151 = vpop.f32.mrf.mxu0
          %v2152 = vadd.f32 0.0, %v2151
          %2153 = vmatprep.mubr.f32.mxu0 0.0
          %v2154 = vand.u32 %v793, 4294901760
          %v2155 = vsub.f32 %v793, %v2154
          %v2156 = vand.u32 %v2155, 4294901760
          %v2157 = vsub.f32 %v2155, %v2156
          %v2158 = vand.u32 %v2157, 4294901760
          %2159 = vmatmul.mubr.f32.gmra.mxu0 %v2158
          %v2160 = vpop.f32.mrf.mxu0
          %v2161 = vadd.f32 0.0, %v2160
          %v2162 = vpop.f32.mrf.mxu0
          %v2163 = vadd.f32 0.0, %v2162
          %2164 = vmatprep.mubr.f32.mxu0 0.0
          %v2165 = vand.u32 %v794, 4294901760
          %v2166 = vsub.f32 %v794, %v2165
          %v2167 = vand.u32 %v2166, 4294901760
          %v2168 = vsub.f32 %v2166, %v2167
          %v2169 = vand.u32 %v2168, 4294901760
          %2170 = vmatmul.mubr.f32.gmra.mxu0 %v2169
          %v2171 = vpop.f32.mrf.mxu0
          %v2172 = vadd.f32 0.0, %v2171
          %v2173 = vpop.f32.mrf.mxu0
          %v2174 = vadd.f32 0.0, %v2173
          %2175 = vmatprep.mubr.f32.mxu0 0.0
          %v2176 = vand.u32 %v795, 4294901760
          %v2177 = vsub.f32 %v795, %v2176
          %v2178 = vand.u32 %v2177, 4294901760
          %v2179 = vsub.f32 %v2177, %v2178
          %v2180 = vand.u32 %v2179, 4294901760
          %2181 = vmatmul.mubr.f32.gmra.mxu0 %v2180
          %v2182 = vpop.f32.mrf.mxu0
          %v2183 = vadd.f32 0.0, %v2182
          %v2184 = vpop.f32.mrf.mxu0
          %v2185 = vadd.f32 0.0, %v2184
          %2186 = vdwg.mxu0
          %v2187 = vand.u32 %v755, 4294901760
          %v2188 = vsub.f32 %v755, %v2187
          %v2189 = vand.u32 %v2188, 4294901760
          %v2190 = vsub.f32 %v2188, %v2189
          %v2191 = vand.u32 %v2190, 4294901760
          %2192 = vmatprep.subr.mxu0 %v2191
          %v2193 = vand.u32 %v754, 4294901760
          %v2194 = vsub.f32 %v754, %v2193
          %v2195 = vand.u32 %v2194, 4294901760
          %v2196 = vsub.f32 %v2194, %v2195
          %v2197 = vand.u32 %v2196, 4294901760
          %2198 = vmatpush1.msra.mxu0 %v2197
          %v2199 = vand.u32 %v751, 4294901760
          %v2200 = vsub.f32 %v751, %v2199
          %v2201 = vand.u32 %v2200, 4294901760
          %v2202 = vsub.f32 %v2200, %v2201
          %v2203 = vand.u32 %v2202, 4294901760
          %2204 = vmatprep.subr.mxu0 %v2203
          %v2205 = vand.u32 %v750, 4294901760
          %v2206 = vsub.f32 %v750, %v2205
          %v2207 = vand.u32 %v2206, 4294901760
          %v2208 = vsub.f32 %v2206, %v2207
          %v2209 = vand.u32 %v2208, 4294901760
          %2210 = vmatpush1.msra.mxu0 %v2209
          %v2211 = vand.u32 %v747, 4294901760
          %v2212 = vsub.f32 %v747, %v2211
          %v2213 = vand.u32 %v2212, 4294901760
          %v2214 = vsub.f32 %v2212, %v2213
          %v2215 = vand.u32 %v2214, 4294901760
          %2216 = vmatprep.subr.mxu0 %v2215
          %v2217 = vand.u32 %v746, 4294901760
          %v2218 = vsub.f32 %v746, %v2217
          %v2219 = vand.u32 %v2218, 4294901760
          %v2220 = vsub.f32 %v2218, %v2219
          %v2221 = vand.u32 %v2220, 4294901760
          %2222 = vmatpush1.msra.mxu0 %v2221
          %v2223 = vand.u32 %v743, 4294901760
          %v2224 = vsub.f32 %v743, %v2223
          %v2225 = vand.u32 %v2224, 4294901760
          %v2226 = vsub.f32 %v2224, %v2225
          %v2227 = vand.u32 %v2226, 4294901760
          %2228 = vmatprep.subr.mxu0 %v2227
          %v2229 = vand.u32 %v742, 4294901760
          %v2230 = vsub.f32 %v742, %v2229
          %v2231 = vand.u32 %v2230, 4294901760
          %v2232 = vsub.f32 %v2230, %v2231
          %v2233 = vand.u32 %v2232, 4294901760
          %2234 = vmatpush1.msra.mxu0 %v2233
          %v2235 = vand.u32 %v739, 4294901760
          %v2236 = vsub.f32 %v739, %v2235
          %v2237 = vand.u32 %v2236, 4294901760
          %v2238 = vsub.f32 %v2236, %v2237
          %v2239 = vand.u32 %v2238, 4294901760
          %2240 = vmatprep.subr.mxu0 %v2239
          %v2241 = vand.u32 %v738, 4294901760
          %v2242 = vsub.f32 %v738, %v2241
          %v2243 = vand.u32 %v2242, 4294901760
          %v2244 = vsub.f32 %v2242, %v2243
          %v2245 = vand.u32 %v2244, 4294901760
          %2246 = vmatpush1.msra.mxu0 %v2245
          %v2247 = vand.u32 %v735, 4294901760
          %v2248 = vsub.f32 %v735, %v2247
          %v2249 = vand.u32 %v2248, 4294901760
          %v2250 = vsub.f32 %v2248, %v2249
          %v2251 = vand.u32 %v2250, 4294901760
          %2252 = vmatprep.subr.mxu0 %v2251
          %v2253 = vand.u32 %v734, 4294901760
          %v2254 = vsub.f32 %v734, %v2253
          %v2255 = vand.u32 %v2254, 4294901760
          %v2256 = vsub.f32 %v2254, %v2255
          %v2257 = vand.u32 %v2256, 4294901760
          %2258 = vmatpush1.msra.mxu0 %v2257
          %v2259 = vand.u32 %v731, 4294901760
          %v2260 = vsub.f32 %v731, %v2259
          %v2261 = vand.u32 %v2260, 4294901760
          %v2262 = vsub.f32 %v2260, %v2261
          %v2263 = vand.u32 %v2262, 4294901760
          %2264 = vmatprep.subr.mxu0 %v2263
          %v2265 = vand.u32 %v730, 4294901760
          %v2266 = vsub.f32 %v730, %v2265
          %v2267 = vand.u32 %v2266, 4294901760
          %v2268 = vsub.f32 %v2266, %v2267
          %v2269 = vand.u32 %v2268, 4294901760
          %2270 = vmatpush1.msra.mxu0 %v2269
          %v2271 = vand.u32 %v727, 4294901760
          %v2272 = vsub.f32 %v727, %v2271
          %v2273 = vand.u32 %v2272, 4294901760
          %v2274 = vsub.f32 %v2272, %v2273
          %v2275 = vand.u32 %v2274, 4294901760
          %2276 = vmatprep.subr.mxu0 %v2275
          %v2277 = vand.u32 %v726, 4294901760
          %v2278 = vsub.f32 %v726, %v2277
          %v2279 = vand.u32 %v2278, 4294901760
          %v2280 = vsub.f32 %v2278, %v2279
          %v2281 = vand.u32 %v2280, 4294901760
          %2282 = vmatpush1.msra.mxu0 %v2281
          %v2283 = vand.u32 %v723, 4294901760
          %v2284 = vsub.f32 %v723, %v2283
          %v2285 = vand.u32 %v2284, 4294901760
          %v2286 = vsub.f32 %v2284, %v2285
          %v2287 = vand.u32 %v2286, 4294901760
          %2288 = vmatprep.subr.mxu0 %v2287
          %v2289 = vand.u32 %v722, 4294901760
          %v2290 = vsub.f32 %v722, %v2289
          %v2291 = vand.u32 %v2290, 4294901760
          %v2292 = vsub.f32 %v2290, %v2291
          %v2293 = vand.u32 %v2292, 4294901760
          %2294 = vmatpush1.msra.mxu0 %v2293
          %v2295 = vand.u32 %v719, 4294901760
          %v2296 = vsub.f32 %v719, %v2295
          %v2297 = vand.u32 %v2296, 4294901760
          %v2298 = vsub.f32 %v2296, %v2297
          %v2299 = vand.u32 %v2298, 4294901760
          %2300 = vmatprep.subr.mxu0 %v2299
          %v2301 = vand.u32 %v718, 4294901760
          %v2302 = vsub.f32 %v718, %v2301
          %v2303 = vand.u32 %v2302, 4294901760
          %v2304 = vsub.f32 %v2302, %v2303
          %v2305 = vand.u32 %v2304, 4294901760
          %2306 = vmatpush1.msra.mxu0 %v2305
          %v2307 = vand.u32 %v715, 4294901760
          %v2308 = vsub.f32 %v715, %v2307
          %v2309 = vand.u32 %v2308, 4294901760
          %v2310 = vsub.f32 %v2308, %v2309
          %v2311 = vand.u32 %v2310, 4294901760
          %2312 = vmatprep.subr.mxu0 %v2311
          %v2313 = vand.u32 %v714, 4294901760
          %v2314 = vsub.f32 %v714, %v2313
          %v2315 = vand.u32 %v2314, 4294901760
          %v2316 = vsub.f32 %v2314, %v2315
          %v2317 = vand.u32 %v2316, 4294901760
          %2318 = vmatpush1.msra.mxu0 %v2317
          %v2319 = vand.u32 %v711, 4294901760
          %v2320 = vsub.f32 %v711, %v2319
          %v2321 = vand.u32 %v2320, 4294901760
          %v2322 = vsub.f32 %v2320, %v2321
          %v2323 = vand.u32 %v2322, 4294901760
          %2324 = vmatprep.subr.mxu0 %v2323
          %v2325 = vand.u32 %v710, 4294901760
          %v2326 = vsub.f32 %v710, %v2325
          %v2327 = vand.u32 %v2326, 4294901760
          %v2328 = vsub.f32 %v2326, %v2327
          %v2329 = vand.u32 %v2328, 4294901760
          %2330 = vmatpush1.msra.mxu0 %v2329
          %v2331 = vand.u32 %v707, 4294901760
          %v2332 = vsub.f32 %v707, %v2331
          %v2333 = vand.u32 %v2332, 4294901760
          %v2334 = vsub.f32 %v2332, %v2333
          %v2335 = vand.u32 %v2334, 4294901760
          %2336 = vmatprep.subr.mxu0 %v2335
          %v2337 = vand.u32 %v706, 4294901760
          %v2338 = vsub.f32 %v706, %v2337
          %v2339 = vand.u32 %v2338, 4294901760
          %v2340 = vsub.f32 %v2338, %v2339
          %v2341 = vand.u32 %v2340, 4294901760
          %2342 = vmatpush1.msra.mxu0 %v2341
          %v2343 = vand.u32 %v703, 4294901760
          %v2344 = vsub.f32 %v703, %v2343
          %v2345 = vand.u32 %v2344, 4294901760
          %v2346 = vsub.f32 %v2344, %v2345
          %v2347 = vand.u32 %v2346, 4294901760
          %2348 = vmatprep.subr.mxu0 %v2347
          %v2349 = vand.u32 %v702, 4294901760
          %v2350 = vsub.f32 %v702, %v2349
          %v2351 = vand.u32 %v2350, 4294901760
          %v2352 = vsub.f32 %v2350, %v2351
          %v2353 = vand.u32 %v2352, 4294901760
          %2354 = vmatpush1.msra.mxu0 %v2353
          %v2355 = vand.u32 %v699, 4294901760
          %v2356 = vsub.f32 %v699, %v2355
          %v2357 = vand.u32 %v2356, 4294901760
          %v2358 = vsub.f32 %v2356, %v2357
          %v2359 = vand.u32 %v2358, 4294901760
          %2360 = vmatprep.subr.mxu0 %v2359
          %v2361 = vand.u32 %v698, 4294901760
          %v2362 = vsub.f32 %v698, %v2361
          %v2363 = vand.u32 %v2362, 4294901760
          %v2364 = vsub.f32 %v2362, %v2363
          %v2365 = vand.u32 %v2364, 4294901760
          %2366 = vmatpush1.msra.mxu0 %v2365
          %v2367 = vand.u32 %v695, 4294901760
          %v2368 = vsub.f32 %v695, %v2367
          %v2369 = vand.u32 %v2368, 4294901760
          %v2370 = vsub.f32 %v2368, %v2369
          %v2371 = vand.u32 %v2370, 4294901760
          %2372 = vmatprep.subr.mxu0 %v2371
          %v2373 = vand.u32 %v694, 4294901760
          %v2374 = vsub.f32 %v694, %v2373
          %v2375 = vand.u32 %v2374, 4294901760
          %v2376 = vsub.f32 %v2374, %v2375
          %v2377 = vand.u32 %v2376, 4294901760
          %2378 = vmatpush1.msra.mxu0 %v2377
          %2379 = vmatprep.subr.mxu0 0.0
          %2380 = vmatpush2.msra.mxu0 0.0
          %2381 = vmatprep.subr.mxu0 0.0
          %2382 = vmatpush2.msra.mxu0 0.0
          %2383 = vmatprep.subr.mxu0 0.0
          %2384 = vmatpush2.msra.mxu0 0.0
          %2385 = vmatprep.subr.mxu0 0.0
          %2386 = vmatpush2.msra.mxu0 0.0
          %2387 = vmatprep.subr.mxu0 0.0
          %2388 = vmatpush2.msra.mxu0 0.0
          %2389 = vmatprep.subr.mxu0 0.0
          %2390 = vmatpush2.msra.mxu0 0.0
          %2391 = vmatprep.subr.mxu0 0.0
          %2392 = vmatpush2.msra.mxu0 0.0
          %2393 = vmatprep.subr.mxu0 0.0
          %2394 = vmatpush2.msra.mxu0 0.0
          %2395 = vmatprep.subr.mxu0 0.0
          %2396 = vmatpush2.msra.mxu0 0.0
          %2397 = vmatprep.subr.mxu0 0.0
          %2398 = vmatpush2.msra.mxu0 0.0
          %2399 = vmatprep.subr.mxu0 0.0
          %2400 = vmatpush2.msra.mxu0 0.0
          %2401 = vmatprep.subr.mxu0 0.0
          %2402 = vmatpush2.msra.mxu0 0.0
          %2403 = vmatprep.subr.mxu0 0.0
          %2404 = vmatpush2.msra.mxu0 0.0
          %2405 = vmatprep.subr.mxu0 0.0
          %2406 = vmatpush2.msra.mxu0 0.0
          %2407 = vmatprep.subr.mxu0 0.0
          %2408 = vmatpush2.msra.mxu0 0.0
          %2409 = vmatprep.subr.mxu0 0.0
          %2410 = vmatpush2.msra.mxu0 0.0
          %2411 = vmatprep.mubr.f32.mxu0 0.0
          %v2412 = vand.u32 %v788, 4294901760
          %2413 = vmatmul.mubr.f32.gmra.mxu0 %v2412
          %v2414 = vpop.f32.mrf.mxu0
          %v2415 = vadd.f32 %v2106, %v2414
          %v2416 = vpop.f32.mrf.mxu0
          %v2417 = vadd.f32 %v2108, %v2416
          %2418 = vmatprep.mubr.f32.mxu0 0.0
          %v2419 = vand.u32 %v789, 4294901760
          %2420 = vmatmul.mubr.f32.gmra.mxu0 %v2419
          %v2421 = vpop.f32.mrf.mxu0
          %v2422 = vadd.f32 %v2117, %v2421
          %v2423 = vpop.f32.mrf.mxu0
          %v2424 = vadd.f32 %v2119, %v2423
          %2425 = vmatprep.mubr.f32.mxu0 0.0
          %v2426 = vand.u32 %v790, 4294901760
          %2427 = vmatmul.mubr.f32.gmra.mxu0 %v2426
          %v2428 = vpop.f32.mrf.mxu0
          %v2429 = vadd.f32 %v2128, %v2428
          %v2430 = vpop.f32.mrf.mxu0
          %v2431 = vadd.f32 %v2130, %v2430
          %2432 = vmatprep.mubr.f32.mxu0 0.0
          %v2433 = vand.u32 %v791, 4294901760
          %2434 = vmatmul.mubr.f32.gmra.mxu0 %v2433
          %v2435 = vpop.f32.mrf.mxu0
          %v2436 = vadd.f32 %v2139, %v2435
          %v2437 = vpop.f32.mrf.mxu0
          %v2438 = vadd.f32 %v2141, %v2437
          %2439 = vmatprep.mubr.f32.mxu0 0.0
          %v2440 = vand.u32 %v792, 4294901760
          %2441 = vmatmul.mubr.f32.gmra.mxu0 %v2440
          %v2442 = vpop.f32.mrf.mxu0
          %v2443 = vadd.f32 %v2150, %v2442
          %v2444 = vpop.f32.mrf.mxu0
          %v2445 = vadd.f32 %v2152, %v2444
          %2446 = vmatprep.mubr.f32.mxu0 0.0
          %v2447 = vand.u32 %v793, 4294901760
          %2448 = vmatmul.mubr.f32.gmra.mxu0 %v2447
          %v2449 = vpop.f32.mrf.mxu0
          %v2450 = vadd.f32 %v2161, %v2449
          %v2451 = vpop.f32.mrf.mxu0
          %v2452 = vadd.f32 %v2163, %v2451
          %2453 = vmatprep.mubr.f32.mxu0 0.0
          %v2454 = vand.u32 %v794, 4294901760
          %2455 = vmatmul.mubr.f32.gmra.mxu0 %v2454
          %v2456 = vpop.f32.mrf.mxu0
          %v2457 = vadd.f32 %v2172, %v2456
          %v2458 = vpop.f32.mrf.mxu0
          %v2459 = vadd.f32 %v2174, %v2458
          %2460 = vmatprep.mubr.f32.mxu0 0.0
          %v2461 = vand.u32 %v795, 4294901760
          %2462 = vmatmul.mubr.f32.gmra.mxu0 %v2461
          %v2463 = vpop.f32.mrf.mxu0
          %v2464 = vadd.f32 %v2183, %v2463
          %v2465 = vpop.f32.mrf.mxu0
          %v2466 = vadd.f32 %v2185, %v2465
          %2467 = vdwg.mxu0
          %v2468 = vand.u32 %v755, 4294901760
          %v2469 = vsub.f32 %v755, %v2468
          %2470 = vmatprep.subr.mxu0 %v2469
          %v2471 = vand.u32 %v754, 4294901760
          %v2472 = vsub.f32 %v754, %v2471
          %2473 = vmatpush1.msra.mxu0 %v2472
          %v2474 = vand.u32 %v751, 4294901760
          %v2475 = vsub.f32 %v751, %v2474
          %2476 = vmatprep.subr.mxu0 %v2475
          %v2477 = vand.u32 %v750, 4294901760
          %v2478 = vsub.f32 %v750, %v2477
          %2479 = vmatpush1.msra.mxu0 %v2478
          %v2480 = vand.u32 %v747, 4294901760
          %v2481 = vsub.f32 %v747, %v2480
          %2482 = vmatprep.subr.mxu0 %v2481
          %v2483 = vand.u32 %v746, 4294901760
          %v2484 = vsub.f32 %v746, %v2483
          %2485 = vmatpush1.msra.mxu0 %v2484
          %v2486 = vand.u32 %v743, 4294901760
          %v2487 = vsub.f32 %v743, %v2486
          %2488 = vmatprep.subr.mxu0 %v2487
          %v2489 = vand.u32 %v742, 4294901760
          %v2490 = vsub.f32 %v742, %v2489
          %2491 = vmatpush1.msra.mxu0 %v2490
          %v2492 = vand.u32 %v739, 4294901760
          %v2493 = vsub.f32 %v739, %v2492
          %2494 = vmatprep.subr.mxu0 %v2493
          %v2495 = vand.u32 %v738, 4294901760
          %v2496 = vsub.f32 %v738, %v2495
          %2497 = vmatpush1.msra.mxu0 %v2496
          %v2498 = vand.u32 %v735, 4294901760
          %v2499 = vsub.f32 %v735, %v2498
          %2500 = vmatprep.subr.mxu0 %v2499
          %v2501 = vand.u32 %v734, 4294901760
          %v2502 = vsub.f32 %v734, %v2501
          %2503 = vmatpush1.msra.mxu0 %v2502
          %v2504 = vand.u32 %v731, 4294901760
          %v2505 = vsub.f32 %v731, %v2504
          %2506 = vmatprep.subr.mxu0 %v2505
          %v2507 = vand.u32 %v730, 4294901760
          %v2508 = vsub.f32 %v730, %v2507
          %2509 = vmatpush1.msra.mxu0 %v2508
          %v2510 = vand.u32 %v727, 4294901760
          %v2511 = vsub.f32 %v727, %v2510
          %2512 = vmatprep.subr.mxu0 %v2511
          %v2513 = vand.u32 %v726, 4294901760
          %v2514 = vsub.f32 %v726, %v2513
          %2515 = vmatpush1.msra.mxu0 %v2514
          %v2516 = vand.u32 %v723, 4294901760
          %v2517 = vsub.f32 %v723, %v2516
          %2518 = vmatprep.subr.mxu0 %v2517
          %v2519 = vand.u32 %v722, 4294901760
          %v2520 = vsub.f32 %v722, %v2519
          %2521 = vmatpush1.msra.mxu0 %v2520
          %v2522 = vand.u32 %v719, 4294901760
          %v2523 = vsub.f32 %v719, %v2522
          %2524 = vmatprep.subr.mxu0 %v2523
          %v2525 = vand.u32 %v718, 4294901760
          %v2526 = vsub.f32 %v718, %v2525
          %2527 = vmatpush1.msra.mxu0 %v2526
          %v2528 = vand.u32 %v715, 4294901760
          %v2529 = vsub.f32 %v715, %v2528
          %2530 = vmatprep.subr.mxu0 %v2529
          %v2531 = vand.u32 %v714, 4294901760
          %v2532 = vsub.f32 %v714, %v2531
          %2533 = vmatpush1.msra.mxu0 %v2532
          %v2534 = vand.u32 %v711, 4294901760
          %v2535 = vsub.f32 %v711, %v2534
          %2536 = vmatprep.subr.mxu0 %v2535
          %v2537 = vand.u32 %v710, 4294901760
          %v2538 = vsub.f32 %v710, %v2537
          %2539 = vmatpush1.msra.mxu0 %v2538
          %v2540 = vand.u32 %v707, 4294901760
          %v2541 = vsub.f32 %v707, %v2540
          %2542 = vmatprep.subr.mxu0 %v2541
          %v2543 = vand.u32 %v706, 4294901760
          %v2544 = vsub.f32 %v706, %v2543
          %2545 = vmatpush1.msra.mxu0 %v2544
          %v2546 = vand.u32 %v703, 4294901760
          %v2547 = vsub.f32 %v703, %v2546
          %2548 = vmatprep.subr.mxu0 %v2547
          %v2549 = vand.u32 %v702, 4294901760
          %v2550 = vsub.f32 %v702, %v2549
          %2551 = vmatpush1.msra.mxu0 %v2550
          %v2552 = vand.u32 %v699, 4294901760
          %v2553 = vsub.f32 %v699, %v2552
          %2554 = vmatprep.subr.mxu0 %v2553
          %v2555 = vand.u32 %v698, 4294901760
          %v2556 = vsub.f32 %v698, %v2555
          %2557 = vmatpush1.msra.mxu0 %v2556
          %v2558 = vand.u32 %v695, 4294901760
          %v2559 = vsub.f32 %v695, %v2558
          %2560 = vmatprep.subr.mxu0 %v2559
          %v2561 = vand.u32 %v694, 4294901760
          %v2562 = vsub.f32 %v694, %v2561
          %2563 = vmatpush1.msra.mxu0 %v2562
          %2564 = vmatprep.subr.mxu0 0.0
          %2565 = vmatpush2.msra.mxu0 0.0
          %2566 = vmatprep.subr.mxu0 0.0
          %2567 = vmatpush2.msra.mxu0 0.0
          %2568 = vmatprep.subr.mxu0 0.0
          %2569 = vmatpush2.msra.mxu0 0.0
          %2570 = vmatprep.subr.mxu0 0.0
          %2571 = vmatpush2.msra.mxu0 0.0
          %2572 = vmatprep.subr.mxu0 0.0
          %2573 = vmatpush2.msra.mxu0 0.0
          %2574 = vmatprep.subr.mxu0 0.0
          %2575 = vmatpush2.msra.mxu0 0.0
          %2576 = vmatprep.subr.mxu0 0.0
          %2577 = vmatpush2.msra.mxu0 0.0
          %2578 = vmatprep.subr.mxu0 0.0
          %2579 = vmatpush2.msra.mxu0 0.0
          %2580 = vmatprep.subr.mxu0 0.0
          %2581 = vmatpush2.msra.mxu0 0.0
          %2582 = vmatprep.subr.mxu0 0.0
          %2583 = vmatpush2.msra.mxu0 0.0
          %2584 = vmatprep.subr.mxu0 0.0
          %2585 = vmatpush2.msra.mxu0 0.0
          %2586 = vmatprep.subr.mxu0 0.0
          %2587 = vmatpush2.msra.mxu0 0.0
          %2588 = vmatprep.subr.mxu0 0.0
          %2589 = vmatpush2.msra.mxu0 0.0
          %2590 = vmatprep.subr.mxu0 0.0
          %2591 = vmatpush2.msra.mxu0 0.0
          %2592 = vmatprep.subr.mxu0 0.0
          %2593 = vmatpush2.msra.mxu0 0.0
          %2594 = vmatprep.subr.mxu0 0.0
          %2595 = vmatpush2.msra.mxu0 0.0
          %2596 = vmatprep.mubr.f32.mxu0 0.0
          %v2597 = vand.u32 %v788, 4294901760
          %v2598 = vsub.f32 %v788, %v2597
          %2599 = vmatmul.mubr.f32.gmra.mxu0 %v2598
          %v2600 = vpop.f32.mrf.mxu0
          %v2601 = vadd.f32 %v2415, %v2600
          %v2602 = vpop.f32.mrf.mxu0
          %v2603 = vadd.f32 %v2417, %v2602
          %2604 = vmatprep.mubr.f32.mxu0 0.0
          %v2605 = vand.u32 %v789, 4294901760
          %v2606 = vsub.f32 %v789, %v2605
          %2607 = vmatmul.mubr.f32.gmra.mxu0 %v2606
          %v2608 = vpop.f32.mrf.mxu0
          %v2609 = vadd.f32 %v2422, %v2608
          %v2610 = vpop.f32.mrf.mxu0
          %v2611 = vadd.f32 %v2424, %v2610
          %2612 = vmatprep.mubr.f32.mxu0 0.0
          %v2613 = vand.u32 %v790, 4294901760
          %v2614 = vsub.f32 %v790, %v2613
          %2615 = vmatmul.mubr.f32.gmra.mxu0 %v2614
          %v2616 = vpop.f32.mrf.mxu0
          %v2617 = vadd.f32 %v2429, %v2616
          %v2618 = vpop.f32.mrf.mxu0
          %v2619 = vadd.f32 %v2431, %v2618
          %2620 = vmatprep.mubr.f32.mxu0 0.0
          %v2621 = vand.u32 %v791, 4294901760
          %v2622 = vsub.f32 %v791, %v2621
          %2623 = vmatmul.mubr.f32.gmra.mxu0 %v2622
          %v2624 = vpop.f32.mrf.mxu0
          %v2625 = vadd.f32 %v2436, %v2624
          %v2626 = vpop.f32.mrf.mxu0
          %v2627 = vadd.f32 %v2438, %v2626
          %2628 = vmatprep.mubr.f32.mxu0 0.0
          %v2629 = vand.u32 %v792, 4294901760
          %v2630 = vsub.f32 %v792, %v2629
          %2631 = vmatmul.mubr.f32.gmra.mxu0 %v2630
          %v2632 = vpop.f32.mrf.mxu0
          %v2633 = vadd.f32 %v2443, %v2632
          %v2634 = vpop.f32.mrf.mxu0
          %v2635 = vadd.f32 %v2445, %v2634
          %2636 = vmatprep.mubr.f32.mxu0 0.0
          %v2637 = vand.u32 %v793, 4294901760
          %v2638 = vsub.f32 %v793, %v2637
          %2639 = vmatmul.mubr.f32.gmra.mxu0 %v2638
          %v2640 = vpop.f32.mrf.mxu0
          %v2641 = vadd.f32 %v2450, %v2640
          %v2642 = vpop.f32.mrf.mxu0
          %v2643 = vadd.f32 %v2452, %v2642
          %2644 = vmatprep.mubr.f32.mxu0 0.0
          %v2645 = vand.u32 %v794, 4294901760
          %v2646 = vsub.f32 %v794, %v2645
          %2647 = vmatmul.mubr.f32.gmra.mxu0 %v2646
          %v2648 = vpop.f32.mrf.mxu0
          %v2649 = vadd.f32 %v2457, %v2648
          %v2650 = vpop.f32.mrf.mxu0
          %v2651 = vadd.f32 %v2459, %v2650
          %2652 = vmatprep.mubr.f32.mxu0 0.0
          %v2653 = vand.u32 %v795, 4294901760
          %v2654 = vsub.f32 %v795, %v2653
          %2655 = vmatmul.mubr.f32.gmra.mxu0 %v2654
          %v2656 = vpop.f32.mrf.mxu0
          %v2657 = vadd.f32 %v2464, %v2656
          %v2658 = vpop.f32.mrf.mxu0
          %v2659 = vadd.f32 %v2466, %v2658
          %2660 = vdwg.mxu0
          %v2661 = vand.u32 %v755, 4294901760
          %2662 = vmatprep.subr.mxu0 %v2661
          %v2663 = vand.u32 %v754, 4294901760
          %2664 = vmatpush1.msra.mxu0 %v2663
          %v2665 = vand.u32 %v751, 4294901760
          %2666 = vmatprep.subr.mxu0 %v2665
          %v2667 = vand.u32 %v750, 4294901760
          %2668 = vmatpush1.msra.mxu0 %v2667
          %v2669 = vand.u32 %v747, 4294901760
          %2670 = vmatprep.subr.mxu0 %v2669
          %v2671 = vand.u32 %v746, 4294901760
          %2672 = vmatpush1.msra.mxu0 %v2671
          %v2673 = vand.u32 %v743, 4294901760
          %2674 = vmatprep.subr.mxu0 %v2673
          %v2675 = vand.u32 %v742, 4294901760
          %2676 = vmatpush1.msra.mxu0 %v2675
          %v2677 = vand.u32 %v739, 4294901760
          %2678 = vmatprep.subr.mxu0 %v2677
          %v2679 = vand.u32 %v738, 4294901760
          %2680 = vmatpush1.msra.mxu0 %v2679
          %v2681 = vand.u32 %v735, 4294901760
          %2682 = vmatprep.subr.mxu0 %v2681
          %v2683 = vand.u32 %v734, 4294901760
          %2684 = vmatpush1.msra.mxu0 %v2683
          %v2685 = vand.u32 %v731, 4294901760
          %2686 = vmatprep.subr.mxu0 %v2685
          %v2687 = vand.u32 %v730, 4294901760
          %2688 = vmatpush1.msra.mxu0 %v2687
          %v2689 = vand.u32 %v727, 4294901760
          %2690 = vmatprep.subr.mxu0 %v2689
          %v2691 = vand.u32 %v726, 4294901760
          %2692 = vmatpush1.msra.mxu0 %v2691
          %v2693 = vand.u32 %v723, 4294901760
          %2694 = vmatprep.subr.mxu0 %v2693
          %v2695 = vand.u32 %v722, 4294901760
          %2696 = vmatpush1.msra.mxu0 %v2695
          %v2697 = vand.u32 %v719, 4294901760
          %2698 = vmatprep.subr.mxu0 %v2697
          %v2699 = vand.u32 %v718, 4294901760
          %2700 = vmatpush1.msra.mxu0 %v2699
          %v2701 = vand.u32 %v715, 4294901760
          %2702 = vmatprep.subr.mxu0 %v2701
          %v2703 = vand.u32 %v714, 4294901760
          %2704 = vmatpush1.msra.mxu0 %v2703
          %v2705 = vand.u32 %v711, 4294901760
          %2706 = vmatprep.subr.mxu0 %v2705
          %v2707 = vand.u32 %v710, 4294901760
          %2708 = vmatpush1.msra.mxu0 %v2707
          %v2709 = vand.u32 %v707, 4294901760
          %2710 = vmatprep.subr.mxu0 %v2709
          %v2711 = vand.u32 %v706, 4294901760
          %2712 = vmatpush1.msra.mxu0 %v2711
          %v2713 = vand.u32 %v703, 4294901760
          %2714 = vmatprep.subr.mxu0 %v2713
          %v2715 = vand.u32 %v702, 4294901760
          %2716 = vmatpush1.msra.mxu0 %v2715
          %v2717 = vand.u32 %v699, 4294901760
          %2718 = vmatprep.subr.mxu0 %v2717
          %v2719 = vand.u32 %v698, 4294901760
          %2720 = vmatpush1.msra.mxu0 %v2719
          %v2721 = vand.u32 %v695, 4294901760
          %2722 = vmatprep.subr.mxu0 %v2721
          %v2723 = vand.u32 %v694, 4294901760
          %2724 = vmatpush1.msra.mxu0 %v2723
          %2725 = vmatprep.subr.mxu0 0.0
          %2726 = vmatpush2.msra.mxu0 0.0
          %2727 = vmatprep.subr.mxu0 0.0
          %2728 = vmatpush2.msra.mxu0 0.0
          %2729 = vmatprep.subr.mxu0 0.0
          %2730 = vmatpush2.msra.mxu0 0.0
          %2731 = vmatprep.subr.mxu0 0.0
          %2732 = vmatpush2.msra.mxu0 0.0
          %2733 = vmatprep.subr.mxu0 0.0
          %2734 = vmatpush2.msra.mxu0 0.0
          %2735 = vmatprep.subr.mxu0 0.0
          %2736 = vmatpush2.msra.mxu0 0.0
          %2737 = vmatprep.subr.mxu0 0.0
          %2738 = vmatpush2.msra.mxu0 0.0
          %2739 = vmatprep.subr.mxu0 0.0
          %2740 = vmatpush2.msra.mxu0 0.0
          %2741 = vmatprep.subr.mxu0 0.0
          %2742 = vmatpush2.msra.mxu0 0.0
          %2743 = vmatprep.subr.mxu0 0.0
          %2744 = vmatpush2.msra.mxu0 0.0
          %2745 = vmatprep.subr.mxu0 0.0
          %2746 = vmatpush2.msra.mxu0 0.0
          %2747 = vmatprep.subr.mxu0 0.0
          %2748 = vmatpush2.msra.mxu0 0.0
          %2749 = vmatprep.subr.mxu0 0.0
          %2750 = vmatpush2.msra.mxu0 0.0
          %2751 = vmatprep.subr.mxu0 0.0
          %2752 = vmatpush2.msra.mxu0 0.0
          %2753 = vmatprep.subr.mxu0 0.0
          %2754 = vmatpush2.msra.mxu0 0.0
          %2755 = vmatprep.subr.mxu0 0.0
          %2756 = vmatpush2.msra.mxu0 0.0
          %2757 = vmatprep.mubr.f32.mxu0 0.0
          %v2758 = vand.u32 %v788, 4294901760
          %v2759 = vsub.f32 %v788, %v2758
          %v2760 = vand.u32 %v2759, 4294901760
          %2761 = vmatmul.mubr.f32.gmra.mxu0 %v2760
          %v2762 = vpop.f32.mrf.mxu0
          %v2763 = vadd.f32 %v2601, %v2762
          %v2764 = vpop.f32.mrf.mxu0
          %v2765 = vadd.f32 %v2603, %v2764
          %2766 = vmatprep.mubr.f32.mxu0 0.0
          %v2767 = vand.u32 %v789, 4294901760
          %v2768 = vsub.f32 %v789, %v2767
          %v2769 = vand.u32 %v2768, 4294901760
          %2770 = vmatmul.mubr.f32.gmra.mxu0 %v2769
          %v2771 = vpop.f32.mrf.mxu0
          %v2772 = vadd.f32 %v2609, %v2771
          %v2773 = vpop.f32.mrf.mxu0
          %v2774 = vadd.f32 %v2611, %v2773
          %2775 = vmatprep.mubr.f32.mxu0 0.0
          %v2776 = vand.u32 %v790, 4294901760
          %v2777 = vsub.f32 %v790, %v2776
          %v2778 = vand.u32 %v2777, 4294901760
          %2779 = vmatmul.mubr.f32.gmra.mxu0 %v2778
          %v2780 = vpop.f32.mrf.mxu0
          %v2781 = vadd.f32 %v2617, %v2780
          %v2782 = vpop.f32.mrf.mxu0
          %v2783 = vadd.f32 %v2619, %v2782
          %2784 = vmatprep.mubr.f32.mxu0 0.0
          %v2785 = vand.u32 %v791, 4294901760
          %v2786 = vsub.f32 %v791, %v2785
          %v2787 = vand.u32 %v2786, 4294901760
          %2788 = vmatmul.mubr.f32.gmra.mxu0 %v2787
          %v2789 = vpop.f32.mrf.mxu0
          %v2790 = vadd.f32 %v2625, %v2789
          %v2791 = vpop.f32.mrf.mxu0
          %v2792 = vadd.f32 %v2627, %v2791
          %2793 = vmatprep.mubr.f32.mxu0 0.0
          %v2794 = vand.u32 %v792, 4294901760
          %v2795 = vsub.f32 %v792, %v2794
          %v2796 = vand.u32 %v2795, 4294901760
          %2797 = vmatmul.mubr.f32.gmra.mxu0 %v2796
          %v2798 = vpop.f32.mrf.mxu0
          %v2799 = vadd.f32 %v2633, %v2798
          %v2800 = vpop.f32.mrf.mxu0
          %v2801 = vadd.f32 %v2635, %v2800
          %2802 = vmatprep.mubr.f32.mxu0 0.0
          %v2803 = vand.u32 %v793, 4294901760
          %v2804 = vsub.f32 %v793, %v2803
          %v2805 = vand.u32 %v2804, 4294901760
          %2806 = vmatmul.mubr.f32.gmra.mxu0 %v2805
          %v2807 = vpop.f32.mrf.mxu0
          %v2808 = vadd.f32 %v2641, %v2807
          %v2809 = vpop.f32.mrf.mxu0
          %v2810 = vadd.f32 %v2643, %v2809
          %2811 = vmatprep.mubr.f32.mxu0 0.0
          %v2812 = vand.u32 %v794, 4294901760
          %v2813 = vsub.f32 %v794, %v2812
          %v2814 = vand.u32 %v2813, 4294901760
          %2815 = vmatmul.mubr.f32.gmra.mxu0 %v2814
          %v2816 = vpop.f32.mrf.mxu0
          %v2817 = vadd.f32 %v2649, %v2816
          %v2818 = vpop.f32.mrf.mxu0
          %v2819 = vadd.f32 %v2651, %v2818
          %2820 = vmatprep.mubr.f32.mxu0 0.0
          %v2821 = vand.u32 %v795, 4294901760
          %v2822 = vsub.f32 %v795, %v2821
          %v2823 = vand.u32 %v2822, 4294901760
          %2824 = vmatmul.mubr.f32.gmra.mxu0 %v2823
          %v2825 = vpop.f32.mrf.mxu0
          %v2826 = vadd.f32 %v2657, %v2825
          %v2827 = vpop.f32.mrf.mxu0
          %v2828 = vadd.f32 %v2659, %v2827
          %2829 = vdwg.mxu0
          %v2830 = vand.u32 %v755, 4294901760
          %v2831 = vsub.f32 %v755, %v2830
          %v2832 = vand.u32 %v2831, 4294901760
          %2833 = vmatprep.subr.mxu0 %v2832
          %v2834 = vand.u32 %v754, 4294901760
          %v2835 = vsub.f32 %v754, %v2834
          %v2836 = vand.u32 %v2835, 4294901760
          %2837 = vmatpush1.msra.mxu0 %v2836
          %v2838 = vand.u32 %v751, 4294901760
          %v2839 = vsub.f32 %v751, %v2838
          %v2840 = vand.u32 %v2839, 4294901760
          %2841 = vmatprep.subr.mxu0 %v2840
          %v2842 = vand.u32 %v750, 4294901760
          %v2843 = vsub.f32 %v750, %v2842
          %v2844 = vand.u32 %v2843, 4294901760
          %2845 = vmatpush1.msra.mxu0 %v2844
          %v2846 = vand.u32 %v747, 4294901760
          %v2847 = vsub.f32 %v747, %v2846
          %v2848 = vand.u32 %v2847, 4294901760
          %2849 = vmatprep.subr.mxu0 %v2848
          %v2850 = vand.u32 %v746, 4294901760
          %v2851 = vsub.f32 %v746, %v2850
          %v2852 = vand.u32 %v2851, 4294901760
          %2853 = vmatpush1.msra.mxu0 %v2852
          %v2854 = vand.u32 %v743, 4294901760
          %v2855 = vsub.f32 %v743, %v2854
          %v2856 = vand.u32 %v2855, 4294901760
          %2857 = vmatprep.subr.mxu0 %v2856
          %v2858 = vand.u32 %v742, 4294901760
          %v2859 = vsub.f32 %v742, %v2858
          %v2860 = vand.u32 %v2859, 4294901760
          %2861 = vmatpush1.msra.mxu0 %v2860
          %v2862 = vand.u32 %v739, 4294901760
          %v2863 = vsub.f32 %v739, %v2862
          %v2864 = vand.u32 %v2863, 4294901760
          %2865 = vmatprep.subr.mxu0 %v2864
          %v2866 = vand.u32 %v738, 4294901760
          %v2867 = vsub.f32 %v738, %v2866
          %v2868 = vand.u32 %v2867, 4294901760
          %2869 = vmatpush1.msra.mxu0 %v2868
          %v2870 = vand.u32 %v735, 4294901760
          %v2871 = vsub.f32 %v735, %v2870
          %v2872 = vand.u32 %v2871, 4294901760
          %2873 = vmatprep.subr.mxu0 %v2872
          %v2874 = vand.u32 %v734, 4294901760
          %v2875 = vsub.f32 %v734, %v2874
          %v2876 = vand.u32 %v2875, 4294901760
          %2877 = vmatpush1.msra.mxu0 %v2876
          %v2878 = vand.u32 %v731, 4294901760
          %v2879 = vsub.f32 %v731, %v2878
          %v2880 = vand.u32 %v2879, 4294901760
          %2881 = vmatprep.subr.mxu0 %v2880
          %v2882 = vand.u32 %v730, 4294901760
          %v2883 = vsub.f32 %v730, %v2882
          %v2884 = vand.u32 %v2883, 4294901760
          %2885 = vmatpush1.msra.mxu0 %v2884
          %v2886 = vand.u32 %v727, 4294901760
          %v2887 = vsub.f32 %v727, %v2886
          %v2888 = vand.u32 %v2887, 4294901760
          %2889 = vmatprep.subr.mxu0 %v2888
          %v2890 = vand.u32 %v726, 4294901760
          %v2891 = vsub.f32 %v726, %v2890
          %v2892 = vand.u32 %v2891, 4294901760
          %2893 = vmatpush1.msra.mxu0 %v2892
          %v2894 = vand.u32 %v723, 4294901760
          %v2895 = vsub.f32 %v723, %v2894
          %v2896 = vand.u32 %v2895, 4294901760
          %2897 = vmatprep.subr.mxu0 %v2896
          %v2898 = vand.u32 %v722, 4294901760
          %v2899 = vsub.f32 %v722, %v2898
          %v2900 = vand.u32 %v2899, 4294901760
          %2901 = vmatpush1.msra.mxu0 %v2900
          %v2902 = vand.u32 %v719, 4294901760
          %v2903 = vsub.f32 %v719, %v2902
          %v2904 = vand.u32 %v2903, 4294901760
          %2905 = vmatprep.subr.mxu0 %v2904
          %v2906 = vand.u32 %v718, 4294901760
          %v2907 = vsub.f32 %v718, %v2906
          %v2908 = vand.u32 %v2907, 4294901760
          %2909 = vmatpush1.msra.mxu0 %v2908
          %v2910 = vand.u32 %v715, 4294901760
          %v2911 = vsub.f32 %v715, %v2910
          %v2912 = vand.u32 %v2911, 4294901760
          %2913 = vmatprep.subr.mxu0 %v2912
          %v2914 = vand.u32 %v714, 4294901760
          %v2915 = vsub.f32 %v714, %v2914
          %v2916 = vand.u32 %v2915, 4294901760
          %2917 = vmatpush1.msra.mxu0 %v2916
          %v2918 = vand.u32 %v711, 4294901760
          %v2919 = vsub.f32 %v711, %v2918
          %v2920 = vand.u32 %v2919, 4294901760
          %2921 = vmatprep.subr.mxu0 %v2920
          %v2922 = vand.u32 %v710, 4294901760
          %v2923 = vsub.f32 %v710, %v2922
          %v2924 = vand.u32 %v2923, 4294901760
          %2925 = vmatpush1.msra.mxu0 %v2924
          %v2926 = vand.u32 %v707, 4294901760
          %v2927 = vsub.f32 %v707, %v2926
          %v2928 = vand.u32 %v2927, 4294901760
          %2929 = vmatprep.subr.mxu0 %v2928
          %v2930 = vand.u32 %v706, 4294901760
          %v2931 = vsub.f32 %v706, %v2930
          %v2932 = vand.u32 %v2931, 4294901760
          %2933 = vmatpush1.msra.mxu0 %v2932
          %v2934 = vand.u32 %v703, 4294901760
          %v2935 = vsub.f32 %v703, %v2934
          %v2936 = vand.u32 %v2935, 4294901760
          %2937 = vmatprep.subr.mxu0 %v2936
          %v2938 = vand.u32 %v702, 4294901760
          %v2939 = vsub.f32 %v702, %v2938
          %v2940 = vand.u32 %v2939, 4294901760
          %2941 = vmatpush1.msra.mxu0 %v2940
          %v2942 = vand.u32 %v699, 4294901760
          %v2943 = vsub.f32 %v699, %v2942
          %v2944 = vand.u32 %v2943, 4294901760
          %2945 = vmatprep.subr.mxu0 %v2944
          %v2946 = vand.u32 %v698, 4294901760
          %v2947 = vsub.f32 %v698, %v2946
          %v2948 = vand.u32 %v2947, 4294901760
          %2949 = vmatpush1.msra.mxu0 %v2948
          %v2950 = vand.u32 %v695, 4294901760
          %v2951 = vsub.f32 %v695, %v2950
          %v2952 = vand.u32 %v2951, 4294901760
          %2953 = vmatprep.subr.mxu0 %v2952
          %v2954 = vand.u32 %v694, 4294901760
          %v2955 = vsub.f32 %v694, %v2954
          %v2956 = vand.u32 %v2955, 4294901760
          %2957 = vmatpush1.msra.mxu0 %v2956
          %2958 = vmatprep.subr.mxu0 0.0
          %2959 = vmatpush2.msra.mxu0 0.0
          %2960 = vmatprep.subr.mxu0 0.0
          %2961 = vmatpush2.msra.mxu0 0.0
          %2962 = vmatprep.subr.mxu0 0.0
          %2963 = vmatpush2.msra.mxu0 0.0
          %2964 = vmatprep.subr.mxu0 0.0
          %2965 = vmatpush2.msra.mxu0 0.0
          %2966 = vmatprep.subr.mxu0 0.0
          %2967 = vmatpush2.msra.mxu0 0.0
          %2968 = vmatprep.subr.mxu0 0.0
          %2969 = vmatpush2.msra.mxu0 0.0
          %2970 = vmatprep.subr.mxu0 0.0
          %2971 = vmatpush2.msra.mxu0 0.0
          %2972 = vmatprep.subr.mxu0 0.0
          %2973 = vmatpush2.msra.mxu0 0.0
          %2974 = vmatprep.subr.mxu0 0.0
          %2975 = vmatpush2.msra.mxu0 0.0
          %2976 = vmatprep.subr.mxu0 0.0
          %2977 = vmatpush2.msra.mxu0 0.0
          %2978 = vmatprep.subr.mxu0 0.0
          %2979 = vmatpush2.msra.mxu0 0.0
          %2980 = vmatprep.subr.mxu0 0.0
          %2981 = vmatpush2.msra.mxu0 0.0
          %2982 = vmatprep.subr.mxu0 0.0
          %2983 = vmatpush2.msra.mxu0 0.0
          %2984 = vmatprep.subr.mxu0 0.0
          %2985 = vmatpush2.msra.mxu0 0.0
          %2986 = vmatprep.subr.mxu0 0.0
          %2987 = vmatpush2.msra.mxu0 0.0
          %2988 = vmatprep.subr.mxu0 0.0
          %2989 = vmatpush2.msra.mxu0 0.0
          %2990 = vmatprep.mubr.f32.mxu0 0.0
          %v2991 = vand.u32 %v788, 4294901760
          %2992 = vmatmul.mubr.f32.gmra.mxu0 %v2991
          %v2993 = vpop.f32.mrf.mxu0
          %v2994 = vadd.f32 %v2763, %v2993
          %v2995 = vpop.f32.mrf.mxu0
          %v2996 = vadd.f32 %v2765, %v2995
          %2997 = vmatprep.mubr.f32.mxu0 0.0
          %v2998 = vand.u32 %v789, 4294901760
          %2999 = vmatmul.mubr.f32.gmra.mxu0 %v2998
          %v3000 = vpop.f32.mrf.mxu0
          %v3001 = vadd.f32 %v2772, %v3000
          %v3002 = vpop.f32.mrf.mxu0
          %v3003 = vadd.f32 %v2774, %v3002
          %3004 = vmatprep.mubr.f32.mxu0 0.0
          %v3005 = vand.u32 %v790, 4294901760
          %3006 = vmatmul.mubr.f32.gmra.mxu0 %v3005
          %v3007 = vpop.f32.mrf.mxu0
          %v3008 = vadd.f32 %v2781, %v3007
          %v3009 = vpop.f32.mrf.mxu0
          %v3010 = vadd.f32 %v2783, %v3009
          %3011 = vmatprep.mubr.f32.mxu0 0.0
          %v3012 = vand.u32 %v791, 4294901760
          %3013 = vmatmul.mubr.f32.gmra.mxu0 %v3012
          %v3014 = vpop.f32.mrf.mxu0
          %v3015 = vadd.f32 %v2790, %v3014
          %v3016 = vpop.f32.mrf.mxu0
          %v3017 = vadd.f32 %v2792, %v3016
          %3018 = vmatprep.mubr.f32.mxu0 0.0
          %v3019 = vand.u32 %v792, 4294901760
          %3020 = vmatmul.mubr.f32.gmra.mxu0 %v3019
          %v3021 = vpop.f32.mrf.mxu0
          %v3022 = vadd.f32 %v2799, %v3021
          %v3023 = vpop.f32.mrf.mxu0
          %v3024 = vadd.f32 %v2801, %v3023
          %3025 = vmatprep.mubr.f32.mxu0 0.0
          %v3026 = vand.u32 %v793, 4294901760
          %3027 = vmatmul.mubr.f32.gmra.mxu0 %v3026
          %v3028 = vpop.f32.mrf.mxu0
          %v3029 = vadd.f32 %v2808, %v3028
          %v3030 = vpop.f32.mrf.mxu0
          %v3031 = vadd.f32 %v2810, %v3030
          %3032 = vmatprep.mubr.f32.mxu0 0.0
          %v3033 = vand.u32 %v794, 4294901760
          %3034 = vmatmul.mubr.f32.gmra.mxu0 %v3033
          %v3035 = vpop.f32.mrf.mxu0
          %v3036 = vadd.f32 %v2817, %v3035
          %v3037 = vpop.f32.mrf.mxu0
          %v3038 = vadd.f32 %v2819, %v3037
          %3039 = vmatprep.mubr.f32.mxu0 0.0
          %v3040 = vand.u32 %v795, 4294901760
          %3041 = vmatmul.mubr.f32.gmra.mxu0 %v3040
          %v3042 = vpop.f32.mrf.mxu0
          %v3043 = vadd.f32 %v2826, %v3042
          %v3044 = vpop.f32.mrf.mxu0
          %v3045 = vadd.f32 %v2828, %v3044
          %3046 = vdwg.mxu0
          %v3047 = vand.u32 %v755, 4294901760
          %3048 = vmatprep.subr.mxu0 %v3047
          %v3049 = vand.u32 %v754, 4294901760
          %3050 = vmatpush1.msra.mxu0 %v3049
          %v3051 = vand.u32 %v751, 4294901760
          %3052 = vmatprep.subr.mxu0 %v3051
          %v3053 = vand.u32 %v750, 4294901760
          %3054 = vmatpush1.msra.mxu0 %v3053
          %v3055 = vand.u32 %v747, 4294901760
          %3056 = vmatprep.subr.mxu0 %v3055
          %v3057 = vand.u32 %v746, 4294901760
          %3058 = vmatpush1.msra.mxu0 %v3057
          %v3059 = vand.u32 %v743, 4294901760
          %3060 = vmatprep.subr.mxu0 %v3059
          %v3061 = vand.u32 %v742, 4294901760
          %3062 = vmatpush1.msra.mxu0 %v3061
          %v3063 = vand.u32 %v739, 4294901760
          %3064 = vmatprep.subr.mxu0 %v3063
          %v3065 = vand.u32 %v738, 4294901760
          %3066 = vmatpush1.msra.mxu0 %v3065
          %v3067 = vand.u32 %v735, 4294901760
          %3068 = vmatprep.subr.mxu0 %v3067
          %v3069 = vand.u32 %v734, 4294901760
          %3070 = vmatpush1.msra.mxu0 %v3069
          %v3071 = vand.u32 %v731, 4294901760
          %3072 = vmatprep.subr.mxu0 %v3071
          %v3073 = vand.u32 %v730, 4294901760
          %3074 = vmatpush1.msra.mxu0 %v3073
          %v3075 = vand.u32 %v727, 4294901760
          %3076 = vmatprep.subr.mxu0 %v3075
          %v3077 = vand.u32 %v726, 4294901760
          %3078 = vmatpush1.msra.mxu0 %v3077
          %v3079 = vand.u32 %v723, 4294901760
          %3080 = vmatprep.subr.mxu0 %v3079
          %v3081 = vand.u32 %v722, 4294901760
          %3082 = vmatpush1.msra.mxu0 %v3081
          %v3083 = vand.u32 %v719, 4294901760
          %3084 = vmatprep.subr.mxu0 %v3083
          %v3085 = vand.u32 %v718, 4294901760
          %3086 = vmatpush1.msra.mxu0 %v3085
          %v3087 = vand.u32 %v715, 4294901760
          %3088 = vmatprep.subr.mxu0 %v3087
          %v3089 = vand.u32 %v714, 4294901760
          %3090 = vmatpush1.msra.mxu0 %v3089
          %v3091 = vand.u32 %v711, 4294901760
          %3092 = vmatprep.subr.mxu0 %v3091
          %v3093 = vand.u32 %v710, 4294901760
          %3094 = vmatpush1.msra.mxu0 %v3093
          %v3095 = vand.u32 %v707, 4294901760
          %3096 = vmatprep.subr.mxu0 %v3095
          %v3097 = vand.u32 %v706, 4294901760
          %3098 = vmatpush1.msra.mxu0 %v3097
          %v3099 = vand.u32 %v703, 4294901760
          %3100 = vmatprep.subr.mxu0 %v3099
          %v3101 = vand.u32 %v702, 4294901760
          %3102 = vmatpush1.msra.mxu0 %v3101
          %v3103 = vand.u32 %v699, 4294901760
          %3104 = vmatprep.subr.mxu0 %v3103
          %v3105 = vand.u32 %v698, 4294901760
          %3106 = vmatpush1.msra.mxu0 %v3105
          %v3107 = vand.u32 %v695, 4294901760
          %3108 = vmatprep.subr.mxu0 %v3107
          %v3109 = vand.u32 %v694, 4294901760
          %3110 = vmatpush1.msra.mxu0 %v3109
          %3111 = vmatprep.subr.mxu0 0.0
          %3112 = vmatpush2.msra.mxu0 0.0
          %3113 = vmatprep.subr.mxu0 0.0
          %3114 = vmatpush2.msra.mxu0 0.0
          %3115 = vmatprep.subr.mxu0 0.0
          %3116 = vmatpush2.msra.mxu0 0.0
          %3117 = vmatprep.subr.mxu0 0.0
          %3118 = vmatpush2.msra.mxu0 0.0
          %3119 = vmatprep.subr.mxu0 0.0
          %3120 = vmatpush2.msra.mxu0 0.0
          %3121 = vmatprep.subr.mxu0 0.0
          %3122 = vmatpush2.msra.mxu0 0.0
          %3123 = vmatprep.subr.mxu0 0.0
          %3124 = vmatpush2.msra.mxu0 0.0
          %3125 = vmatprep.subr.mxu0 0.0
          %3126 = vmatpush2.msra.mxu0 0.0
          %3127 = vmatprep.subr.mxu0 0.0
          %3128 = vmatpush2.msra.mxu0 0.0
          %3129 = vmatprep.subr.mxu0 0.0
          %3130 = vmatpush2.msra.mxu0 0.0
          %3131 = vmatprep.subr.mxu0 0.0
          %3132 = vmatpush2.msra.mxu0 0.0
          %3133 = vmatprep.subr.mxu0 0.0
          %3134 = vmatpush2.msra.mxu0 0.0
          %3135 = vmatprep.subr.mxu0 0.0
          %3136 = vmatpush2.msra.mxu0 0.0
          %3137 = vmatprep.subr.mxu0 0.0
          %3138 = vmatpush2.msra.mxu0 0.0
          %3139 = vmatprep.subr.mxu0 0.0
          %3140 = vmatpush2.msra.mxu0 0.0
          %3141 = vmatprep.subr.mxu0 0.0
          %3142 = vmatpush2.msra.mxu0 0.0
          %3143 = vmatprep.mubr.f32.mxu0 0.0
          %v3144 = vand.u32 %v788, 4294901760
          %3145 = vmatmul.mubr.f32.gmra.mxu0 %v3144
          %v3146 = vpop.f32.mrf.mxu0
          %v3147 = vadd.f32 %v2994, %v3146
          %v3148 = vpop.f32.mrf.mxu0
          %v3149 = vadd.f32 %v2996, %v3148
          %3150 = vmatprep.mubr.f32.mxu0 0.0
          %v3151 = vand.u32 %v789, 4294901760
          %3152 = vmatmul.mubr.f32.gmra.mxu0 %v3151
          %v3153 = vpop.f32.mrf.mxu0
          %v3154 = vadd.f32 %v3001, %v3153
          %v3155 = vpop.f32.mrf.mxu0
          %v3156 = vadd.f32 %v3003, %v3155
          %3157 = vmatprep.mubr.f32.mxu0 0.0
          %v3158 = vand.u32 %v790, 4294901760
          %3159 = vmatmul.mubr.f32.gmra.mxu0 %v3158
          %v3160 = vpop.f32.mrf.mxu0
          %v3161 = vadd.f32 %v3008, %v3160
          %v3162 = vpop.f32.mrf.mxu0
          %v3163 = vadd.f32 %v3010, %v3162
          %3164 = vmatprep.mubr.f32.mxu0 0.0
          %v3165 = vand.u32 %v791, 4294901760
          %3166 = vmatmul.mubr.f32.gmra.mxu0 %v3165
          %v3167 = vpop.f32.mrf.mxu0
          %v3168 = vadd.f32 %v3015, %v3167
          %v3169 = vpop.f32.mrf.mxu0
          %v3170 = vadd.f32 %v3017, %v3169
          %3171 = vmatprep.mubr.f32.mxu0 0.0
          %v3172 = vand.u32 %v792, 4294901760
          %3173 = vmatmul.mubr.f32.gmra.mxu0 %v3172
          %v3174 = vpop.f32.mrf.mxu0
          %v3175 = vadd.f32 %v3022, %v3174
          %v3176 = vpop.f32.mrf.mxu0
          %v3177 = vadd.f32 %v3024, %v3176
          %3178 = vmatprep.mubr.f32.mxu0 0.0
          %v3179 = vand.u32 %v793, 4294901760
          %3180 = vmatmul.mubr.f32.gmra.mxu0 %v3179
          %v3181 = vpop.f32.mrf.mxu0
          %v3182 = vadd.f32 %v3029, %v3181
          %v3183 = vpop.f32.mrf.mxu0
          %v3184 = vadd.f32 %v3031, %v3183
          %3185 = vmatprep.mubr.f32.mxu0 0.0
          %v3186 = vand.u32 %v794, 4294901760
          %3187 = vmatmul.mubr.f32.gmra.mxu0 %v3186
          %v3188 = vpop.f32.mrf.mxu0
          %v3189 = vadd.f32 %v3036, %v3188
          %v3190 = vpop.f32.mrf.mxu0
          %v3191 = vadd.f32 %v3038, %v3190
          %3192 = vmatprep.mubr.f32.mxu0 0.0
          %v3193 = vand.u32 %v795, 4294901760
          %3194 = vmatmul.mubr.f32.gmra.mxu0 %v3193
          %v3195 = vpop.f32.mrf.mxu0
          %v3196 = vadd.f32 %v3043, %v3195
          %v3197 = vpop.f32.mrf.mxu0
          %v3198 = vadd.f32 %v3045, %v3197
          %3199 = vdwg.mxu0
          %v3200 = vld [vmem:[%s240] sm:$0xff]
          %v3201 = vld [vmem:[%s240 + $0x8] sm:$0xff]
          %v3202 = vld [vmem:[%s240 + $0x10] sm:$0xff]
          %v3203 = vld [vmem:[%s240 + $0x18] sm:$0xff]
          %v3204 = vld [vmem:[%s240 + $0x20] sm:$0xff]
          %v3205 = vld [vmem:[%s240 + $0x28] sm:$0xff]
          %v3206 = vld [vmem:[%s240 + $0x30] sm:$0xff]
          %v3207 = vld [vmem:[%s240 + $0x38] sm:$0xff]
          %v3208 = vld [vmem:[%s240 + $0x40] sm:$0xff]
          %v3209 = vld [vmem:[%s240 + $0x48] sm:$0xff]
          %v3210 = vld [vmem:[%s240 + $0x50] sm:$0xff]
          %v3211 = vld [vmem:[%s240 + $0x58] sm:$0xff]
          %v3212 = vld [vmem:[%s240 + $0x60] sm:$0xff]
          %v3213 = vld [vmem:[%s240 + $0x68] sm:$0xff]
          %v3214 = vld [vmem:[%s240 + $0x70] sm:$0xff]
          %v3215 = vld [vmem:[%s240 + $0x78] sm:$0xff]
          %v3216 = vld [vmem:[%s240 + $0x80] sm:$0xff]
          %v3217 = vld [vmem:[%s240 + $0x88] sm:$0xff]
          %v3218 = vld [vmem:[%s240 + $0x90] sm:$0xff]
          %v3219 = vld [vmem:[%s240 + $0x98] sm:$0xff]
          %v3220 = vld [vmem:[%s240 + $0xa0] sm:$0xff]
          %v3221 = vld [vmem:[%s240 + $0xa8] sm:$0xff]
          %v3222 = vld [vmem:[%s240 + $0xb0] sm:$0xff]
          %v3223 = vld [vmem:[%s240 + $0xb8] sm:$0xff]
          %v3224 = vld [vmem:[%s240 + $0xc0] sm:$0xff]
          %v3225 = vld [vmem:[%s240 + $0xc8] sm:$0xff]
          %v3226 = vld [vmem:[%s240 + $0xd0] sm:$0xff]
          %v3227 = vld [vmem:[%s240 + $0xd8] sm:$0xff]
          %v3228 = vld [vmem:[%s240 + $0xe0] sm:$0xff]
          %v3229 = vld [vmem:[%s240 + $0xe8] sm:$0xff]
          %v3230 = vld [vmem:[%s240 + $0xf0] sm:$0xff]
          %v3231 = vld [vmem:[%s240 + $0xf8] sm:$0xff]
          %v3232 = vadd.f32 %v3200, %v1949
          %v3233 = vadd.f32 %v3201, %v1951
          %v3234 = vadd.f32 %v3202, %v3147
          %v3235 = vadd.f32 %v3203, %v3149
          %v3236 = vadd.f32 %v3204, %v1956
          %v3237 = vadd.f32 %v3205, %v1958
          %v3238 = vadd.f32 %v3206, %v3154
          %v3239 = vadd.f32 %v3207, %v3156
          %v3240 = vadd.f32 %v3208, %v1963
          %v3241 = vadd.f32 %v3209, %v1965
          %v3242 = vadd.f32 %v3210, %v3161
          %v3243 = vadd.f32 %v3211, %v3163
          %v3244 = vadd.f32 %v3212, %v1970
          %v3245 = vadd.f32 %v3213, %v1972
          %v3246 = vadd.f32 %v3214, %v3168
          %v3247 = vadd.f32 %v3215, %v3170
          %v3248 = vadd.f32 %v3216, %v1977
          %v3249 = vadd.f32 %v3217, %v1979
          %v3250 = vadd.f32 %v3218, %v3175
          %v3251 = vadd.f32 %v3219, %v3177
          %v3252 = vadd.f32 %v3220, %v1984
          %v3253 = vadd.f32 %v3221, %v1986
          %v3254 = vadd.f32 %v3222, %v3182
          %v3255 = vadd.f32 %v3223, %v3184
          %v3256 = vadd.f32 %v3224, %v1991
          %v3257 = vadd.f32 %v3225, %v1993
          %v3258 = vadd.f32 %v3226, %v3189
          %v3259 = vadd.f32 %v3227, %v3191
          %v3260 = vadd.f32 %v3228, %v1998
          %v3261 = vadd.f32 %v3229, %v2000
          %v3262 = vadd.f32 %v3230, %v3196
          %v3263 = vadd.f32 %v3231, %v3198
          %3264 = vst [vmem:[%s240] sm:$0xff] %v3232
          %3265 = vst [vmem:[%s240 + $0x8] sm:$0xff] %v3233
          %3266 = vst [vmem:[%s240 + $0x10] sm:$0xff] %v3234
          %3267 = vst [vmem:[%s240 + $0x18] sm:$0xff] %v3235
          %3268 = vst [vmem:[%s240 + $0x20] sm:$0xff] %v3236
          %3269 = vst [vmem:[%s240 + $0x28] sm:$0xff] %v3237
          %3270 = vst [vmem:[%s240 + $0x30] sm:$0xff] %v3238
          %3271 = vst [vmem:[%s240 + $0x38] sm:$0xff] %v3239
          %3272 = vst [vmem:[%s240 + $0x40] sm:$0xff] %v3240
          %3273 = vst [vmem:[%s240 + $0x48] sm:$0xff] %v3241
          %3274 = vst [vmem:[%s240 + $0x50] sm:$0xff] %v3242
          %3275 = vst [vmem:[%s240 + $0x58] sm:$0xff] %v3243
          %3276 = vst [vmem:[%s240 + $0x60] sm:$0xff] %v3244
          %3277 = vst [vmem:[%s240 + $0x68] sm:$0xff] %v3245
          %3278 = vst [vmem:[%s240 + $0x70] sm:$0xff] %v3246
          %3279 = vst [vmem:[%s240 + $0x78] sm:$0xff] %v3247
          %3280 = vst [vmem:[%s240 + $0x80] sm:$0xff] %v3248
          %3281 = vst [vmem:[%s240 + $0x88] sm:$0xff] %v3249
          %3282 = vst [vmem:[%s240 + $0x90] sm:$0xff] %v3250
          %3283 = vst [vmem:[%s240 + $0x98] sm:$0xff] %v3251
          %3284 = vst [vmem:[%s240 + $0xa0] sm:$0xff] %v3252
          %3285 = vst [vmem:[%s240 + $0xa8] sm:$0xff] %v3253
          %3286 = vst [vmem:[%s240 + $0xb0] sm:$0xff] %v3254
          %3287 = vst [vmem:[%s240 + $0xb8] sm:$0xff] %v3255
          %3288 = vst [vmem:[%s240 + $0xc0] sm:$0xff] %v3256
          %3289 = vst [vmem:[%s240 + $0xc8] sm:$0xff] %v3257
          %3290 = vst [vmem:[%s240 + $0xd0] sm:$0xff] %v3258
          %3291 = vst [vmem:[%s240 + $0xd8] sm:$0xff] %v3259
          %3292 = vst [vmem:[%s240 + $0xe0] sm:$0xff] %v3260
          %3293 = vst [vmem:[%s240 + $0xe8] sm:$0xff] %v3261
          %3294 = vst [vmem:[%s240 + $0xf0] sm:$0xff] %v3262
          %3295 = vst [vmem:[%s240 + $0xf8] sm:$0xff] %v3263
        $region44: #{point_pillars_scatter.1} parent=31 // pred_fallthru
          _
        %s3296 = sand.u32 %s139, 1
        %s3297 = sand.u32 %s139, 1
        %s3298 = smul.addr %s3297, 256
        %s3299 = scalar_lea.vmem [#allocation9], %s3298
        // Predicated region
        $region45: #{point_pillars_scatter.1} parent=31 // pred_check
          %p3300 = pneg %p149
        $region46: #{point_pillars_scatter.1} parent=31 // pred_check_branch
          %3302 = sbr.rel (%p3300) target = $region48
        $region47: #{point_pillars_scatter.1} parent=31 // pred_region
          %s3303 = sld [smem:[#allocation4 + %s41]]
          %s3304 = sld [smem:[#allocation5 + %s41]]
          %s3305 = smul.u32 4, %s3304
          %s3306 = smul.addr %s3303, 64
          %s3307 = sadd.s32 %s3305, %s3306
          %s3308 = smul.addr %s3307, 8
          %s3309 = scalar_lea.vmem %s8, %s3308
          // Predicated region
          $region49: #{point_pillars_scatter.1} parent=47 // pred_check
            _
          $region50: #{point_pillars_scatter.1} parent=47 // pred_check_branch
            %3311 = sbr.rel (0) target = $region52
          $region51: #{point_pillars_scatter.1} parent=47 // pred_region
            // Predicated region
            $region53: #{point_pillars_scatter.1} parent=51 // pred_check
              _
            $region54: #{point_pillars_scatter.1} parent=51 // pred_check_branch
              %3313 = sbr.rel (0) target = $region56
            $region55: #{point_pillars_scatter.1} parent=51 // pred_region
              loop: start=0, step=1, limit=1
              $region57: #{point_pillars_scatter.1} parent=55 // loop_pre_header
                _
              $region58: #{point_pillars_scatter.1} parent=55 // loop_header
                %s3315 = sphi 0, %s3319
                %p3316 = scmp.ge.s32.totalorder %s3315, 1
                %s3320 = sphi %s3299, %s3299
                %s3321 = sphi %s3309, %s3309
              $region59: #{point_pillars_scatter.1} parent=55 // loop_header_branch
                %3318 = sbr.rel (%p3316) target = $region63
              $region60: #{point_pillars_scatter.1} parent=55 // loop_body
                %v3322 = vld [vmem:[%s3320] sm:$0xff]
                %3323 = vst [vmem:[%s3321] sm:$0xff] %v3322
                %v3324 = vld [vmem:[%s3320 + $0x8] sm:$0xff]
                %3325 = vst [vmem:[%s3321 + $0x8] sm:$0xff] %v3324
                %v3326 = vld [vmem:[%s3320 + $0x10] sm:$0xff]
                %3327 = vst [vmem:[%s3321 + $0x10] sm:$0xff] %v3326
                %v3328 = vld [vmem:[%s3320 + $0x18] sm:$0xff]
                %3329 = vst [vmem:[%s3321 + $0x18] sm:$0xff] %v3328
                %v3330 = vld [vmem:[%s3320 + $0x20] sm:$0xff]
                %3331 = vst [vmem:[%s3321 + $0x40] sm:$0xff] %v3330
                %v3332 = vld [vmem:[%s3320 + $0x28] sm:$0xff]
                %3333 = vst [vmem:[%s3321 + $0x48] sm:$0xff] %v3332
                %v3334 = vld [vmem:[%s3320 + $0x30] sm:$0xff]
                %3335 = vst [vmem:[%s3321 + $0x50] sm:$0xff] %v3334
                %v3336 = vld [vmem:[%s3320 + $0x38] sm:$0xff]
                %3337 = vst [vmem:[%s3321 + $0x58] sm:$0xff] %v3336
                %v3338 = vld [vmem:[%s3320 + $0x40] sm:$0xff]
                %3339 = vst [vmem:[%s3321 + $0x80] sm:$0xff] %v3338
                %v3340 = vld [vmem:[%s3320 + $0x48] sm:$0xff]
                %3341 = vst [vmem:[%s3321 + $0x88] sm:$0xff] %v3340
                %v3342 = vld [vmem:[%s3320 + $0x50] sm:$0xff]
                %3343 = vst [vmem:[%s3321 + $0x90] sm:$0xff] %v3342
                %v3344 = vld [vmem:[%s3320 + $0x58] sm:$0xff]
                %3345 = vst [vmem:[%s3321 + $0x98] sm:$0xff] %v3344
                %v3346 = vld [vmem:[%s3320 + $0x60] sm:$0xff]
                %3347 = vst [vmem:[%s3321 + $0xc0] sm:$0xff] %v3346
                %v3348 = vld [vmem:[%s3320 + $0x68] sm:$0xff]
                %3349 = vst [vmem:[%s3321 + $0xc8] sm:$0xff] %v3348
                %v3350 = vld [vmem:[%s3320 + $0x70] sm:$0xff]
                %3351 = vst [vmem:[%s3321 + $0xd0] sm:$0xff] %v3350
                %v3352 = vld [vmem:[%s3320 + $0x78] sm:$0xff]
                %3353 = vst [vmem:[%s3321 + $0xd8] sm:$0xff] %v3352
                %v3354 = vld [vmem:[%s3320 + $0x80] sm:$0xff]
                %3355 = vst [vmem:[%s3321 + $0x100] sm:$0xff] %v3354
                %v3356 = vld [vmem:[%s3320 + $0x88] sm:$0xff]
                %3357 = vst [vmem:[%s3321 + $0x108] sm:$0xff] %v3356
                %v3358 = vld [vmem:[%s3320 + $0x90] sm:$0xff]
                %3359 = vst [vmem:[%s3321 + $0x110] sm:$0xff] %v3358
                %v3360 = vld [vmem:[%s3320 + $0x98] sm:$0xff]
                %3361 = vst [vmem:[%s3321 + $0x118] sm:$0xff] %v3360
                %v3362 = vld [vmem:[%s3320 + $0xa0] sm:$0xff]
                %3363 = vst [vmem:[%s3321 + $0x140] sm:$0xff] %v3362
                %v3364 = vld [vmem:[%s3320 + $0xa8] sm:$0xff]
                %3365 = vst [vmem:[%s3321 + $0x148] sm:$0xff] %v3364
                %v3366 = vld [vmem:[%s3320 + $0xb0] sm:$0xff]
                %3367 = vst [vmem:[%s3321 + $0x150] sm:$0xff] %v3366
                %v3368 = vld [vmem:[%s3320 + $0xb8] sm:$0xff]
                %3369 = vst [vmem:[%s3321 + $0x158] sm:$0xff] %v3368
                %v3370 = vld [vmem:[%s3320 + $0xc0] sm:$0xff]
                %3371 = vst [vmem:[%s3321 + $0x180] sm:$0xff] %v3370
                %v3372 = vld [vmem:[%s3320 + $0xc8] sm:$0xff]
                %3373 = vst [vmem:[%s3321 + $0x188] sm:$0xff] %v3372
                %v3374 = vld [vmem:[%s3320 + $0xd0] sm:$0xff]
                %3375 = vst [vmem:[%s3321 + $0x190] sm:$0xff] %v3374
                %v3376 = vld [vmem:[%s3320 + $0xd8] sm:$0xff]
                %3377 = vst [vmem:[%s3321 + $0x198] sm:$0xff] %v3376
                %v3378 = vld [vmem:[%s3320 + $0xe0] sm:$0xff]
                %3379 = vst [vmem:[%s3321 + $0x1c0] sm:$0xff] %v3378
                %v3380 = vld [vmem:[%s3320 + $0xe8] sm:$0xff]
                %3381 = vst [vmem:[%s3321 + $0x1c8] sm:$0xff] %v3380
                %v3382 = vld [vmem:[%s3320 + $0xf0] sm:$0xff]
                %3383 = vst [vmem:[%s3321 + $0x1d0] sm:$0xff] %v3382
                %v3384 = vld [vmem:[%s3320 + $0xf8] sm:$0xff]
                %3385 = vst [vmem:[%s3321 + $0x1d8] sm:$0xff] %v3384
              $region61: #{point_pillars_scatter.1} parent=55 // loop_footer
                %s3319 = sadd.s32 1, %s3315
              $region62: #{point_pillars_scatter.1} parent=55 // loop_footer_branch
                %3314 = sbr.rel target = $region58
              $region63: #{point_pillars_scatter.1} parent=55 // loop_exit
                _
            $region56: #{point_pillars_scatter.1} parent=51 // pred_fallthru
              _
            // Predicated region
            $region64: #{point_pillars_scatter.1} parent=51 // pred_check
              _
            $region65: #{point_pillars_scatter.1} parent=51 // pred_check_branch
              %3387 = sbr.rel target = $region67
            $region66: #{point_pillars_scatter.1} parent=51 // pred_region
              _
            $region67: #{point_pillars_scatter.1} parent=51 // pred_fallthru
              _
          $region52: #{point_pillars_scatter.1} parent=47 // pred_fallthru
            _
          %3388 = vnop
        $region48: #{point_pillars_scatter.1} parent=31 // pred_fallthru
          _
      $region32: #{point_pillars_scatter.1} parent=5 // pred_fallthru
        _
      %p3389 = scmp.le.s32.totalorder 2, %s36
      // Predicated region
      $region68: #{point_pillars_scatter.1} parent=5 // pred_check
        %p3390 = pneg %p3389
      $region69: #{point_pillars_scatter.1} parent=5 // pred_check_branch
        %3392 = sbr.rel (%p3390) target = $region71
      $region70: #{point_pillars_scatter.1} parent=5 // pred_region
        %s3393 = ssub.s32 %s36, 2
        // Predicated region
        $region72: #{point_pillars_scatter.1} parent=70 // pred_check
          %p3394 = pneg %p155
        $region73: #{point_pillars_scatter.1} parent=70 // pred_check_branch
          %3396 = sbr.rel (%p3394) target = $region75
        $region74: #{point_pillars_scatter.1} parent=70 // pred_region
          %s3397 = sand.u32 %s140, 1
          %s3398 = sand.u32 %s140, 1
          %s3399 = smul.addr %s3398, 256
          %s3400 = scalar_lea.vmem [#allocation9], %s3399
        $region75: #{point_pillars_scatter.1} parent=70 // pred_fallthru
          _
      $region71: #{point_pillars_scatter.1} parent=5 // pred_fallthru
        _
    $region6: #{point_pillars_scatter.1} parent=1 // loop_footer
      %s40 = sadd.s32 1, %s36
    $region7: #{point_pillars_scatter.1} parent=1 // loop_footer_branch
      %35 = sbr.rel target = $region3
    $region8: #{point_pillars_scatter.1} parent=1 // loop_exit
      _

</llo_original>
